<compile_context>
chip_gen: v7x
topology: tpu7x:2x2x1
jax: 0.10.0
libtpu: 0.0.40
codegen_flags: <defaults>
</compile_context>

<pallas_src>
import functools
import math

import jax
import jax.numpy as jnp
from jax.experimental import pallas as pl
from jax.experimental.pallas import tpu as pltpu


# -----------------------------------------------------------------------------
# Fused kernel: whole layer stack, one grid step per layer.
# -----------------------------------------------------------------------------
def gru_stack_kernel(x_ref, wx_ref, bxc_ref, wh_ref, bhn_ref, wfc_ref, bfc_ref,
                     out_ref, act_ref, hy_ref, *, seq_len, batch, hidden, res):
    layer = pl.program_id(0)

    # Layer 0 consumes the kernel input; later layers consume the VMEM-resident
    # activation produced by the previous layer.
    @pl.when(layer == 0)
    def _():
        act_ref[...] = x_ref[...].astype(jnp.float32)

    act = act_ref[...]                                     # (T*B, H) f32

    # ---- hoisted input projection for ALL timesteps (one tall matmul / gate).
    # bxc already contains bx_g (+ bh_g for the r/i gates), so no per-step bias.
    gx = []
    for g in range(3):
        gx.append(jnp.dot(act, wx_ref[g],
                          preferred_element_type=jnp.float32) + bxc_ref[g])

    wh_r = wh_ref[0]
    wh_i = wh_ref[1]
    wh_n = wh_ref[2]
    bh_n = jnp.broadcast_to(bhn_ref[...], (batch, hidden))  # hoisted broadcast

    # ---- recurrence: only h @ Wh stays on the serial critical path.
    h = jnp.zeros((batch, hidden), jnp.float32)
    for t in range(seq_len):                               # static unroll (T small)
        lo = t * batch
        hi = lo + batch
        h_r = jnp.dot(h, wh_r, preferred_element_type=jnp.float32)
        h_i = jnp.dot(h, wh_i, preferred_element_type=jnp.float32)
        h_n = jnp.dot(h, wh_n, preferred_element_type=jnp.float32) + bh_n
        r = jax.nn.sigmoid(gx[0][lo:hi, :] + h_r)
        z = jax.nn.sigmoid(gx[1][lo:hi, :] + h_i)
        n = jnp.tanh(gx[2][lo:hi, :] + r * h_n)
        h = n + z * (h - n)
        hy_ref[lo:hi, :] = h

    # ---- hoisted fc + residual, one matmul over all timesteps.
    y = jnp.dot(hy_ref[...], wfc_ref[...],
                preferred_element_type=jnp.float32) + bfc_ref[...]
    if res:
        y = y + act                                        # requires D == H

    act_ref[...] = y                                       # feeds next layer
    # Module returns x[:, -1]  ->  rows of the last timestep in (T*B, H) layout.
    out_ref[...] = y[(seq_len - 1) * batch:, :].astype(out_ref.dtype)


def gru_forward(x_btd, packed, *, seq_len, batch, hidden, num_layers, res=True):
    """Full GRU module (stack of residual GRUModel layers); returns x[:, -1]."""
    # (B, T, D) -> time-major, flattened to (T*B, D): row t*B + b == x[b, t].
    x2d = jnp.transpose(x_btd, (1, 0, 2)).reshape(seq_len * batch, hidden)

    kernel = functools.partial(gru_stack_kernel, seq_len=seq_len, batch=batch,
                               hidden=hidden, res=res)
    return pl.pallas_call(
        kernel,
        out_shape=jax.ShapeDtypeStruct((batch, hidden), x_btd.dtype),
        grid_spec=pltpu.PrefetchScalarGridSpec(
            num_scalar_prefetch=0,
            grid=(num_layers,),
            in_specs=[
                pl.BlockSpec((seq_len * batch, hidden), lambda l: (0, 0)),       # x (flat)
                pl.BlockSpec((None, 3, hidden, hidden), lambda l: (l, 0, 0, 0)),  # Wx per gate
                pl.BlockSpec((None, 3, 1, hidden), lambda l: (l, 0, 0, 0)),       # bx (+bh r/i)
                pl.BlockSpec((None, 3, hidden, hidden), lambda l: (l, 0, 0, 0)),  # Wh per gate
                pl.BlockSpec((None, 1, hidden), lambda l: (l, 0, 0)),             # bh_n
                pl.BlockSpec((None, hidden, hidden), lambda l: (l, 0, 0)),        # Wfc
                pl.BlockSpec((None, 1, hidden), lambda l: (l, 0, 0)),             # bfc
            ],
            out_specs=pl.BlockSpec((batch, hidden), lambda l: (0, 0)),
            scratch_shapes=[
                pltpu.VMEM((seq_len * batch, hidden), jnp.float32),  # activation carry
                pltpu.VMEM((seq_len * batch, hidden), jnp.float32),  # stacked hidden states
            ],
        ),
        compiler_params=pltpu.CompilerParams(
            dimension_semantics=("arbitrary",)),            # layer axis is sequential
    )(x2d, packed["wx"], packed["bxc"], packed["wh"], packed["bhn"],
      packed["wfc"], packed["bfc"])


# -----------------------------------------------------------------------------
# Parameters: raw PyTorch-style tensors + packing into the kernel layout.
# -----------------------------------------------------------------------------
def init_params(key, input_dim, hidden_dim, num_layers=3):
    params = []
    in_dim = input_dim
    std = 1.0 / math.sqrt(hidden_dim)
    for _ in range(num_layers):
        key, k0, k1, k2, k3, k4, k5 = jax.random.split(key, 7)
        params.append(dict(
            wx=jax.random.uniform(k0, (3 * hidden_dim, in_dim), jnp.float32, -std, std),
            bx=jax.random.uniform(k1, (3 * hidden_dim,), jnp.float32, -std, std),
            wh=jax.random.uniform(k2, (3 * hidden_dim, hidden_dim), jnp.float32, -std, std),
            bh=jax.random.uniform(k3, (3 * hidden_dim,), jnp.float32, -std, std),
            wfc=jax.random.uniform(k4, (hidden_dim, hidden_dim), jnp.float32, -std, std),
            bfc=jax.random.uniform(k5, (hidden_dim,), jnp.float32, -std, std),
        ))
        in_dim = hidden_dim
    return params


def pack_params(params):
    """Stack per-layer weights into per-gate, (in, out)-oriented kernel arrays."""
    H = params[0]["wfc"].shape[0]
    assert params[0]["wx"].shape[1] == H, "fused stack requires input_dim == hidden_dim"
    wx_l, bxc_l, wh_l, bhn_l, wfc_l, bfc_l = [], [], [], [], [], []
    for p in params:
        wx_g = [p["wx"][g * H:(g + 1) * H, :].T for g in range(3)]   # (in, H)
        wh_g = [p["wh"][g * H:(g + 1) * H, :].T for g in range(3)]   # (H, H)
        bx_g = [p["bx"][g * H:(g + 1) * H] for g in range(3)]
        bh_g = [p["bh"][g * H:(g + 1) * H] for g in range(3)]
        # Fold bh_r / bh_i into the precomputed gate_x bias; bh_n stays separate
        # because it is multiplied by the reset gate.
        bxc = jnp.stack([bx_g[0] + bh_g[0], bx_g[1] + bh_g[1], bx_g[2]])[:, None, :]
        wx_l.append(jnp.stack(wx_g))
        wh_l.append(jnp.stack(wh_g))
        bxc_l.append(bxc)
        bhn_l.append(bh_g[2][None, :])
        wfc_l.append(p["wfc"].T)
        bfc_l.append(p["bfc"][None, :])
    return dict(wx=jnp.stack(wx_l), bxc=jnp.stack(bxc_l), wh=jnp.stack(wh_l),
                bhn=jnp.stack(bhn_l), wfc=jnp.stack(wfc_l), bfc=jnp.stack(bfc_l))


# -----------------------------------------------------------------------------
# Pure-JAX reference mirroring the PyTorch forward exactly.
# -----------------------------------------------------------------------------
def gru_ref(x_btd, params, res=True):
    x = x_btd
    B, T, _ = x.shape
    for p in params:
        H = p["wfc"].shape[0]
        h = jnp.zeros((B, H), jnp.float32)
        outs = []
        for t in range(T):
            xt = x[:, t, :]
            gate_x = xt @ p["wx"].T + p["bx"]
            gate_h = h @ p["wh"].T + p["bh"]
            i_r, i_i, i_n = jnp.split(gate_x, 3, axis=1)
            h_r, h_i, h_n = jnp.split(gate_h, 3, axis=1)
            r = jax.nn.sigmoid(i_r + h_r)
            z = jax.nn.sigmoid(i_i + h_i)
            n = jnp.tanh(i_n + r * h_n)
            h = n + z * (h - n)
            outs.append(h)
        o = jnp.stack(outs, axis=1) @ p["wfc"].T + p["bfc"]
        x = o + x if res else o
    return x[:, -1]


if __name__ == "__main__":
    B, T, D, H, L = 2, 8, 32, 32, 3        # residual path requires D == H
    key = jax.random.PRNGKey(0)
    kx, kp = jax.random.split(key)
    x = jax.random.normal(kx, (B, T, D), jnp.float32)
    params = init_params(kp, D, H, num_layers=L)
    packed = pack_params(params)

    out = gru_forward(x, packed, seq_len=T, batch=B, hidden=H,
                      num_layers=L, res=True)
    out = jax.block_until_ready(out)

    ref = gru_ref(x, params, res=True)
    assert out.shape == (B, H), out.shape
    err = float(jnp.max(jnp.abs(out - ref)))
    assert err < 1e-4, err
    print("KERNEL_OK")
</pallas_src>

<mosaic_0001>
module attributes {stable_mosaic.version = 11 : i64} {
  func.func @gru_stack_kernel(%arg0: i32, %arg1: memref<16x32xf32, #tpu.memory_space<vmem>>, %arg2: memref<1x3x32x32xf32, #tpu.memory_space<vmem>>, %arg3: memref<1x3x1x32xf32, #tpu.memory_space<vmem>>, %arg4: memref<1x3x32x32xf32, #tpu.memory_space<vmem>>, %arg5: memref<1x1x32xf32, #tpu.memory_space<vmem>>, %arg6: memref<1x32x32xf32, #tpu.memory_space<vmem>>, %arg7: memref<1x1x32xf32, #tpu.memory_space<vmem>>, %arg8: memref<2x32xf32, #tpu.memory_space<vmem>>, %arg9: memref<16x32xf32, #tpu.memory_space<vmem>>, %arg10: memref<16x32xf32, #tpu.memory_space<vmem>>) attributes {dimension_semantics = [#tpu.dimension_semantics<arbitrary>], iteration_bounds = array<i64: 3>, scalar_prefetch = 0 : i64, scratch_operands = 2 : i64, tpu.core_type = #tpu.core_type<tc>, window_params = [{pipeline_mode = #tpu.pipeline_mode<synchronous>, transform_indices = @transform_0, window_bounds = array<i64: 16, 32>}, {transform_indices = @transform_1, window_bounds = array<i64: 1, 3, 32, 32>}, {transform_indices = @transform_2, window_bounds = array<i64: 1, 3, 1, 32>}, {transform_indices = @transform_3, window_bounds = array<i64: 1, 3, 32, 32>}, {transform_indices = @transform_4, window_bounds = array<i64: 1, 1, 32>}, {transform_indices = @transform_5, window_bounds = array<i64: 1, 32, 32>}, {transform_indices = @transform_6, window_bounds = array<i64: 1, 1, 32>}, {pipeline_mode = #tpu.pipeline_mode<synchronous>, transform_indices = @transform_7, window_bounds = array<i64: 2, 32>}]} {
    %c0_i32 = arith.constant 0 : i32
    %0 = arith.cmpi eq, %arg0, %c0_i32 : i32
    %1 = arith.extui %0 : i1 to i32
    %c0_i32_0 = arith.constant 0 : i32
    %2 = arith.cmpi ne, %1, %c0_i32_0 : i32
    scf.if %2 {
      %c0_105 = arith.constant 0 : index
      %c0_106 = arith.constant 0 : index
      %256 = vector.load %arg1[%c0_105, %c0_106] : memref<16x32xf32, #tpu.memory_space<vmem>>, vector<16x32xf32>
      %c0_107 = arith.constant 0 : index
      %c0_108 = arith.constant 0 : index
      %257 = vector.load %arg9[%c0_107, %c0_108] : memref<16x32xf32, #tpu.memory_space<vmem>>, vector<16x32xf32>
      tpu.vector_store %arg9[%c0_107, %c0_108], %256 {strides = array<i32>} : memref<16x32xf32, #tpu.memory_space<vmem>>, vector<16x32xf32>,
    } else {
    }
    %c0 = arith.constant 0 : index
    %c0_1 = arith.constant 0 : index
    %3 = vector.load %arg9[%c0, %c0_1] : memref<16x32xf32, #tpu.memory_space<vmem>>, vector<16x32xf32>
    %c0_2 = arith.constant 0 : index
    %c0_3 = arith.constant 0 : index
    %c0_4 = arith.constant 0 : index
    %c0_5 = arith.constant 0 : index
    %4 = vector.load %arg2[%c0_2, %c0_3, %c0_4, %c0_5] : memref<1x3x32x32xf32, #tpu.memory_space<vmem>>, vector<1x1x32x32xf32>
    %5 = vector.shape_cast %4 : vector<1x1x32x32xf32> to vector<32x32xf32>
    %cst = arith.constant dense<0.000000e+00> : vector<16x32xf32>
    %6 = tpu.matmul %3, %5, %cst {dimension_numbers = #tpu.dot_dimension_numbers<[1], [0], [0], [1], [0, 0, 1, 1], [], []>} : vector<16x32xf32>, vector<32x32xf32>, vector<16x32xf32> -> vector<16x32xf32>
    %c0_6 = arith.constant 0 : index
    %c0_7 = arith.constant 0 : index
    %c0_8 = arith.constant 0 : index
    %c0_9 = arith.constant 0 : index
    %7 = vector.load %arg3[%c0_6, %c0_7, %c0_8, %c0_9] : memref<1x3x1x32xf32, #tpu.memory_space<vmem>>, vector<1x1x1x32xf32>
    %8 = vector.shape_cast %7 : vector<1x1x1x32xf32> to vector<1x32xf32>
    %9 = vector.broadcast %8 : vector<1x32xf32> to vector<16x32xf32>
    %10 = arith.addf %6, %9 : vector<16x32xf32>
    %c0_10 = arith.constant 0 : index
    %c1 = arith.constant 1 : index
    %c0_11 = arith.constant 0 : index
    %c0_12 = arith.constant 0 : index
    %11 = vector.load %arg2[%c0_10, %c1, %c0_11, %c0_12] : memref<1x3x32x32xf32, #tpu.memory_space<vmem>>, vector<1x1x32x32xf32>
    %12 = vector.shape_cast %11 : vector<1x1x32x32xf32> to vector<32x32xf32>
    %cst_13 = arith.constant dense<0.000000e+00> : vector<16x32xf32>
    %13 = tpu.matmul %3, %12, %cst_13 {dimension_numbers = #tpu.dot_dimension_numbers<[1], [0], [0], [1], [0, 0, 1, 1], [], []>} : vector<16x32xf32>, vector<32x32xf32>, vector<16x32xf32> -> vector<16x32xf32>
    %c0_14 = arith.constant 0 : index
    %c1_15 = arith.constant 1 : index
    %c0_16 = arith.constant 0 : index
    %c0_17 = arith.constant 0 : index
    %14 = vector.load %arg3[%c0_14, %c1_15, %c0_16, %c0_17] : memref<1x3x1x32xf32, #tpu.memory_space<vmem>>, vector<1x1x1x32xf32>
    %15 = vector.shape_cast %14 : vector<1x1x1x32xf32> to vector<1x32xf32>
    %16 = vector.broadcast %15 : vector<1x32xf32> to vector<16x32xf32>
    %17 = arith.addf %13, %16 : vector<16x32xf32>
    %c0_18 = arith.constant 0 : index
    %c2 = arith.constant 2 : index
    %c0_19 = arith.constant 0 : index
    %c0_20 = arith.constant 0 : index
    %18 = vector.load %arg2[%c0_18, %c2, %c0_19, %c0_20] : memref<1x3x32x32xf32, #tpu.memory_space<vmem>>, vector<1x1x32x32xf32>
    %19 = vector.shape_cast %18 : vector<1x1x32x32xf32> to vector<32x32xf32>
    %cst_21 = arith.constant dense<0.000000e+00> : vector<16x32xf32>
    %20 = tpu.matmul %3, %19, %cst_21 {dimension_numbers = #tpu.dot_dimension_numbers<[1], [0], [0], [1], [0, 0, 1, 1], [], []>} : vector<16x32xf32>, vector<32x32xf32>, vector<16x32xf32> -> vector<16x32xf32>
    %c0_22 = arith.constant 0 : index
    %c2_23 = arith.constant 2 : index
    %c0_24 = arith.constant 0 : index
    %c0_25 = arith.constant 0 : index
    %21 = vector.load %arg3[%c0_22, %c2_23, %c0_24, %c0_25] : memref<1x3x1x32xf32, #tpu.memory_space<vmem>>, vector<1x1x1x32xf32>
    %22 = vector.shape_cast %21 : vector<1x1x1x32xf32> to vector<1x32xf32>
    %23 = vector.broadcast %22 : vector<1x32xf32> to vector<16x32xf32>
    %24 = arith.addf %20, %23 : vector<16x32xf32>
    %c0_26 = arith.constant 0 : index
    %c0_27 = arith.constant 0 : index
    %c0_28 = arith.constant 0 : index
    %c0_29 = arith.constant 0 : index
    %25 = vector.load %arg4[%c0_26, %c0_27, %c0_28, %c0_29] : memref<1x3x32x32xf32, #tpu.memory_space<vmem>>, vector<1x1x32x32xf32>
    %26 = vector.shape_cast %25 : vector<1x1x32x32xf32> to vector<32x32xf32>
    %c0_30 = arith.constant 0 : index
    %c1_31 = arith.constant 1 : index
    %c0_32 = arith.constant 0 : index
    %c0_33 = arith.constant 0 : index
    %27 = vector.load %arg4[%c0_30, %c1_31, %c0_32, %c0_33] : memref<1x3x32x32xf32, #tpu.memory_space<vmem>>, vector<1x1x32x32xf32>
    %28 = vector.shape_cast %27 : vector<1x1x32x32xf32> to vector<32x32xf32>
    %c0_34 = arith.constant 0 : index
    %c2_35 = arith.constant 2 : index
    %c0_36 = arith.constant 0 : index
    %c0_37 = arith.constant 0 : index
    %29 = vector.load %arg4[%c0_34, %c2_35, %c0_36, %c0_37] : memref<1x3x32x32xf32, #tpu.memory_space<vmem>>, vector<1x1x32x32xf32>
    %30 = vector.shape_cast %29 : vector<1x1x32x32xf32> to vector<32x32xf32>
    %c0_38 = arith.constant 0 : index
    %c0_39 = arith.constant 0 : index
    %c0_40 = arith.constant 0 : index
    %31 = vector.load %arg5[%c0_38, %c0_39, %c0_40] : memref<1x1x32xf32, #tpu.memory_space<vmem>>, vector<1x1x32xf32>
    %32 = vector.shape_cast %31 : vector<1x1x32xf32> to vector<1x32xf32>
    %33 = vector.shape_cast %32 : vector<1x32xf32> to vector<1x32xf32>
    %34 = vector.broadcast %33 : vector<1x32xf32> to vector<2x32xf32>
    %cst_41 = arith.constant 0.000000e+00 : f32
    %35 = vector.broadcast %cst_41 : f32 to vector<2x32xf32>
    %cst_42 = arith.constant dense<0.000000e+00> : vector<2x32xf32>
    %36 = tpu.matmul %35, %26, %cst_42 {dimension_numbers = #tpu.dot_dimension_numbers<[1], [0], [0], [1], [0, 0, 1, 1], [], []>} : vector<2x32xf32>, vector<32x32xf32>, vector<2x32xf32> -> vector<2x32xf32>
    %cst_43 = arith.constant dense<0.000000e+00> : vector<2x32xf32>
    %37 = tpu.matmul %35, %28, %cst_43 {dimension_numbers = #tpu.dot_dimension_numbers<[1], [0], [0], [1], [0, 0, 1, 1], [], []>} : vector<2x32xf32>, vector<32x32xf32>, vector<2x32xf32> -> vector<2x32xf32>
    %cst_44 = arith.constant dense<0.000000e+00> : vector<2x32xf32>
    %38 = tpu.matmul %35, %30, %cst_44 {dimension_numbers = #tpu.dot_dimension_numbers<[1], [0], [0], [1], [0, 0, 1, 1], [], []>} : vector<2x32xf32>, vector<32x32xf32>, vector<2x32xf32> -> vector<2x32xf32>
    %39 = arith.addf %38, %34 : vector<2x32xf32>
    %40 = vector.extract_strided_slice %10 {offsets = [0, 0], sizes = [2, 32], strides = [1, 1]} : vector<16x32xf32> to vector<2x32xf32>
    %41 = arith.addf %40, %36 : vector<2x32xf32>
    %42 = arith.negf %41 : vector<2x32xf32>
    %43 = math.exp %42 : vector<2x32xf32>
    %cst_45 = arith.constant 1.000000e+00 : f32
    %44 = vector.broadcast %cst_45 : f32 to vector<2x32xf32>
    %45 = arith.addf %44, %43 : vector<2x32xf32>
    %46 = arith.divf %44, %45 : vector<2x32xf32>
    %47 = vector.extract_strided_slice %17 {offsets = [0, 0], sizes = [2, 32], strides = [1, 1]} : vector<16x32xf32> to vector<2x32xf32>
    %48 = arith.addf %47, %37 : vector<2x32xf32>
    %49 = arith.negf %48 : vector<2x32xf32>
    %50 = math.exp %49 : vector<2x32xf32>
    %cst_46 = arith.constant 1.000000e+00 : f32
    %51 = vector.broadcast %cst_46 : f32 to vector<2x32xf32>
    %52 = arith.addf %51, %50 : vector<2x32xf32>
    %53 = arith.divf %51, %52 : vector<2x32xf32>
    %54 = vector.extract_strided_slice %24 {offsets = [0, 0], sizes = [2, 32], strides = [1, 1]} : vector<16x32xf32> to vector<2x32xf32>
    %55 = arith.mulf %46, %39 : vector<2x32xf32>
    %56 = arith.addf %54, %55 : vector<2x32xf32>
    %57 = math.tanh %56 : vector<2x32xf32>
    %58 = arith.subf %35, %57 : vector<2x32xf32>
    %59 = arith.mulf %53, %58 : vector<2x32xf32>
    %60 = arith.addf %57, %59 : vector<2x32xf32>
    %c0_47 = arith.constant 0 : index
    %c0_48 = arith.constant 0 : index
    %61 = vector.load %arg10[%c0_47, %c0_48] : memref<16x32xf32, #tpu.memory_space<vmem>>, vector<2x32xf32>
    tpu.vector_store %arg10[%c0_47, %c0_48], %60 {strides = array<i32>} : memref<16x32xf32, #tpu.memory_space<vmem>>, vector<2x32xf32>,
    %cst_49 = arith.constant dense<0.000000e+00> : vector<2x32xf32>
    %62 = tpu.matmul %60, %26, %cst_49 {dimension_numbers = #tpu.dot_dimension_numbers<[1], [0], [0], [1], [0, 0, 1, 1], [], []>} : vector<2x32xf32>, vector<32x32xf32>, vector<2x32xf32> -> vector<2x32xf32>
    %cst_50 = arith.constant dense<0.000000e+00> : vector<2x32xf32>
    %63 = tpu.matmul %60, %28, %cst_50 {dimension_numbers = #tpu.dot_dimension_numbers<[1], [0], [0], [1], [0, 0, 1, 1], [], []>} : vector<2x32xf32>, vector<32x32xf32>, vector<2x32xf32> -> vector<2x32xf32>
    %cst_51 = arith.constant dense<0.000000e+00> : vector<2x32xf32>
    %64 = tpu.matmul %60, %30, %cst_51 {dimension_numbers = #tpu.dot_dimension_numbers<[1], [0], [0], [1], [0, 0, 1, 1], [], []>} : vector<2x32xf32>, vector<32x32xf32>, vector<2x32xf32> -> vector<2x32xf32>
    %65 = arith.addf %64, %34 : vector<2x32xf32>
    %66 = vector.extract_strided_slice %10 {offsets = [2, 0], sizes = [2, 32], strides = [1, 1]} : vector<16x32xf32> to vector<2x32xf32>
    %67 = arith.addf %66, %62 : vector<2x32xf32>
    %68 = arith.negf %67 : vector<2x32xf32>
    %69 = math.exp %68 : vector<2x32xf32>
    %cst_52 = arith.constant 1.000000e+00 : f32
    %70 = vector.broadcast %cst_52 : f32 to vector<2x32xf32>
    %71 = arith.addf %70, %69 : vector<2x32xf32>
    %72 = arith.divf %70, %71 : vector<2x32xf32>
    %73 = vector.extract_strided_slice %17 {offsets = [2, 0], sizes = [2, 32], strides = [1, 1]} : vector<16x32xf32> to vector<2x32xf32>
    %74 = arith.addf %73, %63 : vector<2x32xf32>
    %75 = arith.negf %74 : vector<2x32xf32>
    %76 = math.exp %75 : vector<2x32xf32>
    %cst_53 = arith.constant 1.000000e+00 : f32
    %77 = vector.broadcast %cst_53 : f32 to vector<2x32xf32>
    %78 = arith.addf %77, %76 : vector<2x32xf32>
    %79 = arith.divf %77, %78 : vector<2x32xf32>
    %80 = vector.extract_strided_slice %24 {offsets = [2, 0], sizes = [2, 32], strides = [1, 1]} : vector<16x32xf32> to vector<2x32xf32>
    %81 = arith.mulf %72, %65 : vector<2x32xf32>
    %82 = arith.addf %80, %81 : vector<2x32xf32>
    %83 = math.tanh %82 : vector<2x32xf32>
    %84 = arith.subf %60, %83 : vector<2x32xf32>
    %85 = arith.mulf %79, %84 : vector<2x32xf32>
    %86 = arith.addf %83, %85 : vector<2x32xf32>
    %c2_54 = arith.constant 2 : index
    %c0_55 = arith.constant 0 : index
    %87 = vector.load %arg10[%c2_54, %c0_55] : memref<16x32xf32, #tpu.memory_space<vmem>>, vector<2x32xf32>
    tpu.vector_store %arg10[%c2_54, %c0_55], %86 {strides = array<i32>} : memref<16x32xf32, #tpu.memory_space<vmem>>, vector<2x32xf32>,
    %cst_56 = arith.constant dense<0.000000e+00> : vector<2x32xf32>
    %88 = tpu.matmul %86, %26, %cst_56 {dimension_numbers = #tpu.dot_dimension_numbers<[1], [0], [0], [1], [0, 0, 1, 1], [], []>} : vector<2x32xf32>, vector<32x32xf32>, vector<2x32xf32> -> vector<2x32xf32>
    %cst_57 = arith.constant dense<0.000000e+00> : vector<2x32xf32>
    %89 = tpu.matmul %86, %28, %cst_57 {dimension_numbers = #tpu.dot_dimension_numbers<[1], [0], [0], [1], [0, 0, 1, 1], [], []>} : vector<2x32xf32>, vector<32x32xf32>, vector<2x32xf32> -> vector<2x32xf32>
    %cst_58 = arith.constant dense<0.000000e+00> : vector<2x32xf32>
    %90 = tpu.matmul %86, %30, %cst_58 {dimension_numbers = #tpu.dot_dimension_numbers<[1], [0], [0], [1], [0, 0, 1, 1], [], []>} : vector<2x32xf32>, vector<32x32xf32>, vector<2x32xf32> -> vector<2x32xf32>
    %91 = arith.addf %90, %34 : vector<2x32xf32>
    %92 = vector.extract_strided_slice %10 {offsets = [4, 0], sizes = [2, 32], strides = [1, 1]} : vector<16x32xf32> to vector<2x32xf32>
    %93 = arith.addf %92, %88 : vector<2x32xf32>
    %94 = arith.negf %93 : vector<2x32xf32>
    %95 = math.exp %94 : vector<2x32xf32>
    %cst_59 = arith.constant 1.000000e+00 : f32
    %96 = vector.broadcast %cst_59 : f32 to vector<2x32xf32>
    %97 = arith.addf %96, %95 : vector<2x32xf32>
    %98 = arith.divf %96, %97 : vector<2x32xf32>
    %99 = vector.extract_strided_slice %17 {offsets = [4, 0], sizes = [2, 32], strides = [1, 1]} : vector<16x32xf32> to vector<2x32xf32>
    %100 = arith.addf %99, %89 : vector<2x32xf32>
    %101 = arith.negf %100 : vector<2x32xf32>
    %102 = math.exp %101 : vector<2x32xf32>
    %cst_60 = arith.constant 1.000000e+00 : f32
    %103 = vector.broadcast %cst_60 : f32 to vector<2x32xf32>
    %104 = arith.addf %103, %102 : vector<2x32xf32>
    %105 = arith.divf %103, %104 : vector<2x32xf32>
    %106 = vector.extract_strided_slice %24 {offsets = [4, 0], sizes = [2, 32], strides = [1, 1]} : vector<16x32xf32> to vector<2x32xf32>
    %107 = arith.mulf %98, %91 : vector<2x32xf32>
    %108 = arith.addf %106, %107 : vector<2x32xf32>
    %109 = math.tanh %108 : vector<2x32xf32>
    %110 = arith.subf %86, %109 : vector<2x32xf32>
    %111 = arith.mulf %105, %110 : vector<2x32xf32>
    %112 = arith.addf %109, %111 : vector<2x32xf32>
    %c4 = arith.constant 4 : index
    %c0_61 = arith.constant 0 : index
    %113 = vector.load %arg10[%c4, %c0_61] : memref<16x32xf32, #tpu.memory_space<vmem>>, vector<2x32xf32>
    tpu.vector_store %arg10[%c4, %c0_61], %112 {strides = array<i32>} : memref<16x32xf32, #tpu.memory_space<vmem>>, vector<2x32xf32>,
    %cst_62 = arith.constant dense<0.000000e+00> : vector<2x32xf32>
    %114 = tpu.matmul %112, %26, %cst_62 {dimension_numbers = #tpu.dot_dimension_numbers<[1], [0], [0], [1], [0, 0, 1, 1], [], []>} : vector<2x32xf32>, vector<32x32xf32>, vector<2x32xf32> -> vector<2x32xf32>
    %cst_63 = arith.constant dense<0.000000e+00> : vector<2x32xf32>
    %115 = tpu.matmul %112, %28, %cst_63 {dimension_numbers = #tpu.dot_dimension_numbers<[1], [0], [0], [1], [0, 0, 1, 1], [], []>} : vector<2x32xf32>, vector<32x32xf32>, vector<2x32xf32> -> vector<2x32xf32>
    %cst_64 = arith.constant dense<0.000000e+00> : vector<2x32xf32>
    %116 = tpu.matmul %112, %30, %cst_64 {dimension_numbers = #tpu.dot_dimension_numbers<[1], [0], [0], [1], [0, 0, 1, 1], [], []>} : vector<2x32xf32>, vector<32x32xf32>, vector<2x32xf32> -> vector<2x32xf32>
    %117 = arith.addf %116, %34 : vector<2x32xf32>
    %118 = vector.extract_strided_slice %10 {offsets = [6, 0], sizes = [2, 32], strides = [1, 1]} : vector<16x32xf32> to vector<2x32xf32>
    %119 = arith.addf %118, %114 : vector<2x32xf32>
    %120 = arith.negf %119 : vector<2x32xf32>
    %121 = math.exp %120 : vector<2x32xf32>
    %cst_65 = arith.constant 1.000000e+00 : f32
    %122 = vector.broadcast %cst_65 : f32 to vector<2x32xf32>
    %123 = arith.addf %122, %121 : vector<2x32xf32>
    %124 = arith.divf %122, %123 : vector<2x32xf32>
    %125 = vector.extract_strided_slice %17 {offsets = [6, 0], sizes = [2, 32], strides = [1, 1]} : vector<16x32xf32> to vector<2x32xf32>
    %126 = arith.addf %125, %115 : vector<2x32xf32>
    %127 = arith.negf %126 : vector<2x32xf32>
    %128 = math.exp %127 : vector<2x32xf32>
    %cst_66 = arith.constant 1.000000e+00 : f32
    %129 = vector.broadcast %cst_66 : f32 to vector<2x32xf32>
    %130 = arith.addf %129, %128 : vector<2x32xf32>
    %131 = arith.divf %129, %130 : vector<2x32xf32>
    %132 = vector.extract_strided_slice %24 {offsets = [6, 0], sizes = [2, 32], strides = [1, 1]} : vector<16x32xf32> to vector<2x32xf32>
    %133 = arith.mulf %124, %117 : vector<2x32xf32>
    %134 = arith.addf %132, %133 : vector<2x32xf32>
    %135 = math.tanh %134 : vector<2x32xf32>
    %136 = arith.subf %112, %135 : vector<2x32xf32>
    %137 = arith.mulf %131, %136 : vector<2x32xf32>
    %138 = arith.addf %135, %137 : vector<2x32xf32>
    %c6 = arith.constant 6 : index
    %c0_67 = arith.constant 0 : index
    %139 = vector.load %arg10[%c6, %c0_67] : memref<16x32xf32, #tpu.memory_space<vmem>>, vector<2x32xf32>
    tpu.vector_store %arg10[%c6, %c0_67], %138 {strides = array<i32>} : memref<16x32xf32, #tpu.memory_space<vmem>>, vector<2x32xf32>,
    %cst_68 = arith.constant dense<0.000000e+00> : vector<2x32xf32>
    %140 = tpu.matmul %138, %26, %cst_68 {dimension_numbers = #tpu.dot_dimension_numbers<[1], [0], [0], [1], [0, 0, 1, 1], [], []>} : vector<2x32xf32>, vector<32x32xf32>, vector<2x32xf32> -> vector<2x32xf32>
    %cst_69 = arith.constant dense<0.000000e+00> : vector<2x32xf32>
    %141 = tpu.matmul %138, %28, %cst_69 {dimension_numbers = #tpu.dot_dimension_numbers<[1], [0], [0], [1], [0, 0, 1, 1], [], []>} : vector<2x32xf32>, vector<32x32xf32>, vector<2x32xf32> -> vector<2x32xf32>
    %cst_70 = arith.constant dense<0.000000e+00> : vector<2x32xf32>
    %142 = tpu.matmul %138, %30, %cst_70 {dimension_numbers = #tpu.dot_dimension_numbers<[1], [0], [0], [1], [0, 0, 1, 1], [], []>} : vector<2x32xf32>, vector<32x32xf32>, vector<2x32xf32> -> vector<2x32xf32>
    %143 = arith.addf %142, %34 : vector<2x32xf32>
    %144 = vector.extract_strided_slice %10 {offsets = [8, 0], sizes = [2, 32], strides = [1, 1]} : vector<16x32xf32> to vector<2x32xf32>
    %145 = arith.addf %144, %140 : vector<2x32xf32>
    %146 = arith.negf %145 : vector<2x32xf32>
    %147 = math.exp %146 : vector<2x32xf32>
    %cst_71 = arith.constant 1.000000e+00 : f32
    %148 = vector.broadcast %cst_71 : f32 to vector<2x32xf32>
    %149 = arith.addf %148, %147 : vector<2x32xf32>
    %150 = arith.divf %148, %149 : vector<2x32xf32>
    %151 = vector.extract_strided_slice %17 {offsets = [8, 0], sizes = [2, 32], strides = [1, 1]} : vector<16x32xf32> to vector<2x32xf32>
    %152 = arith.addf %151, %141 : vector<2x32xf32>
    %153 = arith.negf %152 : vector<2x32xf32>
    %154 = math.exp %153 : vector<2x32xf32>
    %cst_72 = arith.constant 1.000000e+00 : f32
    %155 = vector.broadcast %cst_72 : f32 to vector<2x32xf32>
    %156 = arith.addf %155, %154 : vector<2x32xf32>
    %157 = arith.divf %155, %156 : vector<2x32xf32>
    %158 = vector.extract_strided_slice %24 {offsets = [8, 0], sizes = [2, 32], strides = [1, 1]} : vector<16x32xf32> to vector<2x32xf32>
    %159 = arith.mulf %150, %143 : vector<2x32xf32>
    %160 = arith.addf %158, %159 : vector<2x32xf32>
    %161 = math.tanh %160 : vector<2x32xf32>
    %162 = arith.subf %138, %161 : vector<2x32xf32>
    %163 = arith.mulf %157, %162 : vector<2x32xf32>
    %164 = arith.addf %161, %163 : vector<2x32xf32>
    %c8 = arith.constant 8 : index
    %c0_73 = arith.constant 0 : index
    %165 = vector.load %arg10[%c8, %c0_73] : memref<16x32xf32, #tpu.memory_space<vmem>>, vector<2x32xf32>
    tpu.vector_store %arg10[%c8, %c0_73], %164 {strides = array<i32>} : memref<16x32xf32, #tpu.memory_space<vmem>>, vector<2x32xf32>,
    %cst_74 = arith.constant dense<0.000000e+00> : vector<2x32xf32>
    %166 = tpu.matmul %164, %26, %cst_74 {dimension_numbers = #tpu.dot_dimension_numbers<[1], [0], [0], [1], [0, 0, 1, 1], [], []>} : vector<2x32xf32>, vector<32x32xf32>, vector<2x32xf32> -> vector<2x32xf32>
    %cst_75 = arith.constant dense<0.000000e+00> : vector<2x32xf32>
    %167 = tpu.matmul %164, %28, %cst_75 {dimension_numbers = #tpu.dot_dimension_numbers<[1], [0], [0], [1], [0, 0, 1, 1], [], []>} : vector<2x32xf32>, vector<32x32xf32>, vector<2x32xf32> -> vector<2x32xf32>
    %cst_76 = arith.constant dense<0.000000e+00> : vector<2x32xf32>
    %168 = tpu.matmul %164, %30, %cst_76 {dimension_numbers = #tpu.dot_dimension_numbers<[1], [0], [0], [1], [0, 0, 1, 1], [], []>} : vector<2x32xf32>, vector<32x32xf32>, vector<2x32xf32> -> vector<2x32xf32>
    %169 = arith.addf %168, %34 : vector<2x32xf32>
    %170 = vector.extract_strided_slice %10 {offsets = [10, 0], sizes = [2, 32], strides = [1, 1]} : vector<16x32xf32> to vector<2x32xf32>
    %171 = arith.addf %170, %166 : vector<2x32xf32>
    %172 = arith.negf %171 : vector<2x32xf32>
    %173 = math.exp %172 : vector<2x32xf32>
    %cst_77 = arith.constant 1.000000e+00 : f32
    %174 = vector.broadcast %cst_77 : f32 to vector<2x32xf32>
    %175 = arith.addf %174, %173 : vector<2x32xf32>
    %176 = arith.divf %174, %175 : vector<2x32xf32>
    %177 = vector.extract_strided_slice %17 {offsets = [10, 0], sizes = [2, 32], strides = [1, 1]} : vector<16x32xf32> to vector<2x32xf32>
    %178 = arith.addf %177, %167 : vector<2x32xf32>
    %179 = arith.negf %178 : vector<2x32xf32>
    %180 = math.exp %179 : vector<2x32xf32>
    %cst_78 = arith.constant 1.000000e+00 : f32
    %181 = vector.broadcast %cst_78 : f32 to vector<2x32xf32>
    %182 = arith.addf %181, %180 : vector<2x32xf32>
    %183 = arith.divf %181, %182 : vector<2x32xf32>
    %184 = vector.extract_strided_slice %24 {offsets = [10, 0], sizes = [2, 32], strides = [1, 1]} : vector<16x32xf32> to vector<2x32xf32>
    %185 = arith.mulf %176, %169 : vector<2x32xf32>
    %186 = arith.addf %184, %185 : vector<2x32xf32>
    %187 = math.tanh %186 : vector<2x32xf32>
    %188 = arith.subf %164, %187 : vector<2x32xf32>
    %189 = arith.mulf %183, %188 : vector<2x32xf32>
    %190 = arith.addf %187, %189 : vector<2x32xf32>
    %c10 = arith.constant 10 : index
    %c0_79 = arith.constant 0 : index
    %191 = vector.load %arg10[%c10, %c0_79] : memref<16x32xf32, #tpu.memory_space<vmem>>, vector<2x32xf32>
    tpu.vector_store %arg10[%c10, %c0_79], %190 {strides = array<i32>} : memref<16x32xf32, #tpu.memory_space<vmem>>, vector<2x32xf32>,
    %cst_80 = arith.constant dense<0.000000e+00> : vector<2x32xf32>
    %192 = tpu.matmul %190, %26, %cst_80 {dimension_numbers = #tpu.dot_dimension_numbers<[1], [0], [0], [1], [0, 0, 1, 1], [], []>} : vector<2x32xf32>, vector<32x32xf32>, vector<2x32xf32> -> vector<2x32xf32>
    %cst_81 = arith.constant dense<0.000000e+00> : vector<2x32xf32>
    %193 = tpu.matmul %190, %28, %cst_81 {dimension_numbers = #tpu.dot_dimension_numbers<[1], [0], [0], [1], [0, 0, 1, 1], [], []>} : vector<2x32xf32>, vector<32x32xf32>, vector<2x32xf32> -> vector<2x32xf32>
    %cst_82 = arith.constant dense<0.000000e+00> : vector<2x32xf32>
    %194 = tpu.matmul %190, %30, %cst_82 {dimension_numbers = #tpu.dot_dimension_numbers<[1], [0], [0], [1], [0, 0, 1, 1], [], []>} : vector<2x32xf32>, vector<32x32xf32>, vector<2x32xf32> -> vector<2x32xf32>
    %195 = arith.addf %194, %34 : vector<2x32xf32>
    %196 = vector.extract_strided_slice %10 {offsets = [12, 0], sizes = [2, 32], strides = [1, 1]} : vector<16x32xf32> to vector<2x32xf32>
    %197 = arith.addf %196, %192 : vector<2x32xf32>
    %198 = arith.negf %197 : vector<2x32xf32>
    %199 = math.exp %198 : vector<2x32xf32>
    %cst_83 = arith.constant 1.000000e+00 : f32
    %200 = vector.broadcast %cst_83 : f32 to vector<2x32xf32>
    %201 = arith.addf %200, %199 : vector<2x32xf32>
    %202 = arith.divf %200, %201 : vector<2x32xf32>
    %203 = vector.extract_strided_slice %17 {offsets = [12, 0], sizes = [2, 32], strides = [1, 1]} : vector<16x32xf32> to vector<2x32xf32>
    %204 = arith.addf %203, %193 : vector<2x32xf32>
    %205 = arith.negf %204 : vector<2x32xf32>
    %206 = math.exp %205 : vector<2x32xf32>
    %cst_84 = arith.constant 1.000000e+00 : f32
    %207 = vector.broadcast %cst_84 : f32 to vector<2x32xf32>
    %208 = arith.addf %207, %206 : vector<2x32xf32>
    %209 = arith.divf %207, %208 : vector<2x32xf32>
    %210 = vector.extract_strided_slice %24 {offsets = [12, 0], sizes = [2, 32], strides = [1, 1]} : vector<16x32xf32> to vector<2x32xf32>
    %211 = arith.mulf %202, %195 : vector<2x32xf32>
    %212 = arith.addf %210, %211 : vector<2x32xf32>
    %213 = math.tanh %212 : vector<2x32xf32>
    %214 = arith.subf %190, %213 : vector<2x32xf32>
    %215 = arith.mulf %209, %214 : vector<2x32xf32>
    %216 = arith.addf %213, %215 : vector<2x32xf32>
    %c12 = arith.constant 12 : index
    %c0_85 = arith.constant 0 : index
    %217 = vector.load %arg10[%c12, %c0_85] : memref<16x32xf32, #tpu.memory_space<vmem>>, vector<2x32xf32>
    tpu.vector_store %arg10[%c12, %c0_85], %216 {strides = array<i32>} : memref<16x32xf32, #tpu.memory_space<vmem>>, vector<2x32xf32>,
    %cst_86 = arith.constant dense<0.000000e+00> : vector<2x32xf32>
    %218 = tpu.matmul %216, %26, %cst_86 {dimension_numbers = #tpu.dot_dimension_numbers<[1], [0], [0], [1], [0, 0, 1, 1], [], []>} : vector<2x32xf32>, vector<32x32xf32>, vector<2x32xf32> -> vector<2x32xf32>
    %cst_87 = arith.constant dense<0.000000e+00> : vector<2x32xf32>
    %219 = tpu.matmul %216, %28, %cst_87 {dimension_numbers = #tpu.dot_dimension_numbers<[1], [0], [0], [1], [0, 0, 1, 1], [], []>} : vector<2x32xf32>, vector<32x32xf32>, vector<2x32xf32> -> vector<2x32xf32>
    %cst_88 = arith.constant dense<0.000000e+00> : vector<2x32xf32>
    %220 = tpu.matmul %216, %30, %cst_88 {dimension_numbers = #tpu.dot_dimension_numbers<[1], [0], [0], [1], [0, 0, 1, 1], [], []>} : vector<2x32xf32>, vector<32x32xf32>, vector<2x32xf32> -> vector<2x32xf32>
    %221 = arith.addf %220, %34 : vector<2x32xf32>
    %222 = vector.extract_strided_slice %10 {offsets = [14, 0], sizes = [2, 32], strides = [1, 1]} : vector<16x32xf32> to vector<2x32xf32>
    %223 = arith.addf %222, %218 : vector<2x32xf32>
    %224 = arith.negf %223 : vector<2x32xf32>
    %225 = math.exp %224 : vector<2x32xf32>
    %cst_89 = arith.constant 1.000000e+00 : f32
    %226 = vector.broadcast %cst_89 : f32 to vector<2x32xf32>
    %227 = arith.addf %226, %225 : vector<2x32xf32>
    %228 = arith.divf %226, %227 : vector<2x32xf32>
    %229 = vector.extract_strided_slice %17 {offsets = [14, 0], sizes = [2, 32], strides = [1, 1]} : vector<16x32xf32> to vector<2x32xf32>
    %230 = arith.addf %229, %219 : vector<2x32xf32>
    %231 = arith.negf %230 : vector<2x32xf32>
    %232 = math.exp %231 : vector<2x32xf32>
    %cst_90 = arith.constant 1.000000e+00 : f32
    %233 = vector.broadcast %cst_90 : f32 to vector<2x32xf32>
    %234 = arith.addf %233, %232 : vector<2x32xf32>
    %235 = arith.divf %233, %234 : vector<2x32xf32>
    %236 = vector.extract_strided_slice %24 {offsets = [14, 0], sizes = [2, 32], strides = [1, 1]} : vector<16x32xf32> to vector<2x32xf32>
    %237 = arith.mulf %228, %221 : vector<2x32xf32>
    %238 = arith.addf %236, %237 : vector<2x32xf32>
    %239 = math.tanh %238 : vector<2x32xf32>
    %240 = arith.subf %216, %239 : vector<2x32xf32>
    %241 = arith.mulf %235, %240 : vector<2x32xf32>
    %242 = arith.addf %239, %241 : vector<2x32xf32>
    %c14 = arith.constant 14 : index
    %c0_91 = arith.constant 0 : index
    %243 = vector.load %arg10[%c14, %c0_91] : memref<16x32xf32, #tpu.memory_space<vmem>>, vector<2x32xf32>
    tpu.vector_store %arg10[%c14, %c0_91], %242 {strides = array<i32>} : memref<16x32xf32, #tpu.memory_space<vmem>>, vector<2x32xf32>,
    %c0_92 = arith.constant 0 : index
    %c0_93 = arith.constant 0 : index
    %244 = vector.load %arg10[%c0_92, %c0_93] : memref<16x32xf32, #tpu.memory_space<vmem>>, vector<16x32xf32>
    %c0_94 = arith.constant 0 : index
    %c0_95 = arith.constant 0 : index
    %c0_96 = arith.constant 0 : index
    %245 = vector.load %arg6[%c0_94, %c0_95, %c0_96] : memref<1x32x32xf32, #tpu.memory_space<vmem>>, vector<1x32x32xf32>
    %246 = vector.shape_cast %245 : vector<1x32x32xf32> to vector<32x32xf32>
    %cst_97 = arith.constant dense<0.000000e+00> : vector<16x32xf32>
    %247 = tpu.matmul %244, %246, %cst_97 {dimension_numbers = #tpu.dot_dimension_numbers<[1], [0], [0], [1], [0, 0, 1, 1], [], []>} : vector<16x32xf32>, vector<32x32xf32>, vector<16x32xf32> -> vector<16x32xf32>
    %c0_98 = arith.constant 0 : index
    %c0_99 = arith.constant 0 : index
    %c0_100 = arith.constant 0 : index
    %248 = vector.load %arg7[%c0_98, %c0_99, %c0_100] : memref<1x1x32xf32, #tpu.memory_space<vmem>>, vector<1x1x32xf32>
    %249 = vector.shape_cast %248 : vector<1x1x32xf32> to vector<1x32xf32>
    %250 = vector.broadcast %249 : vector<1x32xf32> to vector<16x32xf32>
    %251 = arith.addf %247, %250 : vector<16x32xf32>
    %252 = arith.addf %251, %3 : vector<16x32xf32>
    %c0_101 = arith.constant 0 : index
    %c0_102 = arith.constant 0 : index
    %253 = vector.load %arg9[%c0_101, %c0_102] : memref<16x32xf32, #tpu.memory_space<vmem>>, vector<16x32xf32>
    tpu.vector_store %arg9[%c0_101, %c0_102], %252 {strides = array<i32>} : memref<16x32xf32, #tpu.memory_space<vmem>>, vector<16x32xf32>,
    %254 = vector.extract_strided_slice %252 {offsets = [14, 0], sizes = [2, 32], strides = [1, 1]} : vector<16x32xf32> to vector<2x32xf32>
    %c0_103 = arith.constant 0 : index
    %c0_104 = arith.constant 0 : index
    %255 = vector.load %arg8[%c0_103, %c0_104] : memref<2x32xf32, #tpu.memory_space<vmem>>, vector<2x32xf32>
    tpu.vector_store %arg8[%c0_103, %c0_104], %254 {strides = array<i32>} : memref<2x32xf32, #tpu.memory_space<vmem>>, vector<2x32xf32>,
    return
  }
  func.func @transform_0(%arg0: i32) -> (i32, i32) {
    %c0_i32 = arith.constant 0 : i32
    %c0_i32_0 = arith.constant 0 : i32
    %c0_i32_1 = arith.constant 0 : i32
    return %c0_i32, %c0_i32_0 : i32, i32
  }
  func.func @transform_1(%arg0: i32) -> (i32, i32, i32, i32) {
    %c0_i32 = arith.constant 0 : i32
    %c0_i32_0 = arith.constant 0 : i32
    %c0_i32_1 = arith.constant 0 : i32
    %c0_i32_2 = arith.constant 0 : i32
    return %arg0, %c0_i32, %c0_i32_0, %c0_i32_1 : i32, i32, i32, i32
  }
  func.func @transform_2(%arg0: i32) -> (i32, i32, i32, i32) {
    %c0_i32 = arith.constant 0 : i32
    %c0_i32_0 = arith.constant 0 : i32
    %c0_i32_1 = arith.constant 0 : i32
    %c0_i32_2 = arith.constant 0 : i32
    return %arg0, %c0_i32, %c0_i32_0, %c0_i32_1 : i32, i32, i32, i32
  }
  func.func @transform_3(%arg0: i32) -> (i32, i32, i32, i32) {
    %c0_i32 = arith.constant 0 : i32
    %c0_i32_0 = arith.constant 0 : i32
    %c0_i32_1 = arith.constant 0 : i32
    %c0_i32_2 = arith.constant 0 : i32
    return %arg0, %c0_i32, %c0_i32_0, %c0_i32_1 : i32, i32, i32, i32
  }
  func.func @transform_4(%arg0: i32) -> (i32, i32, i32) {
    %c0_i32 = arith.constant 0 : i32
    %c0_i32_0 = arith.constant 0 : i32
    %c0_i32_1 = arith.constant 0 : i32
    return %arg0, %c0_i32, %c0_i32_0 : i32, i32, i32
  }
  func.func @transform_5(%arg0: i32) -> (i32, i32, i32) {
    %c0_i32 = arith.constant 0 : i32
    %c0_i32_0 = arith.constant 0 : i32
    %c0_i32_1 = arith.constant 0 : i32
    return %arg0, %c0_i32, %c0_i32_0 : i32, i32, i32
  }
  func.func @transform_6(%arg0: i32) -> (i32, i32, i32) {
    %c0_i32 = arith.constant 0 : i32
    %c0_i32_0 = arith.constant 0 : i32
    %c0_i32_1 = arith.constant 0 : i32
    return %arg0, %c0_i32, %c0_i32_0 : i32, i32, i32
  }
  func.func @transform_7(%arg0: i32) -> (i32, i32) {
    %c0_i32 = arith.constant 0 : i32
    %c0_i32_0 = arith.constant 0 : i32
    %c0_i32_1 = arith.constant 0 : i32
    return %c0_i32, %c0_i32_0 : i32, i32
  }
}

</mosaic_0001>

<llo_original>
// kernel: tpu_custom_call.1
$region0: #{tpu_custom_call.1}
  #allocation0 [shape = 'u32[]', space=smem, size = 0x4, offset = 0x4, fixed_abs, tag = 'smem constant byte address 0x4 - core index']
  #allocation1 [shape = 'u32[144,128]{1,0:T(1,128)}', space=vmem, size = 0x12000, scoped, tag = 'internal scratch']
  #allocation2 [shape = 'f32[16,32]{1,0:T(8,128)}', space=vmem, size = 0x2000, scoped, tag = 'scratch operand']
  #allocation3 [shape = 'f32[16,32]{1,0:T(8,128)}', space=vmem, size = 0x2000, scoped, tag = 'scratch operand']
  %s0 = inlined_call_operand.hbm [shape: f32[16,32], index: 0, kind: input, shape index: {}]
  %s1 = inlined_call_operand.hbm [shape: f32[3,3,32,32], index: 1, kind: input, shape index: {}]
  %s2 = inlined_call_operand.hbm [shape: f32[3,3,1,32], index: 2, kind: input, shape index: {}]
  %s3 = inlined_call_operand.hbm [shape: f32[3,3,32,32], index: 3, kind: input, shape index: {}]
  %s4 = inlined_call_operand.vmem [shape: f32[3,1,32], index: 4, kind: input, shape index: {}]
  %s5 = inlined_call_operand.hbm [shape: f32[3,32,32], index: 5, kind: input, shape index: {}]
  %s6 = inlined_call_operand.vmem [shape: f32[3,1,32], index: 6, kind: input, shape index: {}]
  %s7 = inlined_call_operand.hbm [shape: f32[2,32], index: 7, kind: output, shape index: {}]
  %s8 = sld [smem:[#allocation0]]
  $region85: #{tpu_custom_call.1} parent=0
    _
  %s10 = ssub.s32 1, %s8
  %s11 = scalar_select 0, %s10, %s8
  $region1: #{tpu_custom_call.1} parent=0
    #allocation4 [shape = 'u8[8192]{0}', space=vmem, size = 0x2000, scoped, tag = 'input window, operand 0, single buffered']
    #allocation5 [shape = 's32[2]{0}', space=sflag, size = 0x8, scoped, tag = 'scoped memory for tpu_custom_call.1']
    #allocation6 [shape = 's32[2]{0}', space=sflag, size = 0x8, scoped, tag = 'scoped memory for tpu_custom_call.1']
    #allocation7 [shape = 'u8[98304]{0}', space=vmem, size = 0x18000, scoped, tag = 'input window, operand 1']
    #allocation8 [shape = 's32[2]{0}', space=sflag, size = 0x8, scoped, tag = 'scoped memory for tpu_custom_call.1']
    #allocation9 [shape = 'u8[3072]{0}', space=vmem, size = 0xc00, scoped, tag = 'input window, operand 2']
    #allocation10 [shape = 'u8[98304]{0}', space=vmem, size = 0x18000, scoped, tag = 'input window, operand 3']
    #allocation11 [shape = 's32[2]{0}', space=sflag, size = 0x8, scoped, tag = 'scoped memory for tpu_custom_call.1']
    #allocation12 [shape = 'u8[32768]{0}', space=vmem, size = 0x8000, scoped, tag = 'input window, operand 5']
    #allocation13 [shape = 'u8[1024]{0}', space=vmem, size = 0x400, scoped, tag = 'output window, operand 0, single buffered']
    %12 = vsyncpa [#allocation5], 0
    %13 = vsyncpa [#allocation8], 0
    %s14 = scalar_lea.sflag [#allocation8], 1
    %15 = vsyncpa %s14, 0
    %16 = vsyncpa [#allocation11], 0
    %s17 = scalar_lea.sflag [#allocation11], 1
    %18 = vsyncpa %s17, 0
    %19 = vsyncpa [#allocation6], 0
    loop: start=0, step=1, limit=5
    $region2: #{tpu_custom_call.1} parent=1 // loop_pre_header
      _
    $region3: #{tpu_custom_call.1} parent=1 // loop_header
      %s21 = sphi 0, %s25
      %p22 = scmp.ge.s32.totalorder %s21, 5
      %s29 = sphi 0, %s29
      %s31 = sphi 0, %s29
      %s32 = sphi 0, %s31
      %s46 = sphi 0, %s32
      %s52 = sphi 0, %s54
      %s55 = sphi 0, %s52
      %s56 = sphi 0, %s55
      %s72 = sphi 0, %s56
      %s78 = sphi 0, %s80
      %s81 = sphi 0, %s78
      %s82 = sphi 0, %s81
      %s98 = sphi 0, %s82
      %s104 = sphi 0, %s106
      %s107 = sphi 0, %s104
      %s108 = sphi 0, %s107
      %s124 = sphi 0, %s108
      %s130 = sphi 0, %s132
      %s133 = sphi 0, %s130
      %s134 = sphi 0, %s133
      %s150 = sphi 0, %s134
      %s156 = sphi 0, %s158
      %s159 = sphi 0, %s156
      %s160 = sphi 0, %s159
      %s176 = sphi 0, %s160
      %s182 = sphi 0, %s184
      %s185 = sphi 0, %s182
      %s186 = sphi 0, %s185
      %s202 = sphi 0, %s186
      %s206 = sphi 0, %s206
      %s208 = sphi 0, %s206
      %s209 = sphi 0, %s208
      %s223 = sphi 0, %s209
    $region4: #{tpu_custom_call.1} parent=1 // loop_header_branch
      %24 = sbr.rel (%p22) target = $region8
    $region5: #{tpu_custom_call.1} parent=1 // loop_body
      %s26 = ssub.s32 %s21, 1
      %s27 = ssub.s32 %s21, 2
      %s28 = sadd.s32 %s21, 1
      %s30 = sadd.s32 %s29, 1
      %p33 = scmp.eq.s32.totalorder %s21, 2
      %p34 = scmp.ne.s32.totalorder %s29, %s31
      %p35 = scmp.eq.s32.totalorder %s21, 0
      %p36 = por %p34, %p35
      %p37 = scmp.ne.s32.totalorder %s29, %s31
      %p38 = scmp.eq.s32.totalorder %s26, 2
      %p39 = por %p37, %p38
      %p40 = scmp.ne.s32.totalorder %s31, %s32
      %p41 = scmp.eq.s32.totalorder %s26, 0
      %p42 = por %p40, %p41
      %p43 = scmp.ne.s32.totalorder %s31, %s32
      %p44 = scmp.eq.s32.totalorder %s27, 2
      %p45 = por %p43, %p44
      %p47 = scmp.ne.s32.totalorder %s32, %s46
      %p48 = scmp.eq.s32.totalorder %s27, 0
      %p49 = por %p47, %p48
      %s50 = ssub.s32 %s21, %s28
      %p51 = scmp.eq.s32.totalorder %s50, 0
      %s53 = sadd.s32 %s52, 1
      %s54 = scalar_select %p51, %s52, %s53
      %p57 = pneg %p51
      %p58 = scmp.eq.s32.totalorder %s21, 2
      %p59 = por %p57, %p58
      %p60 = scmp.ne.s32.totalorder %s52, %s55
      %p61 = scmp.eq.s32.totalorder %s21, 0
      %p62 = por %p60, %p61
      %p63 = scmp.ne.s32.totalorder %s52, %s55
      %p64 = scmp.eq.s32.totalorder %s26, 2
      %p65 = por %p63, %p64
      %p66 = scmp.ne.s32.totalorder %s55, %s56
      %p67 = scmp.eq.s32.totalorder %s26, 0
      %p68 = por %p66, %p67
      %p69 = scmp.ne.s32.totalorder %s55, %s56
      %p70 = scmp.eq.s32.totalorder %s27, 2
      %p71 = por %p69, %p70
      %p73 = scmp.ne.s32.totalorder %s56, %s72
      %p74 = scmp.eq.s32.totalorder %s27, 0
      %p75 = por %p73, %p74
      %s76 = ssub.s32 %s21, %s28
      %p77 = scmp.eq.s32.totalorder %s76, 0
      %s79 = sadd.s32 %s78, 1
      %s80 = scalar_select %p77, %s78, %s79
      %p83 = pneg %p77
      %p84 = scmp.eq.s32.totalorder %s21, 2
      %p85 = por %p83, %p84
      %p86 = scmp.ne.s32.totalorder %s78, %s81
      %p87 = scmp.eq.s32.totalorder %s21, 0
      %p88 = por %p86, %p87
      %p89 = scmp.ne.s32.totalorder %s78, %s81
      %p90 = scmp.eq.s32.totalorder %s26, 2
      %p91 = por %p89, %p90
      %p92 = scmp.ne.s32.totalorder %s81, %s82
      %p93 = scmp.eq.s32.totalorder %s26, 0
      %p94 = por %p92, %p93
      %p95 = scmp.ne.s32.totalorder %s81, %s82
      %p96 = scmp.eq.s32.totalorder %s27, 2
      %p97 = por %p95, %p96
      %p99 = scmp.ne.s32.totalorder %s82, %s98
      %p100 = scmp.eq.s32.totalorder %s27, 0
      %p101 = por %p99, %p100
      %s102 = ssub.s32 %s21, %s28
      %p103 = scmp.eq.s32.totalorder %s102, 0
      %s105 = sadd.s32 %s104, 1
      %s106 = scalar_select %p103, %s104, %s105
      %p109 = pneg %p103
      %p110 = scmp.eq.s32.totalorder %s21, 2
      %p111 = por %p109, %p110
      %p112 = scmp.ne.s32.totalorder %s104, %s107
      %p113 = scmp.eq.s32.totalorder %s21, 0
      %p114 = por %p112, %p113
      %p115 = scmp.ne.s32.totalorder %s104, %s107
      %p116 = scmp.eq.s32.totalorder %s26, 2
      %p117 = por %p115, %p116
      %p118 = scmp.ne.s32.totalorder %s107, %s108
      %p119 = scmp.eq.s32.totalorder %s26, 0
      %p120 = por %p118, %p119
      %p121 = scmp.ne.s32.totalorder %s107, %s108
      %p122 = scmp.eq.s32.totalorder %s27, 2
      %p123 = por %p121, %p122
      %p125 = scmp.ne.s32.totalorder %s108, %s124
      %p126 = scmp.eq.s32.totalorder %s27, 0
      %p127 = por %p125, %p126
      %s128 = ssub.s32 %s21, %s28
      %p129 = scmp.eq.s32.totalorder %s128, 0
      %s131 = sadd.s32 %s130, 1
      %s132 = scalar_select %p129, %s130, %s131
      %p135 = pneg %p129
      %p136 = scmp.eq.s32.totalorder %s21, 2
      %p137 = por %p135, %p136
      %p138 = scmp.ne.s32.totalorder %s130, %s133
      %p139 = scmp.eq.s32.totalorder %s21, 0
      %p140 = por %p138, %p139
      %p141 = scmp.ne.s32.totalorder %s130, %s133
      %p142 = scmp.eq.s32.totalorder %s26, 2
      %p143 = por %p141, %p142
      %p144 = scmp.ne.s32.totalorder %s133, %s134
      %p145 = scmp.eq.s32.totalorder %s26, 0
      %p146 = por %p144, %p145
      %p147 = scmp.ne.s32.totalorder %s133, %s134
      %p148 = scmp.eq.s32.totalorder %s27, 2
      %p149 = por %p147, %p148
      %p151 = scmp.ne.s32.totalorder %s134, %s150
      %p152 = scmp.eq.s32.totalorder %s27, 0
      %p153 = por %p151, %p152
      %s154 = ssub.s32 %s21, %s28
      %p155 = scmp.eq.s32.totalorder %s154, 0
      %s157 = sadd.s32 %s156, 1
      %s158 = scalar_select %p155, %s156, %s157
      %p161 = pneg %p155
      %p162 = scmp.eq.s32.totalorder %s21, 2
      %p163 = por %p161, %p162
      %p164 = scmp.ne.s32.totalorder %s156, %s159
      %p165 = scmp.eq.s32.totalorder %s21, 0
      %p166 = por %p164, %p165
      %p167 = scmp.ne.s32.totalorder %s156, %s159
      %p168 = scmp.eq.s32.totalorder %s26, 2
      %p169 = por %p167, %p168
      %p170 = scmp.ne.s32.totalorder %s159, %s160
      %p171 = scmp.eq.s32.totalorder %s26, 0
      %p172 = por %p170, %p171
      %p173 = scmp.ne.s32.totalorder %s159, %s160
      %p174 = scmp.eq.s32.totalorder %s27, 2
      %p175 = por %p173, %p174
      %p177 = scmp.ne.s32.totalorder %s160, %s176
      %p178 = scmp.eq.s32.totalorder %s27, 0
      %p179 = por %p177, %p178
      %s180 = ssub.s32 %s21, %s28
      %p181 = scmp.eq.s32.totalorder %s180, 0
      %s183 = sadd.s32 %s182, 1
      %s184 = scalar_select %p181, %s182, %s183
      %p187 = pneg %p181
      %p188 = scmp.eq.s32.totalorder %s21, 2
      %p189 = por %p187, %p188
      %p190 = scmp.ne.s32.totalorder %s182, %s185
      %p191 = scmp.eq.s32.totalorder %s21, 0
      %p192 = por %p190, %p191
      %p193 = scmp.ne.s32.totalorder %s182, %s185
      %p194 = scmp.eq.s32.totalorder %s26, 2
      %p195 = por %p193, %p194
      %p196 = scmp.ne.s32.totalorder %s185, %s186
      %p197 = scmp.eq.s32.totalorder %s26, 0
      %p198 = por %p196, %p197
      %p199 = scmp.ne.s32.totalorder %s185, %s186
      %p200 = scmp.eq.s32.totalorder %s27, 2
      %p201 = por %p199, %p200
      %p203 = scmp.ne.s32.totalorder %s186, %s202
      %p204 = scmp.eq.s32.totalorder %s27, 0
      %p205 = por %p203, %p204
      %s207 = sadd.s32 %s206, 1
      %p210 = scmp.eq.s32.totalorder %s21, 2
      %p211 = scmp.ne.s32.totalorder %s206, %s208
      %p212 = scmp.eq.s32.totalorder %s21, 0
      %p213 = por %p211, %p212
      %p214 = scmp.ne.s32.totalorder %s206, %s208
      %p215 = scmp.eq.s32.totalorder %s26, 2
      %p216 = por %p214, %p215
      %p217 = scmp.ne.s32.totalorder %s208, %s209
      %p218 = scmp.eq.s32.totalorder %s26, 0
      %p219 = por %p217, %p218
      %p220 = scmp.ne.s32.totalorder %s208, %s209
      %p221 = scmp.eq.s32.totalorder %s27, 2
      %p222 = por %p220, %p221
      %p224 = scmp.ne.s32.totalorder %s209, %s223
      %p225 = scmp.eq.s32.totalorder %s27, 0
      %p226 = por %p224, %p225
      %p227 = scmp.le.s32.totalorder 1, %s21
      %p228 = scmp.lt.s32.totalorder %s21, 4
      %p229 = pnand %p227, %p228
      %p230 = pneg %p229
      // Predicated region
      $region9: #{tpu_custom_call.1} parent=5 // pred_check
        _
      $region10: #{tpu_custom_call.1} parent=5 // pred_check_branch
        %232 = sbr.rel (%p229) target = $region12
      $region11: #{tpu_custom_call.1} parent=5 // pred_region
        %s233 = ssub.s32 %s21, 1
        // Predicated region
        $region13: #{tpu_custom_call.1} parent=11 // pred_check
          %p234 = pneg %p42
        $region14: #{tpu_custom_call.1} parent=11 // pred_check_branch
          %236 = sbr.rel (%p234) target = $region16
        $region15: #{tpu_custom_call.1} parent=11 // pred_region
          %s238 = ssub.s32 256, 256
          %239 = vsyncadd [#allocation5], %s238
          %s240 = sshll.u32 [#allocation4], 4
          %s241 = int_to_ptr.vmem [resolvable:$true] %s240
          %246 = dma.hbm_to_vmem [thread:$0]  %s0, 256, %s241, [#allocation5], 128, 128, 8
        $region16: #{tpu_custom_call.1} parent=11 // pred_fallthru
          _
      $region12: #{tpu_custom_call.1} parent=5 // pred_fallthru
        _
      %p247 = scmp.lt.s32.totalorder %s21, 3
      // Predicated region
      $region17: #{tpu_custom_call.1} parent=5 // pred_check
        %p248 = pneg %p247
      $region18: #{tpu_custom_call.1} parent=5 // pred_check_branch
        %250 = sbr.rel (%p248) target = $region20
      $region19: #{tpu_custom_call.1} parent=5 // pred_region
        // Predicated region
        $region21: #{tpu_custom_call.1} parent=19 // pred_check
          %p251 = pneg %p62
        $region22: #{tpu_custom_call.1} parent=19 // pred_check_branch
          %253 = sbr.rel (%p251) target = $region24
        $region23: #{tpu_custom_call.1} parent=19 // pred_region
          %s254 = sand.u32 %s21, 1
          %s255 = scalar_lea.sflag [#allocation8], %s254
          %s256 = sand.u32 %s52, 1
          %s257 = smul.addr %s256, 96
          %s258 = scalar_lea.vmem [#allocation7], %s257
          %s260 = ssub.s32 1536, 1536
          %261 = vsyncadd %s255, %s260
          %s262 = smul.addr %s21, 12
          %s263 = smul.addr %s262, 128
          %s264 = scalar_lea.hbm %s1, %s263
          %s265 = sshll.u32 %s258, 4
          %s266 = int_to_ptr.vmem [resolvable:$true] %s265
          %271 = dma.hbm_to_vmem [thread:$0]  %s264, 1536, %s266, %s255, 128, 128, 8
        $region24: #{tpu_custom_call.1} parent=19 // pred_fallthru
          _
        // Predicated region
        $region25: #{tpu_custom_call.1} parent=19 // pred_check
          %p272 = pneg %p88
        $region26: #{tpu_custom_call.1} parent=19 // pred_check_branch
          %274 = sbr.rel (%p272) target = $region28
        $region27: #{tpu_custom_call.1} parent=19 // pred_region
          %s275 = sand.u32 %s21, 1
          %s276 = scalar_lea.sflag [#allocation8], %s275
          %s277 = sand.u32 %s78, 1
          %s278 = smul.addr %s277, 3
          %s279 = scalar_lea.vmem [#allocation9], %s278
          %s281 = ssub.s32 48, 48
          %282 = vsyncadd %s276, %s281
          %s283 = smul.addr %s21, 3
          %s284 = smul.addr %s283, 16
          %s285 = scalar_lea.hbm %s2, %s284
          %s286 = sshll.u32 %s279, 4
          %s287 = int_to_ptr.vmem [resolvable:$true] %s286
          %292 = dma.hbm_to_vmem [thread:$0]  %s285, 48, %s287, %s276, 16, 16, 1
        $region28: #{tpu_custom_call.1} parent=19 // pred_fallthru
          _
        // Predicated region
        $region29: #{tpu_custom_call.1} parent=19 // pred_check
          %p293 = pneg %p114
        $region30: #{tpu_custom_call.1} parent=19 // pred_check_branch
          %295 = sbr.rel (%p293) target = $region32
        $region31: #{tpu_custom_call.1} parent=19 // pred_region
          %s296 = sand.u32 %s21, 1
          %s297 = scalar_lea.sflag [#allocation11], %s296
          %s298 = sand.u32 %s104, 1
          %s299 = smul.addr %s298, 96
          %s300 = scalar_lea.vmem [#allocation10], %s299
          %s302 = ssub.s32 1536, 1536
          %303 = vsyncadd %s297, %s302
          %s304 = smul.addr %s21, 12
          %s305 = smul.addr %s304, 128
          %s306 = scalar_lea.hbm %s3, %s305
          %s307 = sshll.u32 %s300, 4
          %s308 = int_to_ptr.vmem [resolvable:$true] %s307
          %313 = dma.hbm_to_vmem [thread:$0]  %s306, 1536, %s308, %s297, 128, 128, 8
        $region32: #{tpu_custom_call.1} parent=19 // pred_fallthru
          _
        // Predicated region
        $region33: #{tpu_custom_call.1} parent=19 // pred_check
          %p314 = pneg %p140
        $region34: #{tpu_custom_call.1} parent=19 // pred_check_branch
          %316 = sbr.rel (%p314) target = $region36
        $region35: #{tpu_custom_call.1} parent=19 // pred_region
          %p317 = scmp.lt.s32.totalorder %s21, 2
          %s318 = scalar_select %p317, %s21, 2
          %s319 = scalar_lea.vmem %s4, %s318
        $region36: #{tpu_custom_call.1} parent=19 // pred_fallthru
          _
        // Predicated region
        $region37: #{tpu_custom_call.1} parent=19 // pred_check
          %p320 = pneg %p166
        $region38: #{tpu_custom_call.1} parent=19 // pred_check_branch
          %322 = sbr.rel (%p320) target = $region40
        $region39: #{tpu_custom_call.1} parent=19 // pred_region
          %s323 = sand.u32 %s21, 1
          %s324 = scalar_lea.sflag [#allocation11], %s323
          %s325 = sand.u32 %s156, 1
          %s326 = smul.addr %s325, 32
          %s327 = scalar_lea.vmem [#allocation12], %s326
          %s329 = ssub.s32 512, 512
          %330 = vsyncadd %s324, %s329
          %s331 = smul.addr %s21, 4
          %s332 = smul.addr %s331, 128
          %s333 = scalar_lea.hbm %s5, %s332
          %s334 = sshll.u32 %s327, 4
          %s335 = int_to_ptr.vmem [resolvable:$true] %s334
          %340 = dma.hbm_to_vmem [thread:$0]  %s333, 512, %s335, %s324, 128, 128, 8
        $region40: #{tpu_custom_call.1} parent=19 // pred_fallthru
          _
        // Predicated region
        $region41: #{tpu_custom_call.1} parent=19 // pred_check
          %p341 = pneg %p192
        $region42: #{tpu_custom_call.1} parent=19 // pred_check_branch
          %343 = sbr.rel (%p341) target = $region44
        $region43: #{tpu_custom_call.1} parent=19 // pred_region
          %p344 = scmp.lt.s32.totalorder %s21, 2
          %s345 = scalar_select %p344, %s21, 2
          %s346 = scalar_lea.vmem %s6, %s345
        $region44: #{tpu_custom_call.1} parent=19 // pred_fallthru
          _
      $region20: #{tpu_custom_call.1} parent=5 // pred_fallthru
        _
      %p347 = scmp.le.s32.totalorder 1, %s21
      %p348 = scmp.lt.s32.totalorder %s21, 4
      %p349 = pnand %p347, %p348
      %p350 = pneg %p349
      // Predicated region
      $region45: #{tpu_custom_call.1} parent=5 // pred_check
        _
      $region46: #{tpu_custom_call.1} parent=5 // pred_check_branch
        %352 = sbr.rel (%p349) target = $region48
      $region47: #{tpu_custom_call.1} parent=5 // pred_region
        %s353 = ssub.s32 %s21, 1
        // Predicated region
        $region49: #{tpu_custom_call.1} parent=47 // pred_check
          %p354 = pneg %p42
        $region50: #{tpu_custom_call.1} parent=47 // pred_check_branch
          %356 = sbr.rel (%p354) target = $region52
        $region51: #{tpu_custom_call.1} parent=47 // pred_region
          %357 = dma.done [#allocation5], 256
        $region52: #{tpu_custom_call.1} parent=47 // pred_fallthru
          _
        %s358 = sand.u32 %s26, 1
        %s359 = scalar_lea.sflag [#allocation8], %s358
        %s360 = sand.u32 %s55, 1
        %s361 = smul.addr %s360, 96
        %s362 = scalar_lea.vmem [#allocation7], %s361
        // Predicated region
        $region53: #{tpu_custom_call.1} parent=47 // pred_check
          %p363 = pneg %p68
        $region54: #{tpu_custom_call.1} parent=47 // pred_check_branch
          %365 = sbr.rel (%p363) target = $region56
        $region55: #{tpu_custom_call.1} parent=47 // pred_region
          %366 = dma.done %s359, 1536
        $region56: #{tpu_custom_call.1} parent=47 // pred_fallthru
          _
        %s367 = sand.u32 %s26, 1
        %s368 = scalar_lea.sflag [#allocation8], %s367
        %s369 = sand.u32 %s81, 1
        %s370 = smul.addr %s369, 3
        %s371 = scalar_lea.vmem [#allocation9], %s370
        // Predicated region
        $region57: #{tpu_custom_call.1} parent=47 // pred_check
          %p372 = pneg %p94
        $region58: #{tpu_custom_call.1} parent=47 // pred_check_branch
          %374 = sbr.rel (%p372) target = $region60
        $region59: #{tpu_custom_call.1} parent=47 // pred_region
          %375 = dma.done %s368, 48
        $region60: #{tpu_custom_call.1} parent=47 // pred_fallthru
          _
        %s376 = sand.u32 %s26, 1
        %s377 = scalar_lea.sflag [#allocation11], %s376
        %s378 = sand.u32 %s107, 1
        %s379 = smul.addr %s378, 96
        %s380 = scalar_lea.vmem [#allocation10], %s379
        // Predicated region
        $region61: #{tpu_custom_call.1} parent=47 // pred_check
          %p381 = pneg %p120
        $region62: #{tpu_custom_call.1} parent=47 // pred_check_branch
          %383 = sbr.rel (%p381) target = $region64
        $region63: #{tpu_custom_call.1} parent=47 // pred_region
          %384 = dma.done %s377, 1536
        $region64: #{tpu_custom_call.1} parent=47 // pred_fallthru
          _
        %s385 = sand.u32 %s26, 1
        %s386 = scalar_lea.sflag [#allocation11], %s385
        %s387 = sand.u32 %s159, 1
        %s388 = smul.addr %s387, 32
        %s389 = scalar_lea.vmem [#allocation12], %s388
        // Predicated region
        $region65: #{tpu_custom_call.1} parent=47 // pred_check
          %p390 = pneg %p172
        $region66: #{tpu_custom_call.1} parent=47 // pred_check_branch
          %392 = sbr.rel (%p390) target = $region68
        $region67: #{tpu_custom_call.1} parent=47 // pred_region
          %393 = dma.done %s386, 512
        $region68: #{tpu_custom_call.1} parent=47 // pred_fallthru
          _
        %p394 = pneg %p42
        %p395 = pneg %p39
        %s396 = sand.u32 %s26, 1
        %s397 = scalar_lea.sflag [#allocation8], %s396
        %s398 = sand.u32 %s55, 1
        %s399 = smul.addr %s398, 96
        %s400 = scalar_lea.vmem [#allocation7], %s399
        %p401 = pneg %p68
        %p402 = pneg %p65
        %s403 = sand.u32 %s26, 1
        %s404 = scalar_lea.sflag [#allocation8], %s403
        %s405 = sand.u32 %s81, 1
        %s406 = smul.addr %s405, 3
        %s407 = scalar_lea.vmem [#allocation9], %s406
        %p408 = pneg %p94
        %p409 = pneg %p91
        %s410 = sand.u32 %s26, 1
        %s411 = scalar_lea.sflag [#allocation11], %s410
        %s412 = sand.u32 %s107, 1
        %s413 = smul.addr %s412, 96
        %s414 = scalar_lea.vmem [#allocation10], %s413
        %p415 = pneg %p120
        %p416 = pneg %p117
        %p417 = scmp.lt.s32.totalorder %s26, 2
        %s418 = scalar_select %p417, %s26, 2
        %s419 = scalar_lea.vmem %s4, %s418
        %p420 = pneg %p146
        %p421 = pneg %p143
        %s422 = sand.u32 %s26, 1
        %s423 = scalar_lea.sflag [#allocation11], %s422
        %s424 = sand.u32 %s159, 1
        %s425 = smul.addr %s424, 32
        %s426 = scalar_lea.vmem [#allocation12], %s425
        %p427 = pneg %p172
        %p428 = pneg %p169
        %p429 = scmp.lt.s32.totalorder %s26, 2
        %s430 = scalar_select %p429, %s26, 2
        %s431 = scalar_lea.vmem %s6, %s430
        %p432 = pneg %p198
        %p433 = pneg %p195
        %p434 = pneg %p219
        %p435 = pneg %p216
        %p436 = scmp.lt.s32.totalorder %s26, 2
        %s437 = scalar_select %p436, %s26, 2
        %s438 = scalar_lea.vmem %s4, %s437
        %p439 = scmp.lt.s32.totalorder %s26, 2
        %s440 = scalar_select %p439, %s26, 2
        %s441 = scalar_lea.vmem %s6, %s440
        %p442 = scmp.eq.s32.totalorder %s26, 0
        // Predicated region
        $region69: #{tpu_custom_call.1} parent=47 // pred_check
          %p443 = pneg %p442
        $region70: #{tpu_custom_call.1} parent=47 // pred_check_branch
          %445 = sbr.rel (%p443) target = $region72
        $region71: #{tpu_custom_call.1} parent=47 // pred_region
          %v446 = vld [vmem:[#allocation4] sm:$0xff]
          %v447 = vld [vmem:[#allocation4 + $0x8] sm:$0xff]
          %vm448 = vcmask 261120
          %449 = vst.msk [vmem:[#allocation2] sm:$0xff] %vm448, %v446
          %450 = vst.msk [vmem:[#allocation2 + $0x8] sm:$0xff] %vm448, %v447
        $region72: #{tpu_custom_call.1} parent=47 // pred_fallthru
          _
        %v451 = vld [vmem:[#allocation2] sm:$0xff]
        %v452 = vld [vmem:[#allocation2 + $0x8] sm:$0xff]
        %v453 = vld [vmem:[%s362] sm:$0xff]
        %v454 = vld [vmem:[%s362 + $0x8] sm:$0xff]
        %v455 = vld [vmem:[%s362 + $0x10] sm:$0xff]
        %v456 = vld [vmem:[%s362 + $0x18] sm:$0xff]
        %v457 = vld [vmem:[%s371] sm:$0x1]
        %v459 = vlaneseq
        %v460 = vshrl.u32 %v459, 7
        %v461 = vsub.s32 0, %v460
        %v462 = vrot.slane %v457, %v461
        %vm464 = vcmask 261120
        %v466 = vsel %vm464, %v451, 0
        %v469 = vsel %vm464, %v452, 0
        %471 = vmatprep.subr.mxu0 0.0
        %472 = vmatpush1.msra.mxu0 %v453
        %473 = vmatprep.subr.mxu0 0.0
        %474 = vmatpush1.msra.mxu0 %v454
        %475 = vmatprep.subr.mxu0 0.0
        %476 = vmatpush1.msra.mxu0 %v455
        %477 = vmatprep.subr.mxu0 0.0
        %478 = vmatpush1.msra.mxu0 %v456
        %479 = vmatprep.subr.mxu0 0.0
        %480 = vmatpush1.msra.mxu0 0.0
        %481 = vmatprep.subr.mxu0 0.0
        %482 = vmatpush1.msra.mxu0 0.0
        %483 = vmatprep.subr.mxu0 0.0
        %484 = vmatpush1.msra.mxu0 0.0
        %485 = vmatprep.subr.mxu0 0.0
        %486 = vmatpush1.msra.mxu0 0.0
        %487 = vmatprep.subr.mxu0 0.0
        %488 = vmatpush1.msra.mxu0 0.0
        %489 = vmatprep.subr.mxu0 0.0
        %490 = vmatpush1.msra.mxu0 0.0
        %491 = vmatprep.subr.mxu0 0.0
        %492 = vmatpush1.msra.mxu0 0.0
        %493 = vmatprep.subr.mxu0 0.0
        %494 = vmatpush1.msra.mxu0 0.0
        %495 = vmatprep.subr.mxu0 0.0
        %496 = vmatpush1.msra.mxu0 0.0
        %497 = vmatprep.subr.mxu0 0.0
        %498 = vmatpush1.msra.mxu0 0.0
        %499 = vmatprep.subr.mxu0 0.0
        %500 = vmatpush1.msra.mxu0 0.0
        %501 = vmatprep.subr.mxu0 0.0
        %502 = vmatpush1.msra.mxu0 0.0
        %503 = vmatprep.subr.mxu0 0.0
        %504 = vmatpush1.msra.mxu0 0.0
        %505 = vmatprep.subr.mxu0 0.0
        %506 = vmatpush1.msra.mxu0 0.0
        %507 = vmatprep.subr.mxu0 0.0
        %508 = vmatpush1.msra.mxu0 0.0
        %509 = vmatprep.subr.mxu0 0.0
        %510 = vmatpush1.msra.mxu0 0.0
        %511 = vmatprep.subr.mxu0 0.0
        %512 = vmatpush1.msra.mxu0 0.0
        %513 = vmatprep.subr.mxu0 0.0
        %514 = vmatpush1.msra.mxu0 0.0
        %515 = vmatprep.subr.mxu0 0.0
        %516 = vmatpush1.msra.mxu0 0.0
        %517 = vmatprep.subr.mxu0 0.0
        %518 = vmatpush1.msra.mxu0 0.0
        %519 = vmatprep.subr.mxu0 0.0
        %520 = vmatpush1.msra.mxu0 0.0
        %521 = vmatprep.subr.mxu0 0.0
        %522 = vmatpush1.msra.mxu0 0.0
        %523 = vmatprep.subr.mxu0 0.0
        %524 = vmatpush1.msra.mxu0 0.0
        %525 = vmatprep.subr.mxu0 0.0
        %526 = vmatpush1.msra.mxu0 0.0
        %527 = vmatprep.subr.mxu0 0.0
        %528 = vmatpush1.msra.mxu0 0.0
        %529 = vmatprep.subr.mxu0 0.0
        %530 = vmatpush1.msra.mxu0 0.0
        %531 = vmatprep.subr.mxu0 0.0
        %532 = vmatpush1.msra.mxu0 0.0
        %533 = vmatprep.subr.mxu0 0.0
        %534 = vmatpush1.msra.mxu0 0.0
        %535 = vmatprep.mubr.f32.mxu0 0.0
        %536 = vmatmul.mubr.f32.gmra.mrb[0].mxu0 %v466
        %v537 = vpop.f32.mrb[0].mxu0
        %v538 = vadd.f32 %v462, %v537
        %v539 = vpop.f32.mrb[0].mxu0
        %540 = vmatprep.mubr.f32.mxu0 0.0
        %541 = vmatmul.mubr.f32.gmra.mrb[0].mxu0 %v469
        %v542 = vpop.f32.mrb[0].mxu0
        %v543 = vadd.f32 %v462, %v542
        %v544 = vpop.f32.mrb[0].mxu0
        %545 = vdwg.mxu0
        %s546 = scalar_lea.vmem %s362, 32 [#allocation7]
        %v547 = vld [vmem:[%s546] sm:$0xff]
        %v548 = vld [vmem:[%s546 + $0x8] sm:$0xff]
        %v549 = vld [vmem:[%s546 + $0x10] sm:$0xff]
        %v550 = vld [vmem:[%s546 + $0x18] sm:$0xff]
        %s551 = scalar_lea.vmem %s371, 1 [#allocation9]
        %v552 = vld [vmem:[%s551] sm:$0x1]
        %v554 = vlaneseq
        %v555 = vshrl.u32 %v554, 7
        %v556 = vsub.s32 0, %v555
        %v557 = vrot.slane %v552, %v556
        %559 = vmatprep.subr.mxu0 0.0
        %560 = vmatpush1.msra.mxu0 %v547
        %561 = vmatprep.subr.mxu0 0.0
        %562 = vmatpush1.msra.mxu0 %v548
        %563 = vmatprep.subr.mxu0 0.0
        %564 = vmatpush1.msra.mxu0 %v549
        %565 = vmatprep.subr.mxu0 0.0
        %566 = vmatpush1.msra.mxu0 %v550
        %567 = vmatprep.subr.mxu0 0.0
        %568 = vmatpush1.msra.mxu0 0.0
        %569 = vmatprep.subr.mxu0 0.0
        %570 = vmatpush1.msra.mxu0 0.0
        %571 = vmatprep.subr.mxu0 0.0
        %572 = vmatpush1.msra.mxu0 0.0
        %573 = vmatprep.subr.mxu0 0.0
        %574 = vmatpush1.msra.mxu0 0.0
        %575 = vmatprep.subr.mxu0 0.0
        %576 = vmatpush1.msra.mxu0 0.0
        %577 = vmatprep.subr.mxu0 0.0
        %578 = vmatpush1.msra.mxu0 0.0
        %579 = vmatprep.subr.mxu0 0.0
        %580 = vmatpush1.msra.mxu0 0.0
        %581 = vmatprep.subr.mxu0 0.0
        %582 = vmatpush1.msra.mxu0 0.0
        %583 = vmatprep.subr.mxu0 0.0
        %584 = vmatpush1.msra.mxu0 0.0
        %585 = vmatprep.subr.mxu0 0.0
        %586 = vmatpush1.msra.mxu0 0.0
        %587 = vmatprep.subr.mxu0 0.0
        %588 = vmatpush1.msra.mxu0 0.0
        %589 = vmatprep.subr.mxu0 0.0
        %590 = vmatpush1.msra.mxu0 0.0
        %591 = vmatprep.subr.mxu0 0.0
        %592 = vmatpush1.msra.mxu0 0.0
        %593 = vmatprep.subr.mxu0 0.0
        %594 = vmatpush1.msra.mxu0 0.0
        %595 = vmatprep.subr.mxu0 0.0
        %596 = vmatpush1.msra.mxu0 0.0
        %597 = vmatprep.subr.mxu0 0.0
        %598 = vmatpush1.msra.mxu0 0.0
        %599 = vmatprep.subr.mxu0 0.0
        %600 = vmatpush1.msra.mxu0 0.0
        %601 = vmatprep.subr.mxu0 0.0
        %602 = vmatpush1.msra.mxu0 0.0
        %603 = vmatprep.subr.mxu0 0.0
        %604 = vmatpush1.msra.mxu0 0.0
        %605 = vmatprep.subr.mxu0 0.0
        %606 = vmatpush1.msra.mxu0 0.0
        %607 = vmatprep.subr.mxu0 0.0
        %608 = vmatpush1.msra.mxu0 0.0
        %609 = vmatprep.subr.mxu0 0.0
        %610 = vmatpush1.msra.mxu0 0.0
        %611 = vmatprep.subr.mxu0 0.0
        %612 = vmatpush1.msra.mxu0 0.0
        %613 = vmatprep.subr.mxu0 0.0
        %614 = vmatpush1.msra.mxu0 0.0
        %615 = vmatprep.subr.mxu0 0.0
        %616 = vmatpush1.msra.mxu0 0.0
        %617 = vmatprep.subr.mxu0 0.0
        %618 = vmatpush1.msra.mxu0 0.0
        %619 = vmatprep.subr.mxu0 0.0
        %620 = vmatpush1.msra.mxu0 0.0
        %621 = vmatprep.subr.mxu0 0.0
        %622 = vmatpush1.msra.mxu0 0.0
        %623 = vmatprep.mubr.f32.mxu0 0.0
        %624 = vmatmul.mubr.f32.gmra.mrb[0].mxu0 %v466
        %v625 = vpop.f32.mrb[0].mxu0
        %v626 = vadd.f32 %v557, %v625
        %v627 = vpop.f32.mrb[0].mxu0
        %628 = vmatprep.mubr.f32.mxu0 0.0
        %629 = vmatmul.mubr.f32.gmra.mrb[0].mxu0 %v469
        %v630 = vpop.f32.mrb[0].mxu0
        %v631 = vadd.f32 %v557, %v630
        %v632 = vpop.f32.mrb[0].mxu0
        %633 = vdwg.mxu0
        %s634 = scalar_lea.vmem %s362, 64 [#allocation7]
        %v635 = vld [vmem:[%s634] sm:$0xff]
        %v636 = vld [vmem:[%s634 + $0x8] sm:$0xff]
        %v637 = vld [vmem:[%s634 + $0x10] sm:$0xff]
        %v638 = vld [vmem:[%s634 + $0x18] sm:$0xff]
        %s639 = scalar_lea.vmem %s371, 2 [#allocation9]
        %v640 = vld [vmem:[%s639] sm:$0x1]
        %v642 = vlaneseq
        %v643 = vshrl.u32 %v642, 7
        %v644 = vsub.s32 0, %v643
        %v645 = vrot.slane %v640, %v644
        %647 = vmatprep.subr.mxu0 0.0
        %648 = vmatpush1.msra.mxu0 %v635
        %649 = vmatprep.subr.mxu0 0.0
        %650 = vmatpush1.msra.mxu0 %v636
        %651 = vmatprep.subr.mxu0 0.0
        %652 = vmatpush1.msra.mxu0 %v637
        %653 = vmatprep.subr.mxu0 0.0
        %654 = vmatpush1.msra.mxu0 %v638
        %655 = vmatprep.subr.mxu0 0.0
        %656 = vmatpush1.msra.mxu0 0.0
        %657 = vmatprep.subr.mxu0 0.0
        %658 = vmatpush1.msra.mxu0 0.0
        %659 = vmatprep.subr.mxu0 0.0
        %660 = vmatpush1.msra.mxu0 0.0
        %661 = vmatprep.subr.mxu0 0.0
        %662 = vmatpush1.msra.mxu0 0.0
        %663 = vmatprep.subr.mxu0 0.0
        %664 = vmatpush1.msra.mxu0 0.0
        %665 = vmatprep.subr.mxu0 0.0
        %666 = vmatpush1.msra.mxu0 0.0
        %667 = vmatprep.subr.mxu0 0.0
        %668 = vmatpush1.msra.mxu0 0.0
        %669 = vmatprep.subr.mxu0 0.0
        %670 = vmatpush1.msra.mxu0 0.0
        %671 = vmatprep.subr.mxu0 0.0
        %672 = vmatpush1.msra.mxu0 0.0
        %673 = vmatprep.subr.mxu0 0.0
        %674 = vmatpush1.msra.mxu0 0.0
        %675 = vmatprep.subr.mxu0 0.0
        %676 = vmatpush1.msra.mxu0 0.0
        %677 = vmatprep.subr.mxu0 0.0
        %678 = vmatpush1.msra.mxu0 0.0
        %679 = vmatprep.subr.mxu0 0.0
        %680 = vmatpush1.msra.mxu0 0.0
        %681 = vmatprep.subr.mxu0 0.0
        %682 = vmatpush1.msra.mxu0 0.0
        %683 = vmatprep.subr.mxu0 0.0
        %684 = vmatpush1.msra.mxu0 0.0
        %685 = vmatprep.subr.mxu0 0.0
        %686 = vmatpush1.msra.mxu0 0.0
        %687 = vmatprep.subr.mxu0 0.0
        %688 = vmatpush1.msra.mxu0 0.0
        %689 = vmatprep.subr.mxu0 0.0
        %690 = vmatpush1.msra.mxu0 0.0
        %691 = vmatprep.subr.mxu0 0.0
        %692 = vmatpush1.msra.mxu0 0.0
        %693 = vmatprep.subr.mxu0 0.0
        %694 = vmatpush1.msra.mxu0 0.0
        %695 = vmatprep.subr.mxu0 0.0
        %696 = vmatpush1.msra.mxu0 0.0
        %697 = vmatprep.subr.mxu0 0.0
        %698 = vmatpush1.msra.mxu0 0.0
        %699 = vmatprep.subr.mxu0 0.0
        %700 = vmatpush1.msra.mxu0 0.0
        %701 = vmatprep.subr.mxu0 0.0
        %702 = vmatpush1.msra.mxu0 0.0
        %703 = vmatprep.subr.mxu0 0.0
        %704 = vmatpush1.msra.mxu0 0.0
        %705 = vmatprep.subr.mxu0 0.0
        %706 = vmatpush1.msra.mxu0 0.0
        %707 = vmatprep.subr.mxu0 0.0
        %708 = vmatpush1.msra.mxu0 0.0
        %709 = vmatprep.subr.mxu0 0.0
        %710 = vmatpush1.msra.mxu0 0.0
        %711 = vmatprep.mubr.f32.mxu0 0.0
        %712 = vmatmul.mubr.f32.gmra.mrb[0].mxu0 %v466
        %v713 = vpop.f32.mrb[0].mxu0
        %v714 = vadd.f32 %v645, %v713
        %v715 = vpop.f32.mrb[0].mxu0
        %716 = vmatprep.mubr.f32.mxu0 0.0
        %717 = vmatmul.mubr.f32.gmra.mrb[0].mxu0 %v469
        %v718 = vpop.f32.mrb[0].mxu0
        %v719 = vadd.f32 %v645, %v718
        %v720 = vpop.f32.mrb[0].mxu0
        %721 = vdwg.mxu0
        %v722 = vld [vmem:[%s380] sm:$0xff]
        %v723 = vld [vmem:[%s380 + $0x8] sm:$0xff]
        %v724 = vld [vmem:[%s380 + $0x10] sm:$0xff]
        %v725 = vld [vmem:[%s380 + $0x18] sm:$0xff]
        %s726 = scalar_lea.vmem %s380, 32 [#allocation10]
        %v727 = vld [vmem:[%s726] sm:$0xff]
        %v728 = vld [vmem:[%s726 + $0x8] sm:$0xff]
        %v729 = vld [vmem:[%s726 + $0x10] sm:$0xff]
        %v730 = vld [vmem:[%s726 + $0x18] sm:$0xff]
        %s731 = scalar_lea.vmem %s380, 64 [#allocation10]
        %v732 = vld [vmem:[%s731] sm:$0xff]
        %v733 = vld [vmem:[%s731 + $0x8] sm:$0xff]
        %v734 = vld [vmem:[%s731 + $0x10] sm:$0xff]
        %v735 = vld [vmem:[%s731 + $0x18] sm:$0xff]
        %v736 = vld [vmem:[%s438] sm:$0x1]
        %v738 = vlaneseq
        %v739 = vshrl.u32 %v738, 7
        %v740 = vsub.s32 0, %v739
        %v741 = vrot.slane %v736, %v740
        %v744 = vsel %vm464, 0.0, 0
        %746 = vmatprep.subr.mxu0 0.0
        %747 = vmatpush1.msra.mxu0 %v722
        %748 = vmatprep.subr.mxu0 0.0
        %749 = vmatpush1.msra.mxu0 %v723
        %750 = vmatprep.subr.mxu0 0.0
        %751 = vmatpush1.msra.mxu0 %v724
        %752 = vmatprep.subr.mxu0 0.0
        %753 = vmatpush1.msra.mxu0 %v725
        %754 = vmatprep.subr.mxu0 0.0
        %755 = vmatpush1.msra.mxu0 0.0
        %756 = vmatprep.subr.mxu0 0.0
        %757 = vmatpush1.msra.mxu0 0.0
        %758 = vmatprep.subr.mxu0 0.0
        %759 = vmatpush1.msra.mxu0 0.0
        %760 = vmatprep.subr.mxu0 0.0
        %761 = vmatpush1.msra.mxu0 0.0
        %762 = vmatprep.subr.mxu0 0.0
        %763 = vmatpush1.msra.mxu0 0.0
        %764 = vmatprep.subr.mxu0 0.0
        %765 = vmatpush1.msra.mxu0 0.0
        %766 = vmatprep.subr.mxu0 0.0
        %767 = vmatpush1.msra.mxu0 0.0
        %768 = vmatprep.subr.mxu0 0.0
        %769 = vmatpush1.msra.mxu0 0.0
        %770 = vmatprep.subr.mxu0 0.0
        %771 = vmatpush1.msra.mxu0 0.0
        %772 = vmatprep.subr.mxu0 0.0
        %773 = vmatpush1.msra.mxu0 0.0
        %774 = vmatprep.subr.mxu0 0.0
        %775 = vmatpush1.msra.mxu0 0.0
        %776 = vmatprep.subr.mxu0 0.0
        %777 = vmatpush1.msra.mxu0 0.0
        %778 = vmatprep.subr.mxu0 0.0
        %779 = vmatpush1.msra.mxu0 0.0
        %780 = vmatprep.subr.mxu0 0.0
        %781 = vmatpush1.msra.mxu0 0.0
        %782 = vmatprep.subr.mxu0 0.0
        %783 = vmatpush1.msra.mxu0 0.0
        %784 = vmatprep.subr.mxu0 0.0
        %785 = vmatpush1.msra.mxu0 0.0
        %786 = vmatprep.subr.mxu0 0.0
        %787 = vmatpush1.msra.mxu0 0.0
        %788 = vmatprep.subr.mxu0 0.0
        %789 = vmatpush1.msra.mxu0 0.0
        %790 = vmatprep.subr.mxu0 0.0
        %791 = vmatpush1.msra.mxu0 0.0
        %792 = vmatprep.subr.mxu0 0.0
        %793 = vmatpush1.msra.mxu0 0.0
        %794 = vmatprep.subr.mxu0 0.0
        %795 = vmatpush1.msra.mxu0 0.0
        %796 = vmatprep.subr.mxu0 0.0
        %797 = vmatpush1.msra.mxu0 0.0
        %798 = vmatprep.subr.mxu0 0.0
        %799 = vmatpush1.msra.mxu0 0.0
        %800 = vmatprep.subr.mxu0 0.0
        %801 = vmatpush1.msra.mxu0 0.0
        %802 = vmatprep.subr.mxu0 0.0
        %803 = vmatpush1.msra.mxu0 0.0
        %804 = vmatprep.subr.mxu0 0.0
        %805 = vmatpush1.msra.mxu0 0.0
        %806 = vmatprep.subr.mxu0 0.0
        %807 = vmatpush1.msra.mxu0 0.0
        %808 = vmatprep.subr.mxu0 0.0
        %809 = vmatpush1.msra.mxu0 0.0
        %810 = vmatprep.mubr.f32.mxu0 0.0
        %811 = vmatmul.mubr.f32.gmra.mrb[0].mxu0 %v744
        %v812 = vpop.f32.mrb[0].mxu0
        %v813 = vadd.f32 0.0, %v812
        %v814 = vpop.f32.mrb[0].mxu0
        %815 = vdwg.mxu0
        %816 = vmatprep.subr.mxu0 0.0
        %817 = vmatpush1.msra.mxu0 %v727
        %818 = vmatprep.subr.mxu0 0.0
        %819 = vmatpush1.msra.mxu0 %v728
        %820 = vmatprep.subr.mxu0 0.0
        %821 = vmatpush1.msra.mxu0 %v729
        %822 = vmatprep.subr.mxu0 0.0
        %823 = vmatpush1.msra.mxu0 %v730
        %824 = vmatprep.subr.mxu0 0.0
        %825 = vmatpush1.msra.mxu0 0.0
        %826 = vmatprep.subr.mxu0 0.0
        %827 = vmatpush1.msra.mxu0 0.0
        %828 = vmatprep.subr.mxu0 0.0
        %829 = vmatpush1.msra.mxu0 0.0
        %830 = vmatprep.subr.mxu0 0.0
        %831 = vmatpush1.msra.mxu0 0.0
        %832 = vmatprep.subr.mxu0 0.0
        %833 = vmatpush1.msra.mxu0 0.0
        %834 = vmatprep.subr.mxu0 0.0
        %835 = vmatpush1.msra.mxu0 0.0
        %836 = vmatprep.subr.mxu0 0.0
        %837 = vmatpush1.msra.mxu0 0.0
        %838 = vmatprep.subr.mxu0 0.0
        %839 = vmatpush1.msra.mxu0 0.0
        %840 = vmatprep.subr.mxu0 0.0
        %841 = vmatpush1.msra.mxu0 0.0
        %842 = vmatprep.subr.mxu0 0.0
        %843 = vmatpush1.msra.mxu0 0.0
        %844 = vmatprep.subr.mxu0 0.0
        %845 = vmatpush1.msra.mxu0 0.0
        %846 = vmatprep.subr.mxu0 0.0
        %847 = vmatpush1.msra.mxu0 0.0
        %848 = vmatprep.subr.mxu0 0.0
        %849 = vmatpush1.msra.mxu0 0.0
        %850 = vmatprep.subr.mxu0 0.0
        %851 = vmatpush1.msra.mxu0 0.0
        %852 = vmatprep.subr.mxu0 0.0
        %853 = vmatpush1.msra.mxu0 0.0
        %854 = vmatprep.subr.mxu0 0.0
        %855 = vmatpush1.msra.mxu0 0.0
        %856 = vmatprep.subr.mxu0 0.0
        %857 = vmatpush1.msra.mxu0 0.0
        %858 = vmatprep.subr.mxu0 0.0
        %859 = vmatpush1.msra.mxu0 0.0
        %860 = vmatprep.subr.mxu0 0.0
        %861 = vmatpush1.msra.mxu0 0.0
        %862 = vmatprep.subr.mxu0 0.0
        %863 = vmatpush1.msra.mxu0 0.0
        %864 = vmatprep.subr.mxu0 0.0
        %865 = vmatpush1.msra.mxu0 0.0
        %866 = vmatprep.subr.mxu0 0.0
        %867 = vmatpush1.msra.mxu0 0.0
        %868 = vmatprep.subr.mxu0 0.0
        %869 = vmatpush1.msra.mxu0 0.0
        %870 = vmatprep.subr.mxu0 0.0
        %871 = vmatpush1.msra.mxu0 0.0
        %872 = vmatprep.subr.mxu0 0.0
        %873 = vmatpush1.msra.mxu0 0.0
        %874 = vmatprep.subr.mxu0 0.0
        %875 = vmatpush1.msra.mxu0 0.0
        %876 = vmatprep.subr.mxu0 0.0
        %877 = vmatpush1.msra.mxu0 0.0
        %878 = vmatprep.subr.mxu0 0.0
        %879 = vmatpush1.msra.mxu0 0.0
        %880 = vmatprep.mubr.f32.mxu0 0.0
        %881 = vmatmul.mubr.f32.gmra.mrb[0].mxu0 %v744
        %v882 = vpop.f32.mrb[0].mxu0
        %v883 = vadd.f32 0.0, %v882
        %v884 = vpop.f32.mrb[0].mxu0
        %885 = vdwg.mxu0
        %886 = vmatprep.subr.mxu0 0.0
        %887 = vmatpush1.msra.mxu0 %v732
        %888 = vmatprep.subr.mxu0 0.0
        %889 = vmatpush1.msra.mxu0 %v733
        %890 = vmatprep.subr.mxu0 0.0
        %891 = vmatpush1.msra.mxu0 %v734
        %892 = vmatprep.subr.mxu0 0.0
        %893 = vmatpush1.msra.mxu0 %v735
        %894 = vmatprep.subr.mxu0 0.0
        %895 = vmatpush1.msra.mxu0 0.0
        %896 = vmatprep.subr.mxu0 0.0
        %897 = vmatpush1.msra.mxu0 0.0
        %898 = vmatprep.subr.mxu0 0.0
        %899 = vmatpush1.msra.mxu0 0.0
        %900 = vmatprep.subr.mxu0 0.0
        %901 = vmatpush1.msra.mxu0 0.0
        %902 = vmatprep.subr.mxu0 0.0
        %903 = vmatpush1.msra.mxu0 0.0
        %904 = vmatprep.subr.mxu0 0.0
        %905 = vmatpush1.msra.mxu0 0.0
        %906 = vmatprep.subr.mxu0 0.0
        %907 = vmatpush1.msra.mxu0 0.0
        %908 = vmatprep.subr.mxu0 0.0
        %909 = vmatpush1.msra.mxu0 0.0
        %910 = vmatprep.subr.mxu0 0.0
        %911 = vmatpush1.msra.mxu0 0.0
        %912 = vmatprep.subr.mxu0 0.0
        %913 = vmatpush1.msra.mxu0 0.0
        %914 = vmatprep.subr.mxu0 0.0
        %915 = vmatpush1.msra.mxu0 0.0
        %916 = vmatprep.subr.mxu0 0.0
        %917 = vmatpush1.msra.mxu0 0.0
        %918 = vmatprep.subr.mxu0 0.0
        %919 = vmatpush1.msra.mxu0 0.0
        %920 = vmatprep.subr.mxu0 0.0
        %921 = vmatpush1.msra.mxu0 0.0
        %922 = vmatprep.subr.mxu0 0.0
        %923 = vmatpush1.msra.mxu0 0.0
        %924 = vmatprep.subr.mxu0 0.0
        %925 = vmatpush1.msra.mxu0 0.0
        %926 = vmatprep.subr.mxu0 0.0
        %927 = vmatpush1.msra.mxu0 0.0
        %928 = vmatprep.subr.mxu0 0.0
        %929 = vmatpush1.msra.mxu0 0.0
        %930 = vmatprep.subr.mxu0 0.0
        %931 = vmatpush1.msra.mxu0 0.0
        %932 = vmatprep.subr.mxu0 0.0
        %933 = vmatpush1.msra.mxu0 0.0
        %934 = vmatprep.subr.mxu0 0.0
        %935 = vmatpush1.msra.mxu0 0.0
        %936 = vmatprep.subr.mxu0 0.0
        %937 = vmatpush1.msra.mxu0 0.0
        %938 = vmatprep.subr.mxu0 0.0
        %939 = vmatpush1.msra.mxu0 0.0
        %940 = vmatprep.subr.mxu0 0.0
        %941 = vmatpush1.msra.mxu0 0.0
        %942 = vmatprep.subr.mxu0 0.0
        %943 = vmatpush1.msra.mxu0 0.0
        %944 = vmatprep.subr.mxu0 0.0
        %945 = vmatpush1.msra.mxu0 0.0
        %946 = vmatprep.subr.mxu0 0.0
        %947 = vmatpush1.msra.mxu0 0.0
        %948 = vmatprep.subr.mxu0 0.0
        %949 = vmatpush1.msra.mxu0 0.0
        %950 = vmatprep.mubr.f32.mxu0 0.0
        %951 = vmatmul.mubr.f32.gmra.mrb[0].mxu0 %v744
        %v952 = vpop.f32.mrb[0].mxu0
        %v953 = vadd.f32 %v741, %v952
        %v954 = vpop.f32.mrb[0].mxu0
        %955 = vdwg.mxu0
        %v956 = vadd.f32 %v538, %v813
        %v957 = vxor.u32 %v956, 2147483648
        %v958 = vmul.f32 %v957, 1.442695
        %v959 = vpow.pop %v958
        %v960 = vadd.f32 %v959, 1.0
        %v961 = vrcp.pop %v960
        %v962 = vmul.f32 1.0, %v961
        %v963 = vadd.f32 %v626, %v883
        %v964 = vxor.u32 %v963, 2147483648
        %v965 = vmul.f32 %v964, 1.442695
        %v966 = vpow.pop %v965
        %v967 = vadd.f32 %v966, 1.0
        %v968 = vrcp.pop %v967
        %v969 = vmul.f32 1.0, %v968
        %v970 = vmul.f32 %v962, %v953
        %v971 = vadd.f32 %v714, %v970
        %v972 = vtanh.pop %v971
        %v973 = vsub.f32 0.0, %v972
        %v974 = vmul.f32 %v969, %v973
        %v975 = vadd.f32 %v972, %v974
        %vm976 = vcmask 254976
        %977 = vst.msk [vmem:[#allocation3] sm:$0x3] %vm976, %v975
        %v979 = vsel %vm464, %v975, 0
        %981 = vmatprep.subr.mxu0 0.0
        %982 = vmatpush1.msra.mxu0 %v722
        %983 = vmatprep.subr.mxu0 0.0
        %984 = vmatpush1.msra.mxu0 %v723
        %985 = vmatprep.subr.mxu0 0.0
        %986 = vmatpush1.msra.mxu0 %v724
        %987 = vmatprep.subr.mxu0 0.0
        %988 = vmatpush1.msra.mxu0 %v725
        %989 = vmatprep.subr.mxu0 0.0
        %990 = vmatpush1.msra.mxu0 0.0
        %991 = vmatprep.subr.mxu0 0.0
        %992 = vmatpush1.msra.mxu0 0.0
        %993 = vmatprep.subr.mxu0 0.0
        %994 = vmatpush1.msra.mxu0 0.0
        %995 = vmatprep.subr.mxu0 0.0
        %996 = vmatpush1.msra.mxu0 0.0
        %997 = vmatprep.subr.mxu0 0.0
        %998 = vmatpush1.msra.mxu0 0.0
        %999 = vmatprep.subr.mxu0 0.0
        %1000 = vmatpush1.msra.mxu0 0.0
        %1001 = vmatprep.subr.mxu0 0.0
        %1002 = vmatpush1.msra.mxu0 0.0
        %1003 = vmatprep.subr.mxu0 0.0
        %1004 = vmatpush1.msra.mxu0 0.0
        %1005 = vmatprep.subr.mxu0 0.0
        %1006 = vmatpush1.msra.mxu0 0.0
        %1007 = vmatprep.subr.mxu0 0.0
        %1008 = vmatpush1.msra.mxu0 0.0
        %1009 = vmatprep.subr.mxu0 0.0
        %1010 = vmatpush1.msra.mxu0 0.0
        %1011 = vmatprep.subr.mxu0 0.0
        %1012 = vmatpush1.msra.mxu0 0.0
        %1013 = vmatprep.subr.mxu0 0.0
        %1014 = vmatpush1.msra.mxu0 0.0
        %1015 = vmatprep.subr.mxu0 0.0
        %1016 = vmatpush1.msra.mxu0 0.0
        %1017 = vmatprep.subr.mxu0 0.0
        %1018 = vmatpush1.msra.mxu0 0.0
        %1019 = vmatprep.subr.mxu0 0.0
        %1020 = vmatpush1.msra.mxu0 0.0
        %1021 = vmatprep.subr.mxu0 0.0
        %1022 = vmatpush1.msra.mxu0 0.0
        %1023 = vmatprep.subr.mxu0 0.0
        %1024 = vmatpush1.msra.mxu0 0.0
        %1025 = vmatprep.subr.mxu0 0.0
        %1026 = vmatpush1.msra.mxu0 0.0
        %1027 = vmatprep.subr.mxu0 0.0
        %1028 = vmatpush1.msra.mxu0 0.0
        %1029 = vmatprep.subr.mxu0 0.0
        %1030 = vmatpush1.msra.mxu0 0.0
        %1031 = vmatprep.subr.mxu0 0.0
        %1032 = vmatpush1.msra.mxu0 0.0
        %1033 = vmatprep.subr.mxu0 0.0
        %1034 = vmatpush1.msra.mxu0 0.0
        %1035 = vmatprep.subr.mxu0 0.0
        %1036 = vmatpush1.msra.mxu0 0.0
        %1037 = vmatprep.subr.mxu0 0.0
        %1038 = vmatpush1.msra.mxu0 0.0
        %1039 = vmatprep.subr.mxu0 0.0
        %1040 = vmatpush1.msra.mxu0 0.0
        %1041 = vmatprep.subr.mxu0 0.0
        %1042 = vmatpush1.msra.mxu0 0.0
        %1043 = vmatprep.subr.mxu0 0.0
        %1044 = vmatpush1.msra.mxu0 0.0
        %1045 = vmatprep.mubr.f32.mxu0 0.0
        %1046 = vmatmul.mubr.f32.gmra.mrb[0].mxu0 %v979
        %v1047 = vpop.f32.mrb[0].mxu0
        %v1048 = vadd.f32 0.0, %v1047
        %v1049 = vpop.f32.mrb[0].mxu0
        %1050 = vdwg.mxu0
        %1051 = vmatprep.subr.mxu0 0.0
        %1052 = vmatpush1.msra.mxu0 %v727
        %1053 = vmatprep.subr.mxu0 0.0
        %1054 = vmatpush1.msra.mxu0 %v728
        %1055 = vmatprep.subr.mxu0 0.0
        %1056 = vmatpush1.msra.mxu0 %v729
        %1057 = vmatprep.subr.mxu0 0.0
        %1058 = vmatpush1.msra.mxu0 %v730
        %1059 = vmatprep.subr.mxu0 0.0
        %1060 = vmatpush1.msra.mxu0 0.0
        %1061 = vmatprep.subr.mxu0 0.0
        %1062 = vmatpush1.msra.mxu0 0.0
        %1063 = vmatprep.subr.mxu0 0.0
        %1064 = vmatpush1.msra.mxu0 0.0
        %1065 = vmatprep.subr.mxu0 0.0
        %1066 = vmatpush1.msra.mxu0 0.0
        %1067 = vmatprep.subr.mxu0 0.0
        %1068 = vmatpush1.msra.mxu0 0.0
        %1069 = vmatprep.subr.mxu0 0.0
        %1070 = vmatpush1.msra.mxu0 0.0
        %1071 = vmatprep.subr.mxu0 0.0
        %1072 = vmatpush1.msra.mxu0 0.0
        %1073 = vmatprep.subr.mxu0 0.0
        %1074 = vmatpush1.msra.mxu0 0.0
        %1075 = vmatprep.subr.mxu0 0.0
        %1076 = vmatpush1.msra.mxu0 0.0
        %1077 = vmatprep.subr.mxu0 0.0
        %1078 = vmatpush1.msra.mxu0 0.0
        %1079 = vmatprep.subr.mxu0 0.0
        %1080 = vmatpush1.msra.mxu0 0.0
        %1081 = vmatprep.subr.mxu0 0.0
        %1082 = vmatpush1.msra.mxu0 0.0
        %1083 = vmatprep.subr.mxu0 0.0
        %1084 = vmatpush1.msra.mxu0 0.0
        %1085 = vmatprep.subr.mxu0 0.0
        %1086 = vmatpush1.msra.mxu0 0.0
        %1087 = vmatprep.subr.mxu0 0.0
        %1088 = vmatpush1.msra.mxu0 0.0
        %1089 = vmatprep.subr.mxu0 0.0
        %1090 = vmatpush1.msra.mxu0 0.0
        %1091 = vmatprep.subr.mxu0 0.0
        %1092 = vmatpush1.msra.mxu0 0.0
        %1093 = vmatprep.subr.mxu0 0.0
        %1094 = vmatpush1.msra.mxu0 0.0
        %1095 = vmatprep.subr.mxu0 0.0
        %1096 = vmatpush1.msra.mxu0 0.0
        %1097 = vmatprep.subr.mxu0 0.0
        %1098 = vmatpush1.msra.mxu0 0.0
        %1099 = vmatprep.subr.mxu0 0.0
        %1100 = vmatpush1.msra.mxu0 0.0
        %1101 = vmatprep.subr.mxu0 0.0
        %1102 = vmatpush1.msra.mxu0 0.0
        %1103 = vmatprep.subr.mxu0 0.0
        %1104 = vmatpush1.msra.mxu0 0.0
        %1105 = vmatprep.subr.mxu0 0.0
        %1106 = vmatpush1.msra.mxu0 0.0
        %1107 = vmatprep.subr.mxu0 0.0
        %1108 = vmatpush1.msra.mxu0 0.0
        %1109 = vmatprep.subr.mxu0 0.0
        %1110 = vmatpush1.msra.mxu0 0.0
        %1111 = vmatprep.subr.mxu0 0.0
        %1112 = vmatpush1.msra.mxu0 0.0
        %1113 = vmatprep.subr.mxu0 0.0
        %1114 = vmatpush1.msra.mxu0 0.0
        %1115 = vmatprep.mubr.f32.mxu0 0.0
        %1116 = vmatmul.mubr.f32.gmra.mrb[0].mxu0 %v979
        %v1117 = vpop.f32.mrb[0].mxu0
        %v1118 = vadd.f32 0.0, %v1117
        %v1119 = vpop.f32.mrb[0].mxu0
        %1120 = vdwg.mxu0
        %1121 = vmatprep.subr.mxu0 0.0
        %1122 = vmatpush1.msra.mxu0 %v732
        %1123 = vmatprep.subr.mxu0 0.0
        %1124 = vmatpush1.msra.mxu0 %v733
        %1125 = vmatprep.subr.mxu0 0.0
        %1126 = vmatpush1.msra.mxu0 %v734
        %1127 = vmatprep.subr.mxu0 0.0
        %1128 = vmatpush1.msra.mxu0 %v735
        %1129 = vmatprep.subr.mxu0 0.0
        %1130 = vmatpush1.msra.mxu0 0.0
        %1131 = vmatprep.subr.mxu0 0.0
        %1132 = vmatpush1.msra.mxu0 0.0
        %1133 = vmatprep.subr.mxu0 0.0
        %1134 = vmatpush1.msra.mxu0 0.0
        %1135 = vmatprep.subr.mxu0 0.0
        %1136 = vmatpush1.msra.mxu0 0.0
        %1137 = vmatprep.subr.mxu0 0.0
        %1138 = vmatpush1.msra.mxu0 0.0
        %1139 = vmatprep.subr.mxu0 0.0
        %1140 = vmatpush1.msra.mxu0 0.0
        %1141 = vmatprep.subr.mxu0 0.0
        %1142 = vmatpush1.msra.mxu0 0.0
        %1143 = vmatprep.subr.mxu0 0.0
        %1144 = vmatpush1.msra.mxu0 0.0
        %1145 = vmatprep.subr.mxu0 0.0
        %1146 = vmatpush1.msra.mxu0 0.0
        %1147 = vmatprep.subr.mxu0 0.0
        %1148 = vmatpush1.msra.mxu0 0.0
        %1149 = vmatprep.subr.mxu0 0.0
        %1150 = vmatpush1.msra.mxu0 0.0
        %1151 = vmatprep.subr.mxu0 0.0
        %1152 = vmatpush1.msra.mxu0 0.0
        %1153 = vmatprep.subr.mxu0 0.0
        %1154 = vmatpush1.msra.mxu0 0.0
        %1155 = vmatprep.subr.mxu0 0.0
        %1156 = vmatpush1.msra.mxu0 0.0
        %1157 = vmatprep.subr.mxu0 0.0
        %1158 = vmatpush1.msra.mxu0 0.0
        %1159 = vmatprep.subr.mxu0 0.0
        %1160 = vmatpush1.msra.mxu0 0.0
        %1161 = vmatprep.subr.mxu0 0.0
        %1162 = vmatpush1.msra.mxu0 0.0
        %1163 = vmatprep.subr.mxu0 0.0
        %1164 = vmatpush1.msra.mxu0 0.0
        %1165 = vmatprep.subr.mxu0 0.0
        %1166 = vmatpush1.msra.mxu0 0.0
        %1167 = vmatprep.subr.mxu0 0.0
        %1168 = vmatpush1.msra.mxu0 0.0
        %1169 = vmatprep.subr.mxu0 0.0
        %1170 = vmatpush1.msra.mxu0 0.0
        %1171 = vmatprep.subr.mxu0 0.0
        %1172 = vmatpush1.msra.mxu0 0.0
        %1173 = vmatprep.subr.mxu0 0.0
        %1174 = vmatpush1.msra.mxu0 0.0
        %1175 = vmatprep.subr.mxu0 0.0
        %1176 = vmatpush1.msra.mxu0 0.0
        %1177 = vmatprep.subr.mxu0 0.0
        %1178 = vmatpush1.msra.mxu0 0.0
        %1179 = vmatprep.subr.mxu0 0.0
        %1180 = vmatpush1.msra.mxu0 0.0
        %1181 = vmatprep.subr.mxu0 0.0
        %1182 = vmatpush1.msra.mxu0 0.0
        %1183 = vmatprep.subr.mxu0 0.0
        %1184 = vmatpush1.msra.mxu0 0.0
        %1185 = vmatprep.mubr.f32.mxu0 0.0
        %1186 = vmatmul.mubr.f32.gmra.mrb[0].mxu0 %v979
        %v1187 = vpop.f32.mrb[0].mxu0
        %v1188 = vadd.f32 %v741, %v1187
        %v1189 = vpop.f32.mrb[0].mxu0
        %1190 = vdwg.mxu0
        %v1192 = vrot.slane %v1048, 6
        %v1194 = vadd.f32 %v538, %v1192
        %v1195 = vxor.u32 %v1194, 2147483648
        %v1196 = vmul.f32 %v1195, 1.442695
        %v1197 = vpow.pop %v1196
        %v1198 = vadd.f32 %v1197, 1.0
        %v1199 = vrcp.pop %v1198
        %v1200 = vmul.f32 1.0, %v1199
        %v1202 = vrot.slane %v1118, 6
        %v1204 = vadd.f32 %v626, %v1202
        %v1205 = vxor.u32 %v1204, 2147483648
        %v1206 = vmul.f32 %v1205, 1.442695
        %v1207 = vpow.pop %v1206
        %v1208 = vadd.f32 %v1207, 1.0
        %v1209 = vrcp.pop %v1208
        %v1210 = vmul.f32 1.0, %v1209
        %v1212 = vrot.slane %v1188, 6
        %v1214 = vmul.f32 %v1200, %v1212
        %v1215 = vadd.f32 %v714, %v1214
        %v1216 = vtanh.pop %v1215
        %v1218 = vrot.slane %v1216, 2
        %v1220 = vsub.f32 %v975, %v1218
        %v1222 = vrot.slane %v1220, 6
        %v1224 = vmul.f32 %v1210, %v1222
        %v1225 = vadd.f32 %v1216, %v1224
        %vm1226 = vcmask 257026
        %1227 = vst.msk [vmem:[#allocation3] sm:$0xc] %vm1226, %v1225
        %v1229 = vrot.slane %v1225, 2
        %v1230 = vsel %vm464, %v1229, 0
        %1232 = vmatprep.subr.mxu0 0.0
        %1233 = vmatpush1.msra.mxu0 %v722
        %1234 = vmatprep.subr.mxu0 0.0
        %1235 = vmatpush1.msra.mxu0 %v723
        %1236 = vmatprep.subr.mxu0 0.0
        %1237 = vmatpush1.msra.mxu0 %v724
        %1238 = vmatprep.subr.mxu0 0.0
        %1239 = vmatpush1.msra.mxu0 %v725
        %1240 = vmatprep.subr.mxu0 0.0
        %1241 = vmatpush1.msra.mxu0 0.0
        %1242 = vmatprep.subr.mxu0 0.0
        %1243 = vmatpush1.msra.mxu0 0.0
        %1244 = vmatprep.subr.mxu0 0.0
        %1245 = vmatpush1.msra.mxu0 0.0
        %1246 = vmatprep.subr.mxu0 0.0
        %1247 = vmatpush1.msra.mxu0 0.0
        %1248 = vmatprep.subr.mxu0 0.0
        %1249 = vmatpush1.msra.mxu0 0.0
        %1250 = vmatprep.subr.mxu0 0.0
        %1251 = vmatpush1.msra.mxu0 0.0
        %1252 = vmatprep.subr.mxu0 0.0
        %1253 = vmatpush1.msra.mxu0 0.0
        %1254 = vmatprep.subr.mxu0 0.0
        %1255 = vmatpush1.msra.mxu0 0.0
        %1256 = vmatprep.subr.mxu0 0.0
        %1257 = vmatpush1.msra.mxu0 0.0
        %1258 = vmatprep.subr.mxu0 0.0
        %1259 = vmatpush1.msra.mxu0 0.0
        %1260 = vmatprep.subr.mxu0 0.0
        %1261 = vmatpush1.msra.mxu0 0.0
        %1262 = vmatprep.subr.mxu0 0.0
        %1263 = vmatpush1.msra.mxu0 0.0
        %1264 = vmatprep.subr.mxu0 0.0
        %1265 = vmatpush1.msra.mxu0 0.0
        %1266 = vmatprep.subr.mxu0 0.0
        %1267 = vmatpush1.msra.mxu0 0.0
        %1268 = vmatprep.subr.mxu0 0.0
        %1269 = vmatpush1.msra.mxu0 0.0
        %1270 = vmatprep.subr.mxu0 0.0
        %1271 = vmatpush1.msra.mxu0 0.0
        %1272 = vmatprep.subr.mxu0 0.0
        %1273 = vmatpush1.msra.mxu0 0.0
        %1274 = vmatprep.subr.mxu0 0.0
        %1275 = vmatpush1.msra.mxu0 0.0
        %1276 = vmatprep.subr.mxu0 0.0
        %1277 = vmatpush1.msra.mxu0 0.0
        %1278 = vmatprep.subr.mxu0 0.0
        %1279 = vmatpush1.msra.mxu0 0.0
        %1280 = vmatprep.subr.mxu0 0.0
        %1281 = vmatpush1.msra.mxu0 0.0
        %1282 = vmatprep.subr.mxu0 0.0
        %1283 = vmatpush1.msra.mxu0 0.0
        %1284 = vmatprep.subr.mxu0 0.0
        %1285 = vmatpush1.msra.mxu0 0.0
        %1286 = vmatprep.subr.mxu0 0.0
        %1287 = vmatpush1.msra.mxu0 0.0
        %1288 = vmatprep.subr.mxu0 0.0
        %1289 = vmatpush1.msra.mxu0 0.0
        %1290 = vmatprep.subr.mxu0 0.0
        %1291 = vmatpush1.msra.mxu0 0.0
        %1292 = vmatprep.subr.mxu0 0.0
        %1293 = vmatpush1.msra.mxu0 0.0
        %1294 = vmatprep.subr.mxu0 0.0
        %1295 = vmatpush1.msra.mxu0 0.0
        %1296 = vmatprep.mubr.f32.mxu0 0.0
        %1297 = vmatmul.mubr.f32.gmra.mrb[0].mxu0 %v1230
        %v1298 = vpop.f32.mrb[0].mxu0
        %v1299 = vadd.f32 0.0, %v1298
        %v1300 = vpop.f32.mrb[0].mxu0
        %1301 = vdwg.mxu0
        %1302 = vmatprep.subr.mxu0 0.0
        %1303 = vmatpush1.msra.mxu0 %v727
        %1304 = vmatprep.subr.mxu0 0.0
        %1305 = vmatpush1.msra.mxu0 %v728
        %1306 = vmatprep.subr.mxu0 0.0
        %1307 = vmatpush1.msra.mxu0 %v729
        %1308 = vmatprep.subr.mxu0 0.0
        %1309 = vmatpush1.msra.mxu0 %v730
        %1310 = vmatprep.subr.mxu0 0.0
        %1311 = vmatpush1.msra.mxu0 0.0
        %1312 = vmatprep.subr.mxu0 0.0
        %1313 = vmatpush1.msra.mxu0 0.0
        %1314 = vmatprep.subr.mxu0 0.0
        %1315 = vmatpush1.msra.mxu0 0.0
        %1316 = vmatprep.subr.mxu0 0.0
        %1317 = vmatpush1.msra.mxu0 0.0
        %1318 = vmatprep.subr.mxu0 0.0
        %1319 = vmatpush1.msra.mxu0 0.0
        %1320 = vmatprep.subr.mxu0 0.0
        %1321 = vmatpush1.msra.mxu0 0.0
        %1322 = vmatprep.subr.mxu0 0.0
        %1323 = vmatpush1.msra.mxu0 0.0
        %1324 = vmatprep.subr.mxu0 0.0
        %1325 = vmatpush1.msra.mxu0 0.0
        %1326 = vmatprep.subr.mxu0 0.0
        %1327 = vmatpush1.msra.mxu0 0.0
        %1328 = vmatprep.subr.mxu0 0.0
        %1329 = vmatpush1.msra.mxu0 0.0
        %1330 = vmatprep.subr.mxu0 0.0
        %1331 = vmatpush1.msra.mxu0 0.0
        %1332 = vmatprep.subr.mxu0 0.0
        %1333 = vmatpush1.msra.mxu0 0.0
        %1334 = vmatprep.subr.mxu0 0.0
        %1335 = vmatpush1.msra.mxu0 0.0
        %1336 = vmatprep.subr.mxu0 0.0
        %1337 = vmatpush1.msra.mxu0 0.0
        %1338 = vmatprep.subr.mxu0 0.0
        %1339 = vmatpush1.msra.mxu0 0.0
        %1340 = vmatprep.subr.mxu0 0.0
        %1341 = vmatpush1.msra.mxu0 0.0
        %1342 = vmatprep.subr.mxu0 0.0
        %1343 = vmatpush1.msra.mxu0 0.0
        %1344 = vmatprep.subr.mxu0 0.0
        %1345 = vmatpush1.msra.mxu0 0.0
        %1346 = vmatprep.subr.mxu0 0.0
        %1347 = vmatpush1.msra.mxu0 0.0
        %1348 = vmatprep.subr.mxu0 0.0
        %1349 = vmatpush1.msra.mxu0 0.0
        %1350 = vmatprep.subr.mxu0 0.0
        %1351 = vmatpush1.msra.mxu0 0.0
        %1352 = vmatprep.subr.mxu0 0.0
        %1353 = vmatpush1.msra.mxu0 0.0
        %1354 = vmatprep.subr.mxu0 0.0
        %1355 = vmatpush1.msra.mxu0 0.0
        %1356 = vmatprep.subr.mxu0 0.0
        %1357 = vmatpush1.msra.mxu0 0.0
        %1358 = vmatprep.subr.mxu0 0.0
        %1359 = vmatpush1.msra.mxu0 0.0
        %1360 = vmatprep.subr.mxu0 0.0
        %1361 = vmatpush1.msra.mxu0 0.0
        %1362 = vmatprep.subr.mxu0 0.0
        %1363 = vmatpush1.msra.mxu0 0.0
        %1364 = vmatprep.subr.mxu0 0.0
        %1365 = vmatpush1.msra.mxu0 0.0
        %1366 = vmatprep.mubr.f32.mxu0 0.0
        %1367 = vmatmul.mubr.f32.gmra.mrb[0].mxu0 %v1230
        %v1368 = vpop.f32.mrb[0].mxu0
        %v1369 = vadd.f32 0.0, %v1368
        %v1370 = vpop.f32.mrb[0].mxu0
        %1371 = vdwg.mxu0
        %1372 = vmatprep.subr.mxu0 0.0
        %1373 = vmatpush1.msra.mxu0 %v732
        %1374 = vmatprep.subr.mxu0 0.0
        %1375 = vmatpush1.msra.mxu0 %v733
        %1376 = vmatprep.subr.mxu0 0.0
        %1377 = vmatpush1.msra.mxu0 %v734
        %1378 = vmatprep.subr.mxu0 0.0
        %1379 = vmatpush1.msra.mxu0 %v735
        %1380 = vmatprep.subr.mxu0 0.0
        %1381 = vmatpush1.msra.mxu0 0.0
        %1382 = vmatprep.subr.mxu0 0.0
        %1383 = vmatpush1.msra.mxu0 0.0
        %1384 = vmatprep.subr.mxu0 0.0
        %1385 = vmatpush1.msra.mxu0 0.0
        %1386 = vmatprep.subr.mxu0 0.0
        %1387 = vmatpush1.msra.mxu0 0.0
        %1388 = vmatprep.subr.mxu0 0.0
        %1389 = vmatpush1.msra.mxu0 0.0
        %1390 = vmatprep.subr.mxu0 0.0
        %1391 = vmatpush1.msra.mxu0 0.0
        %1392 = vmatprep.subr.mxu0 0.0
        %1393 = vmatpush1.msra.mxu0 0.0
        %1394 = vmatprep.subr.mxu0 0.0
        %1395 = vmatpush1.msra.mxu0 0.0
        %1396 = vmatprep.subr.mxu0 0.0
        %1397 = vmatpush1.msra.mxu0 0.0
        %1398 = vmatprep.subr.mxu0 0.0
        %1399 = vmatpush1.msra.mxu0 0.0
        %1400 = vmatprep.subr.mxu0 0.0
        %1401 = vmatpush1.msra.mxu0 0.0
        %1402 = vmatprep.subr.mxu0 0.0
        %1403 = vmatpush1.msra.mxu0 0.0
        %1404 = vmatprep.subr.mxu0 0.0
        %1405 = vmatpush1.msra.mxu0 0.0
        %1406 = vmatprep.subr.mxu0 0.0
        %1407 = vmatpush1.msra.mxu0 0.0
        %1408 = vmatprep.subr.mxu0 0.0
        %1409 = vmatpush1.msra.mxu0 0.0
        %1410 = vmatprep.subr.mxu0 0.0
        %1411 = vmatpush1.msra.mxu0 0.0
        %1412 = vmatprep.subr.mxu0 0.0
        %1413 = vmatpush1.msra.mxu0 0.0
        %1414 = vmatprep.subr.mxu0 0.0
        %1415 = vmatpush1.msra.mxu0 0.0
        %1416 = vmatprep.subr.mxu0 0.0
        %1417 = vmatpush1.msra.mxu0 0.0
        %1418 = vmatprep.subr.mxu0 0.0
        %1419 = vmatpush1.msra.mxu0 0.0
        %1420 = vmatprep.subr.mxu0 0.0
        %1421 = vmatpush1.msra.mxu0 0.0
        %1422 = vmatprep.subr.mxu0 0.0
        %1423 = vmatpush1.msra.mxu0 0.0
        %1424 = vmatprep.subr.mxu0 0.0
        %1425 = vmatpush1.msra.mxu0 0.0
        %1426 = vmatprep.subr.mxu0 0.0
        %1427 = vmatpush1.msra.mxu0 0.0
        %1428 = vmatprep.subr.mxu0 0.0
        %1429 = vmatpush1.msra.mxu0 0.0
        %1430 = vmatprep.subr.mxu0 0.0
        %1431 = vmatpush1.msra.mxu0 0.0
        %1432 = vmatprep.subr.mxu0 0.0
        %1433 = vmatpush1.msra.mxu0 0.0
        %1434 = vmatprep.subr.mxu0 0.0
        %1435 = vmatpush1.msra.mxu0 0.0
        %1436 = vmatprep.mubr.f32.mxu0 0.0
        %1437 = vmatmul.mubr.f32.gmra.mrb[0].mxu0 %v1230
        %v1438 = vpop.f32.mrb[0].mxu0
        %v1439 = vadd.f32 %v741, %v1438
        %v1440 = vpop.f32.mrb[0].mxu0
        %1441 = vdwg.mxu0
        %v1443 = vrot.slane %v1299, 4
        %v1445 = vadd.f32 %v538, %v1443
        %v1446 = vxor.u32 %v1445, 2147483648
        %v1447 = vmul.f32 %v1446, 1.442695
        %v1448 = vpow.pop %v1447
        %v1449 = vadd.f32 %v1448, 1.0
        %v1450 = vrcp.pop %v1449
        %v1451 = vmul.f32 1.0, %v1450
        %v1453 = vrot.slane %v1369, 4
        %v1455 = vadd.f32 %v626, %v1453
        %v1456 = vxor.u32 %v1455, 2147483648
        %v1457 = vmul.f32 %v1456, 1.442695
        %v1458 = vpow.pop %v1457
        %v1459 = vadd.f32 %v1458, 1.0
        %v1460 = vrcp.pop %v1459
        %v1461 = vmul.f32 1.0, %v1460
        %v1463 = vrot.slane %v1439, 4
        %v1465 = vmul.f32 %v1451, %v1463
        %v1466 = vadd.f32 %v714, %v1465
        %v1467 = vtanh.pop %v1466
        %v1469 = vrot.slane %v1467, 2
        %v1471 = vsub.f32 %v1225, %v1469
        %v1473 = vrot.slane %v1471, 6
        %v1475 = vmul.f32 %v1461, %v1473
        %v1476 = vadd.f32 %v1467, %v1475
        %vm1477 = vcmask 259076
        %1478 = vst.msk [vmem:[#allocation3] sm:$0x30] %vm1477, %v1476
        %v1480 = vrot.slane %v1476, 4
        %v1481 = vsel %vm464, %v1480, 0
        %1483 = vmatprep.subr.mxu0 0.0
        %1484 = vmatpush1.msra.mxu0 %v722
        %1485 = vmatprep.subr.mxu0 0.0
        %1486 = vmatpush1.msra.mxu0 %v723
        %1487 = vmatprep.subr.mxu0 0.0
        %1488 = vmatpush1.msra.mxu0 %v724
        %1489 = vmatprep.subr.mxu0 0.0
        %1490 = vmatpush1.msra.mxu0 %v725
        %1491 = vmatprep.subr.mxu0 0.0
        %1492 = vmatpush1.msra.mxu0 0.0
        %1493 = vmatprep.subr.mxu0 0.0
        %1494 = vmatpush1.msra.mxu0 0.0
        %1495 = vmatprep.subr.mxu0 0.0
        %1496 = vmatpush1.msra.mxu0 0.0
        %1497 = vmatprep.subr.mxu0 0.0
        %1498 = vmatpush1.msra.mxu0 0.0
        %1499 = vmatprep.subr.mxu0 0.0
        %1500 = vmatpush1.msra.mxu0 0.0
        %1501 = vmatprep.subr.mxu0 0.0
        %1502 = vmatpush1.msra.mxu0 0.0
        %1503 = vmatprep.subr.mxu0 0.0
        %1504 = vmatpush1.msra.mxu0 0.0
        %1505 = vmatprep.subr.mxu0 0.0
        %1506 = vmatpush1.msra.mxu0 0.0
        %1507 = vmatprep.subr.mxu0 0.0
        %1508 = vmatpush1.msra.mxu0 0.0
        %1509 = vmatprep.subr.mxu0 0.0
        %1510 = vmatpush1.msra.mxu0 0.0
        %1511 = vmatprep.subr.mxu0 0.0
        %1512 = vmatpush1.msra.mxu0 0.0
        %1513 = vmatprep.subr.mxu0 0.0
        %1514 = vmatpush1.msra.mxu0 0.0
        %1515 = vmatprep.subr.mxu0 0.0
        %1516 = vmatpush1.msra.mxu0 0.0
        %1517 = vmatprep.subr.mxu0 0.0
        %1518 = vmatpush1.msra.mxu0 0.0
        %1519 = vmatprep.subr.mxu0 0.0
        %1520 = vmatpush1.msra.mxu0 0.0
        %1521 = vmatprep.subr.mxu0 0.0
        %1522 = vmatpush1.msra.mxu0 0.0
        %1523 = vmatprep.subr.mxu0 0.0
        %1524 = vmatpush1.msra.mxu0 0.0
        %1525 = vmatprep.subr.mxu0 0.0
        %1526 = vmatpush1.msra.mxu0 0.0
        %1527 = vmatprep.subr.mxu0 0.0
        %1528 = vmatpush1.msra.mxu0 0.0
        %1529 = vmatprep.subr.mxu0 0.0
        %1530 = vmatpush1.msra.mxu0 0.0
        %1531 = vmatprep.subr.mxu0 0.0
        %1532 = vmatpush1.msra.mxu0 0.0
        %1533 = vmatprep.subr.mxu0 0.0
        %1534 = vmatpush1.msra.mxu0 0.0
        %1535 = vmatprep.subr.mxu0 0.0
        %1536 = vmatpush1.msra.mxu0 0.0
        %1537 = vmatprep.subr.mxu0 0.0
        %1538 = vmatpush1.msra.mxu0 0.0
        %1539 = vmatprep.subr.mxu0 0.0
        %1540 = vmatpush1.msra.mxu0 0.0
        %1541 = vmatprep.subr.mxu0 0.0
        %1542 = vmatpush1.msra.mxu0 0.0
        %1543 = vmatprep.subr.mxu0 0.0
        %1544 = vmatpush1.msra.mxu0 0.0
        %1545 = vmatprep.subr.mxu0 0.0
        %1546 = vmatpush1.msra.mxu0 0.0
        %1547 = vmatprep.mubr.f32.mxu0 0.0
        %1548 = vmatmul.mubr.f32.gmra.mrb[0].mxu0 %v1481
        %v1549 = vpop.f32.mrb[0].mxu0
        %v1550 = vadd.f32 0.0, %v1549
        %v1551 = vpop.f32.mrb[0].mxu0
        %1552 = vdwg.mxu0
        %1553 = vmatprep.subr.mxu0 0.0
        %1554 = vmatpush1.msra.mxu0 %v727
        %1555 = vmatprep.subr.mxu0 0.0
        %1556 = vmatpush1.msra.mxu0 %v728
        %1557 = vmatprep.subr.mxu0 0.0
        %1558 = vmatpush1.msra.mxu0 %v729
        %1559 = vmatprep.subr.mxu0 0.0
        %1560 = vmatpush1.msra.mxu0 %v730
        %1561 = vmatprep.subr.mxu0 0.0
        %1562 = vmatpush1.msra.mxu0 0.0
        %1563 = vmatprep.subr.mxu0 0.0
        %1564 = vmatpush1.msra.mxu0 0.0
        %1565 = vmatprep.subr.mxu0 0.0
        %1566 = vmatpush1.msra.mxu0 0.0
        %1567 = vmatprep.subr.mxu0 0.0
        %1568 = vmatpush1.msra.mxu0 0.0
        %1569 = vmatprep.subr.mxu0 0.0
        %1570 = vmatpush1.msra.mxu0 0.0
        %1571 = vmatprep.subr.mxu0 0.0
        %1572 = vmatpush1.msra.mxu0 0.0
        %1573 = vmatprep.subr.mxu0 0.0
        %1574 = vmatpush1.msra.mxu0 0.0
        %1575 = vmatprep.subr.mxu0 0.0
        %1576 = vmatpush1.msra.mxu0 0.0
        %1577 = vmatprep.subr.mxu0 0.0
        %1578 = vmatpush1.msra.mxu0 0.0
        %1579 = vmatprep.subr.mxu0 0.0
        %1580 = vmatpush1.msra.mxu0 0.0
        %1581 = vmatprep.subr.mxu0 0.0
        %1582 = vmatpush1.msra.mxu0 0.0
        %1583 = vmatprep.subr.mxu0 0.0
        %1584 = vmatpush1.msra.mxu0 0.0
        %1585 = vmatprep.subr.mxu0 0.0
        %1586 = vmatpush1.msra.mxu0 0.0
        %1587 = vmatprep.subr.mxu0 0.0
        %1588 = vmatpush1.msra.mxu0 0.0
        %1589 = vmatprep.subr.mxu0 0.0
        %1590 = vmatpush1.msra.mxu0 0.0
        %1591 = vmatprep.subr.mxu0 0.0
        %1592 = vmatpush1.msra.mxu0 0.0
        %1593 = vmatprep.subr.mxu0 0.0
        %1594 = vmatpush1.msra.mxu0 0.0
        %1595 = vmatprep.subr.mxu0 0.0
        %1596 = vmatpush1.msra.mxu0 0.0
        %1597 = vmatprep.subr.mxu0 0.0
        %1598 = vmatpush1.msra.mxu0 0.0
        %1599 = vmatprep.subr.mxu0 0.0
        %1600 = vmatpush1.msra.mxu0 0.0
        %1601 = vmatprep.subr.mxu0 0.0
        %1602 = vmatpush1.msra.mxu0 0.0
        %1603 = vmatprep.subr.mxu0 0.0
        %1604 = vmatpush1.msra.mxu0 0.0
        %1605 = vmatprep.subr.mxu0 0.0
        %1606 = vmatpush1.msra.mxu0 0.0
        %1607 = vmatprep.subr.mxu0 0.0
        %1608 = vmatpush1.msra.mxu0 0.0
        %1609 = vmatprep.subr.mxu0 0.0
        %1610 = vmatpush1.msra.mxu0 0.0
        %1611 = vmatprep.subr.mxu0 0.0
        %1612 = vmatpush1.msra.mxu0 0.0
        %1613 = vmatprep.subr.mxu0 0.0
        %1614 = vmatpush1.msra.mxu0 0.0
        %1615 = vmatprep.subr.mxu0 0.0
        %1616 = vmatpush1.msra.mxu0 0.0
        %1617 = vmatprep.mubr.f32.mxu0 0.0
        %1618 = vmatmul.mubr.f32.gmra.mrb[0].mxu0 %v1481
        %v1619 = vpop.f32.mrb[0].mxu0
        %v1620 = vadd.f32 0.0, %v1619
        %v1621 = vpop.f32.mrb[0].mxu0
        %1622 = vdwg.mxu0
        %1623 = vmatprep.subr.mxu0 0.0
        %1624 = vmatpush1.msra.mxu0 %v732
        %1625 = vmatprep.subr.mxu0 0.0
        %1626 = vmatpush1.msra.mxu0 %v733
        %1627 = vmatprep.subr.mxu0 0.0
        %1628 = vmatpush1.msra.mxu0 %v734
        %1629 = vmatprep.subr.mxu0 0.0
        %1630 = vmatpush1.msra.mxu0 %v735
        %1631 = vmatprep.subr.mxu0 0.0
        %1632 = vmatpush1.msra.mxu0 0.0
        %1633 = vmatprep.subr.mxu0 0.0
        %1634 = vmatpush1.msra.mxu0 0.0
        %1635 = vmatprep.subr.mxu0 0.0
        %1636 = vmatpush1.msra.mxu0 0.0
        %1637 = vmatprep.subr.mxu0 0.0
        %1638 = vmatpush1.msra.mxu0 0.0
        %1639 = vmatprep.subr.mxu0 0.0
        %1640 = vmatpush1.msra.mxu0 0.0
        %1641 = vmatprep.subr.mxu0 0.0
        %1642 = vmatpush1.msra.mxu0 0.0
        %1643 = vmatprep.subr.mxu0 0.0
        %1644 = vmatpush1.msra.mxu0 0.0
        %1645 = vmatprep.subr.mxu0 0.0
        %1646 = vmatpush1.msra.mxu0 0.0
        %1647 = vmatprep.subr.mxu0 0.0
        %1648 = vmatpush1.msra.mxu0 0.0
        %1649 = vmatprep.subr.mxu0 0.0
        %1650 = vmatpush1.msra.mxu0 0.0
        %1651 = vmatprep.subr.mxu0 0.0
        %1652 = vmatpush1.msra.mxu0 0.0
        %1653 = vmatprep.subr.mxu0 0.0
        %1654 = vmatpush1.msra.mxu0 0.0
        %1655 = vmatprep.subr.mxu0 0.0
        %1656 = vmatpush1.msra.mxu0 0.0
        %1657 = vmatprep.subr.mxu0 0.0
        %1658 = vmatpush1.msra.mxu0 0.0
        %1659 = vmatprep.subr.mxu0 0.0
        %1660 = vmatpush1.msra.mxu0 0.0
        %1661 = vmatprep.subr.mxu0 0.0
        %1662 = vmatpush1.msra.mxu0 0.0
        %1663 = vmatprep.subr.mxu0 0.0
        %1664 = vmatpush1.msra.mxu0 0.0
        %1665 = vmatprep.subr.mxu0 0.0
        %1666 = vmatpush1.msra.mxu0 0.0
        %1667 = vmatprep.subr.mxu0 0.0
        %1668 = vmatpush1.msra.mxu0 0.0
        %1669 = vmatprep.subr.mxu0 0.0
        %1670 = vmatpush1.msra.mxu0 0.0
        %1671 = vmatprep.subr.mxu0 0.0
        %1672 = vmatpush1.msra.mxu0 0.0
        %1673 = vmatprep.subr.mxu0 0.0
        %1674 = vmatpush1.msra.mxu0 0.0
        %1675 = vmatprep.subr.mxu0 0.0
        %1676 = vmatpush1.msra.mxu0 0.0
        %1677 = vmatprep.subr.mxu0 0.0
        %1678 = vmatpush1.msra.mxu0 0.0
        %1679 = vmatprep.subr.mxu0 0.0
        %1680 = vmatpush1.msra.mxu0 0.0
        %1681 = vmatprep.subr.mxu0 0.0
        %1682 = vmatpush1.msra.mxu0 0.0
        %1683 = vmatprep.subr.mxu0 0.0
        %1684 = vmatpush1.msra.mxu0 0.0
        %1685 = vmatprep.subr.mxu0 0.0
        %1686 = vmatpush1.msra.mxu0 0.0
        %1687 = vmatprep.mubr.f32.mxu0 0.0
        %1688 = vmatmul.mubr.f32.gmra.mrb[0].mxu0 %v1481
        %v1689 = vpop.f32.mrb[0].mxu0
        %v1690 = vadd.f32 %v741, %v1689
        %v1691 = vpop.f32.mrb[0].mxu0
        %1692 = vdwg.mxu0
        %v1694 = vrot.slane %v1550, 2
        %v1696 = vadd.f32 %v538, %v1694
        %v1697 = vxor.u32 %v1696, 2147483648
        %v1698 = vmul.f32 %v1697, 1.442695
        %v1699 = vpow.pop %v1698
        %v1700 = vadd.f32 %v1699, 1.0
        %v1701 = vrcp.pop %v1700
        %v1702 = vmul.f32 1.0, %v1701
        %v1704 = vrot.slane %v1620, 2
        %v1706 = vadd.f32 %v626, %v1704
        %v1707 = vxor.u32 %v1706, 2147483648
        %v1708 = vmul.f32 %v1707, 1.442695
        %v1709 = vpow.pop %v1708
        %v1710 = vadd.f32 %v1709, 1.0
        %v1711 = vrcp.pop %v1710
        %v1712 = vmul.f32 1.0, %v1711
        %v1714 = vrot.slane %v1690, 2
        %v1716 = vmul.f32 %v1702, %v1714
        %v1717 = vadd.f32 %v714, %v1716
        %v1718 = vtanh.pop %v1717
        %v1720 = vrot.slane %v1718, 2
        %v1722 = vsub.f32 %v1476, %v1720
        %v1724 = vrot.slane %v1722, 6
        %v1726 = vmul.f32 %v1712, %v1724
        %v1727 = vadd.f32 %v1718, %v1726
        %vm1728 = vcmask 261126
        %1729 = vst.msk [vmem:[#allocation3] sm:$0xc0] %vm1728, %v1727
        %v1731 = vrot.slane %v1727, 6
        %v1732 = vsel %vm464, %v1731, 0
        %1734 = vmatprep.subr.mxu0 0.0
        %1735 = vmatpush1.msra.mxu0 %v722
        %1736 = vmatprep.subr.mxu0 0.0
        %1737 = vmatpush1.msra.mxu0 %v723
        %1738 = vmatprep.subr.mxu0 0.0
        %1739 = vmatpush1.msra.mxu0 %v724
        %1740 = vmatprep.subr.mxu0 0.0
        %1741 = vmatpush1.msra.mxu0 %v725
        %1742 = vmatprep.subr.mxu0 0.0
        %1743 = vmatpush1.msra.mxu0 0.0
        %1744 = vmatprep.subr.mxu0 0.0
        %1745 = vmatpush1.msra.mxu0 0.0
        %1746 = vmatprep.subr.mxu0 0.0
        %1747 = vmatpush1.msra.mxu0 0.0
        %1748 = vmatprep.subr.mxu0 0.0
        %1749 = vmatpush1.msra.mxu0 0.0
        %1750 = vmatprep.subr.mxu0 0.0
        %1751 = vmatpush1.msra.mxu0 0.0
        %1752 = vmatprep.subr.mxu0 0.0
        %1753 = vmatpush1.msra.mxu0 0.0
        %1754 = vmatprep.subr.mxu0 0.0
        %1755 = vmatpush1.msra.mxu0 0.0
        %1756 = vmatprep.subr.mxu0 0.0
        %1757 = vmatpush1.msra.mxu0 0.0
        %1758 = vmatprep.subr.mxu0 0.0
        %1759 = vmatpush1.msra.mxu0 0.0
        %1760 = vmatprep.subr.mxu0 0.0
        %1761 = vmatpush1.msra.mxu0 0.0
        %1762 = vmatprep.subr.mxu0 0.0
        %1763 = vmatpush1.msra.mxu0 0.0
        %1764 = vmatprep.subr.mxu0 0.0
        %1765 = vmatpush1.msra.mxu0 0.0
        %1766 = vmatprep.subr.mxu0 0.0
        %1767 = vmatpush1.msra.mxu0 0.0
        %1768 = vmatprep.subr.mxu0 0.0
        %1769 = vmatpush1.msra.mxu0 0.0
        %1770 = vmatprep.subr.mxu0 0.0
        %1771 = vmatpush1.msra.mxu0 0.0
        %1772 = vmatprep.subr.mxu0 0.0
        %1773 = vmatpush1.msra.mxu0 0.0
        %1774 = vmatprep.subr.mxu0 0.0
        %1775 = vmatpush1.msra.mxu0 0.0
        %1776 = vmatprep.subr.mxu0 0.0
        %1777 = vmatpush1.msra.mxu0 0.0
        %1778 = vmatprep.subr.mxu0 0.0
        %1779 = vmatpush1.msra.mxu0 0.0
        %1780 = vmatprep.subr.mxu0 0.0
        %1781 = vmatpush1.msra.mxu0 0.0
        %1782 = vmatprep.subr.mxu0 0.0
        %1783 = vmatpush1.msra.mxu0 0.0
        %1784 = vmatprep.subr.mxu0 0.0
        %1785 = vmatpush1.msra.mxu0 0.0
        %1786 = vmatprep.subr.mxu0 0.0
        %1787 = vmatpush1.msra.mxu0 0.0
        %1788 = vmatprep.subr.mxu0 0.0
        %1789 = vmatpush1.msra.mxu0 0.0
        %1790 = vmatprep.subr.mxu0 0.0
        %1791 = vmatpush1.msra.mxu0 0.0
        %1792 = vmatprep.subr.mxu0 0.0
        %1793 = vmatpush1.msra.mxu0 0.0
        %1794 = vmatprep.subr.mxu0 0.0
        %1795 = vmatpush1.msra.mxu0 0.0
        %1796 = vmatprep.subr.mxu0 0.0
        %1797 = vmatpush1.msra.mxu0 0.0
        %1798 = vmatprep.mubr.f32.mxu0 0.0
        %1799 = vmatmul.mubr.f32.gmra.mrb[0].mxu0 %v1732
        %v1800 = vpop.f32.mrb[0].mxu0
        %v1801 = vadd.f32 0.0, %v1800
        %v1802 = vpop.f32.mrb[0].mxu0
        %1803 = vdwg.mxu0
        %1804 = vmatprep.subr.mxu0 0.0
        %1805 = vmatpush1.msra.mxu0 %v727
        %1806 = vmatprep.subr.mxu0 0.0
        %1807 = vmatpush1.msra.mxu0 %v728
        %1808 = vmatprep.subr.mxu0 0.0
        %1809 = vmatpush1.msra.mxu0 %v729
        %1810 = vmatprep.subr.mxu0 0.0
        %1811 = vmatpush1.msra.mxu0 %v730
        %1812 = vmatprep.subr.mxu0 0.0
        %1813 = vmatpush1.msra.mxu0 0.0
        %1814 = vmatprep.subr.mxu0 0.0
        %1815 = vmatpush1.msra.mxu0 0.0
        %1816 = vmatprep.subr.mxu0 0.0
        %1817 = vmatpush1.msra.mxu0 0.0
        %1818 = vmatprep.subr.mxu0 0.0
        %1819 = vmatpush1.msra.mxu0 0.0
        %1820 = vmatprep.subr.mxu0 0.0
        %1821 = vmatpush1.msra.mxu0 0.0
        %1822 = vmatprep.subr.mxu0 0.0
        %1823 = vmatpush1.msra.mxu0 0.0
        %1824 = vmatprep.subr.mxu0 0.0
        %1825 = vmatpush1.msra.mxu0 0.0
        %1826 = vmatprep.subr.mxu0 0.0
        %1827 = vmatpush1.msra.mxu0 0.0
        %1828 = vmatprep.subr.mxu0 0.0
        %1829 = vmatpush1.msra.mxu0 0.0
        %1830 = vmatprep.subr.mxu0 0.0
        %1831 = vmatpush1.msra.mxu0 0.0
        %1832 = vmatprep.subr.mxu0 0.0
        %1833 = vmatpush1.msra.mxu0 0.0
        %1834 = vmatprep.subr.mxu0 0.0
        %1835 = vmatpush1.msra.mxu0 0.0
        %1836 = vmatprep.subr.mxu0 0.0
        %1837 = vmatpush1.msra.mxu0 0.0
        %1838 = vmatprep.subr.mxu0 0.0
        %1839 = vmatpush1.msra.mxu0 0.0
        %1840 = vmatprep.subr.mxu0 0.0
        %1841 = vmatpush1.msra.mxu0 0.0
        %1842 = vmatprep.subr.mxu0 0.0
        %1843 = vmatpush1.msra.mxu0 0.0
        %1844 = vmatprep.subr.mxu0 0.0
        %1845 = vmatpush1.msra.mxu0 0.0
        %1846 = vmatprep.subr.mxu0 0.0
        %1847 = vmatpush1.msra.mxu0 0.0
        %1848 = vmatprep.subr.mxu0 0.0
        %1849 = vmatpush1.msra.mxu0 0.0
        %1850 = vmatprep.subr.mxu0 0.0
        %1851 = vmatpush1.msra.mxu0 0.0
        %1852 = vmatprep.subr.mxu0 0.0
        %1853 = vmatpush1.msra.mxu0 0.0
        %1854 = vmatprep.subr.mxu0 0.0
        %1855 = vmatpush1.msra.mxu0 0.0
        %1856 = vmatprep.subr.mxu0 0.0
        %1857 = vmatpush1.msra.mxu0 0.0
        %1858 = vmatprep.subr.mxu0 0.0
        %1859 = vmatpush1.msra.mxu0 0.0
        %1860 = vmatprep.subr.mxu0 0.0
        %1861 = vmatpush1.msra.mxu0 0.0
        %1862 = vmatprep.subr.mxu0 0.0
        %1863 = vmatpush1.msra.mxu0 0.0
        %1864 = vmatprep.subr.mxu0 0.0
        %1865 = vmatpush1.msra.mxu0 0.0
        %1866 = vmatprep.subr.mxu0 0.0
        %1867 = vmatpush1.msra.mxu0 0.0
        %1868 = vmatprep.mubr.f32.mxu0 0.0
        %1869 = vmatmul.mubr.f32.gmra.mrb[0].mxu0 %v1732
        %v1870 = vpop.f32.mrb[0].mxu0
        %v1871 = vadd.f32 0.0, %v1870
        %v1872 = vpop.f32.mrb[0].mxu0
        %1873 = vdwg.mxu0
        %1874 = vmatprep.subr.mxu0 0.0
        %1875 = vmatpush1.msra.mxu0 %v732
        %1876 = vmatprep.subr.mxu0 0.0
        %1877 = vmatpush1.msra.mxu0 %v733
        %1878 = vmatprep.subr.mxu0 0.0
        %1879 = vmatpush1.msra.mxu0 %v734
        %1880 = vmatprep.subr.mxu0 0.0
        %1881 = vmatpush1.msra.mxu0 %v735
        %1882 = vmatprep.subr.mxu0 0.0
        %1883 = vmatpush1.msra.mxu0 0.0
        %1884 = vmatprep.subr.mxu0 0.0
        %1885 = vmatpush1.msra.mxu0 0.0
        %1886 = vmatprep.subr.mxu0 0.0
        %1887 = vmatpush1.msra.mxu0 0.0
        %1888 = vmatprep.subr.mxu0 0.0
        %1889 = vmatpush1.msra.mxu0 0.0
        %1890 = vmatprep.subr.mxu0 0.0
        %1891 = vmatpush1.msra.mxu0 0.0
        %1892 = vmatprep.subr.mxu0 0.0
        %1893 = vmatpush1.msra.mxu0 0.0
        %1894 = vmatprep.subr.mxu0 0.0
        %1895 = vmatpush1.msra.mxu0 0.0
        %1896 = vmatprep.subr.mxu0 0.0
        %1897 = vmatpush1.msra.mxu0 0.0
        %1898 = vmatprep.subr.mxu0 0.0
        %1899 = vmatpush1.msra.mxu0 0.0
        %1900 = vmatprep.subr.mxu0 0.0
        %1901 = vmatpush1.msra.mxu0 0.0
        %1902 = vmatprep.subr.mxu0 0.0
        %1903 = vmatpush1.msra.mxu0 0.0
        %1904 = vmatprep.subr.mxu0 0.0
        %1905 = vmatpush1.msra.mxu0 0.0
        %1906 = vmatprep.subr.mxu0 0.0
        %1907 = vmatpush1.msra.mxu0 0.0
        %1908 = vmatprep.subr.mxu0 0.0
        %1909 = vmatpush1.msra.mxu0 0.0
        %1910 = vmatprep.subr.mxu0 0.0
        %1911 = vmatpush1.msra.mxu0 0.0
        %1912 = vmatprep.subr.mxu0 0.0
        %1913 = vmatpush1.msra.mxu0 0.0
        %1914 = vmatprep.subr.mxu0 0.0
        %1915 = vmatpush1.msra.mxu0 0.0
        %1916 = vmatprep.subr.mxu0 0.0
        %1917 = vmatpush1.msra.mxu0 0.0
        %1918 = vmatprep.subr.mxu0 0.0
        %1919 = vmatpush1.msra.mxu0 0.0
        %1920 = vmatprep.subr.mxu0 0.0
        %1921 = vmatpush1.msra.mxu0 0.0
        %1922 = vmatprep.subr.mxu0 0.0
        %1923 = vmatpush1.msra.mxu0 0.0
        %1924 = vmatprep.subr.mxu0 0.0
        %1925 = vmatpush1.msra.mxu0 0.0
        %1926 = vmatprep.subr.mxu0 0.0
        %1927 = vmatpush1.msra.mxu0 0.0
        %1928 = vmatprep.subr.mxu0 0.0
        %1929 = vmatpush1.msra.mxu0 0.0
        %1930 = vmatprep.subr.mxu0 0.0
        %1931 = vmatpush1.msra.mxu0 0.0
        %1932 = vmatprep.subr.mxu0 0.0
        %1933 = vmatpush1.msra.mxu0 0.0
        %1934 = vmatprep.subr.mxu0 0.0
        %1935 = vmatpush1.msra.mxu0 0.0
        %1936 = vmatprep.subr.mxu0 0.0
        %1937 = vmatpush1.msra.mxu0 0.0
        %1938 = vmatprep.mubr.f32.mxu0 0.0
        %1939 = vmatmul.mubr.f32.gmra.mrb[0].mxu0 %v1732
        %v1940 = vpop.f32.mrb[0].mxu0
        %v1941 = vadd.f32 %v741, %v1940
        %v1942 = vpop.f32.mrb[0].mxu0
        %1943 = vdwg.mxu0
        %v1944 = vadd.f32 %v543, %v1801
        %v1945 = vxor.u32 %v1944, 2147483648
        %v1946 = vmul.f32 %v1945, 1.442695
        %v1947 = vpow.pop %v1946
        %v1948 = vadd.f32 %v1947, 1.0
        %v1949 = vrcp.pop %v1948
        %v1950 = vmul.f32 1.0, %v1949
        %v1951 = vadd.f32 %v631, %v1871
        %v1952 = vxor.u32 %v1951, 2147483648
        %v1953 = vmul.f32 %v1952, 1.442695
        %v1954 = vpow.pop %v1953
        %v1955 = vadd.f32 %v1954, 1.0
        %v1956 = vrcp.pop %v1955
        %v1957 = vmul.f32 1.0, %v1956
        %v1958 = vmul.f32 %v1950, %v1941
        %v1959 = vadd.f32 %v719, %v1958
        %v1960 = vtanh.pop %v1959
        %v1962 = vrot.slane %v1960, 2
        %v1964 = vsub.f32 %v1727, %v1962
        %v1966 = vrot.slane %v1964, 6
        %v1968 = vmul.f32 %v1957, %v1966
        %v1969 = vadd.f32 %v1960, %v1968
        %1970 = vst.msk [vmem:[#allocation3 + $0x8] sm:$0x3] %vm976, %v1969
        %v1972 = vsel %vm464, %v1969, 0
        %1974 = vmatprep.subr.mxu0 0.0
        %1975 = vmatpush1.msra.mxu0 %v722
        %1976 = vmatprep.subr.mxu0 0.0
        %1977 = vmatpush1.msra.mxu0 %v723
        %1978 = vmatprep.subr.mxu0 0.0
        %1979 = vmatpush1.msra.mxu0 %v724
        %1980 = vmatprep.subr.mxu0 0.0
        %1981 = vmatpush1.msra.mxu0 %v725
        %1982 = vmatprep.subr.mxu0 0.0
        %1983 = vmatpush1.msra.mxu0 0.0
        %1984 = vmatprep.subr.mxu0 0.0
        %1985 = vmatpush1.msra.mxu0 0.0
        %1986 = vmatprep.subr.mxu0 0.0
        %1987 = vmatpush1.msra.mxu0 0.0
        %1988 = vmatprep.subr.mxu0 0.0
        %1989 = vmatpush1.msra.mxu0 0.0
        %1990 = vmatprep.subr.mxu0 0.0
        %1991 = vmatpush1.msra.mxu0 0.0
        %1992 = vmatprep.subr.mxu0 0.0
        %1993 = vmatpush1.msra.mxu0 0.0
        %1994 = vmatprep.subr.mxu0 0.0
        %1995 = vmatpush1.msra.mxu0 0.0
        %1996 = vmatprep.subr.mxu0 0.0
        %1997 = vmatpush1.msra.mxu0 0.0
        %1998 = vmatprep.subr.mxu0 0.0
        %1999 = vmatpush1.msra.mxu0 0.0
        %2000 = vmatprep.subr.mxu0 0.0
        %2001 = vmatpush1.msra.mxu0 0.0
        %2002 = vmatprep.subr.mxu0 0.0
        %2003 = vmatpush1.msra.mxu0 0.0
        %2004 = vmatprep.subr.mxu0 0.0
        %2005 = vmatpush1.msra.mxu0 0.0
        %2006 = vmatprep.subr.mxu0 0.0
        %2007 = vmatpush1.msra.mxu0 0.0
        %2008 = vmatprep.subr.mxu0 0.0
        %2009 = vmatpush1.msra.mxu0 0.0
        %2010 = vmatprep.subr.mxu0 0.0
        %2011 = vmatpush1.msra.mxu0 0.0
        %2012 = vmatprep.subr.mxu0 0.0
        %2013 = vmatpush1.msra.mxu0 0.0
        %2014 = vmatprep.subr.mxu0 0.0
        %2015 = vmatpush1.msra.mxu0 0.0
        %2016 = vmatprep.subr.mxu0 0.0
        %2017 = vmatpush1.msra.mxu0 0.0
        %2018 = vmatprep.subr.mxu0 0.0
        %2019 = vmatpush1.msra.mxu0 0.0
        %2020 = vmatprep.subr.mxu0 0.0
        %2021 = vmatpush1.msra.mxu0 0.0
        %2022 = vmatprep.subr.mxu0 0.0
        %2023 = vmatpush1.msra.mxu0 0.0
        %2024 = vmatprep.subr.mxu0 0.0
        %2025 = vmatpush1.msra.mxu0 0.0
        %2026 = vmatprep.subr.mxu0 0.0
        %2027 = vmatpush1.msra.mxu0 0.0
        %2028 = vmatprep.subr.mxu0 0.0
        %2029 = vmatpush1.msra.mxu0 0.0
        %2030 = vmatprep.subr.mxu0 0.0
        %2031 = vmatpush1.msra.mxu0 0.0
        %2032 = vmatprep.subr.mxu0 0.0
        %2033 = vmatpush1.msra.mxu0 0.0
        %2034 = vmatprep.subr.mxu0 0.0
        %2035 = vmatpush1.msra.mxu0 0.0
        %2036 = vmatprep.subr.mxu0 0.0
        %2037 = vmatpush1.msra.mxu0 0.0
        %2038 = vmatprep.mubr.f32.mxu0 0.0
        %2039 = vmatmul.mubr.f32.gmra.mrb[0].mxu0 %v1972
        %v2040 = vpop.f32.mrb[0].mxu0
        %v2041 = vadd.f32 0.0, %v2040
        %v2042 = vpop.f32.mrb[0].mxu0
        %2043 = vdwg.mxu0
        %2044 = vmatprep.subr.mxu0 0.0
        %2045 = vmatpush1.msra.mxu0 %v727
        %2046 = vmatprep.subr.mxu0 0.0
        %2047 = vmatpush1.msra.mxu0 %v728
        %2048 = vmatprep.subr.mxu0 0.0
        %2049 = vmatpush1.msra.mxu0 %v729
        %2050 = vmatprep.subr.mxu0 0.0
        %2051 = vmatpush1.msra.mxu0 %v730
        %2052 = vmatprep.subr.mxu0 0.0
        %2053 = vmatpush1.msra.mxu0 0.0
        %2054 = vmatprep.subr.mxu0 0.0
        %2055 = vmatpush1.msra.mxu0 0.0
        %2056 = vmatprep.subr.mxu0 0.0
        %2057 = vmatpush1.msra.mxu0 0.0
        %2058 = vmatprep.subr.mxu0 0.0
        %2059 = vmatpush1.msra.mxu0 0.0
        %2060 = vmatprep.subr.mxu0 0.0
        %2061 = vmatpush1.msra.mxu0 0.0
        %2062 = vmatprep.subr.mxu0 0.0
        %2063 = vmatpush1.msra.mxu0 0.0
        %2064 = vmatprep.subr.mxu0 0.0
        %2065 = vmatpush1.msra.mxu0 0.0
        %2066 = vmatprep.subr.mxu0 0.0
        %2067 = vmatpush1.msra.mxu0 0.0
        %2068 = vmatprep.subr.mxu0 0.0
        %2069 = vmatpush1.msra.mxu0 0.0
        %2070 = vmatprep.subr.mxu0 0.0
        %2071 = vmatpush1.msra.mxu0 0.0
        %2072 = vmatprep.subr.mxu0 0.0
        %2073 = vmatpush1.msra.mxu0 0.0
        %2074 = vmatprep.subr.mxu0 0.0
        %2075 = vmatpush1.msra.mxu0 0.0
        %2076 = vmatprep.subr.mxu0 0.0
        %2077 = vmatpush1.msra.mxu0 0.0
        %2078 = vmatprep.subr.mxu0 0.0
        %2079 = vmatpush1.msra.mxu0 0.0
        %2080 = vmatprep.subr.mxu0 0.0
        %2081 = vmatpush1.msra.mxu0 0.0
        %2082 = vmatprep.subr.mxu0 0.0
        %2083 = vmatpush1.msra.mxu0 0.0
        %2084 = vmatprep.subr.mxu0 0.0
        %2085 = vmatpush1.msra.mxu0 0.0
        %2086 = vmatprep.subr.mxu0 0.0
        %2087 = vmatpush1.msra.mxu0 0.0
        %2088 = vmatprep.subr.mxu0 0.0
        %2089 = vmatpush1.msra.mxu0 0.0
        %2090 = vmatprep.subr.mxu0 0.0
        %2091 = vmatpush1.msra.mxu0 0.0
        %2092 = vmatprep.subr.mxu0 0.0
        %2093 = vmatpush1.msra.mxu0 0.0
        %2094 = vmatprep.subr.mxu0 0.0
        %2095 = vmatpush1.msra.mxu0 0.0
        %2096 = vmatprep.subr.mxu0 0.0
        %2097 = vmatpush1.msra.mxu0 0.0
        %2098 = vmatprep.subr.mxu0 0.0
        %2099 = vmatpush1.msra.mxu0 0.0
        %2100 = vmatprep.subr.mxu0 0.0
        %2101 = vmatpush1.msra.mxu0 0.0
        %2102 = vmatprep.subr.mxu0 0.0
        %2103 = vmatpush1.msra.mxu0 0.0
        %2104 = vmatprep.subr.mxu0 0.0
        %2105 = vmatpush1.msra.mxu0 0.0
        %2106 = vmatprep.subr.mxu0 0.0
        %2107 = vmatpush1.msra.mxu0 0.0
        %2108 = vmatprep.mubr.f32.mxu0 0.0
        %2109 = vmatmul.mubr.f32.gmra.mrb[0].mxu0 %v1972
        %v2110 = vpop.f32.mrb[0].mxu0
        %v2111 = vadd.f32 0.0, %v2110
        %v2112 = vpop.f32.mrb[0].mxu0
        %2113 = vdwg.mxu0
        %2114 = vmatprep.subr.mxu0 0.0
        %2115 = vmatpush1.msra.mxu0 %v732
        %2116 = vmatprep.subr.mxu0 0.0
        %2117 = vmatpush1.msra.mxu0 %v733
        %2118 = vmatprep.subr.mxu0 0.0
        %2119 = vmatpush1.msra.mxu0 %v734
        %2120 = vmatprep.subr.mxu0 0.0
        %2121 = vmatpush1.msra.mxu0 %v735
        %2122 = vmatprep.subr.mxu0 0.0
        %2123 = vmatpush1.msra.mxu0 0.0
        %2124 = vmatprep.subr.mxu0 0.0
        %2125 = vmatpush1.msra.mxu0 0.0
        %2126 = vmatprep.subr.mxu0 0.0
        %2127 = vmatpush1.msra.mxu0 0.0
        %2128 = vmatprep.subr.mxu0 0.0
        %2129 = vmatpush1.msra.mxu0 0.0
        %2130 = vmatprep.subr.mxu0 0.0
        %2131 = vmatpush1.msra.mxu0 0.0
        %2132 = vmatprep.subr.mxu0 0.0
        %2133 = vmatpush1.msra.mxu0 0.0
        %2134 = vmatprep.subr.mxu0 0.0
        %2135 = vmatpush1.msra.mxu0 0.0
        %2136 = vmatprep.subr.mxu0 0.0
        %2137 = vmatpush1.msra.mxu0 0.0
        %2138 = vmatprep.subr.mxu0 0.0
        %2139 = vmatpush1.msra.mxu0 0.0
        %2140 = vmatprep.subr.mxu0 0.0
        %2141 = vmatpush1.msra.mxu0 0.0
        %2142 = vmatprep.subr.mxu0 0.0
        %2143 = vmatpush1.msra.mxu0 0.0
        %2144 = vmatprep.subr.mxu0 0.0
        %2145 = vmatpush1.msra.mxu0 0.0
        %2146 = vmatprep.subr.mxu0 0.0
        %2147 = vmatpush1.msra.mxu0 0.0
        %2148 = vmatprep.subr.mxu0 0.0
        %2149 = vmatpush1.msra.mxu0 0.0
        %2150 = vmatprep.subr.mxu0 0.0
        %2151 = vmatpush1.msra.mxu0 0.0
        %2152 = vmatprep.subr.mxu0 0.0
        %2153 = vmatpush1.msra.mxu0 0.0
        %2154 = vmatprep.subr.mxu0 0.0
        %2155 = vmatpush1.msra.mxu0 0.0
        %2156 = vmatprep.subr.mxu0 0.0
        %2157 = vmatpush1.msra.mxu0 0.0
        %2158 = vmatprep.subr.mxu0 0.0
        %2159 = vmatpush1.msra.mxu0 0.0
        %2160 = vmatprep.subr.mxu0 0.0
        %2161 = vmatpush1.msra.mxu0 0.0
        %2162 = vmatprep.subr.mxu0 0.0
        %2163 = vmatpush1.msra.mxu0 0.0
        %2164 = vmatprep.subr.mxu0 0.0
        %2165 = vmatpush1.msra.mxu0 0.0
        %2166 = vmatprep.subr.mxu0 0.0
        %2167 = vmatpush1.msra.mxu0 0.0
        %2168 = vmatprep.subr.mxu0 0.0
        %2169 = vmatpush1.msra.mxu0 0.0
        %2170 = vmatprep.subr.mxu0 0.0
        %2171 = vmatpush1.msra.mxu0 0.0
        %2172 = vmatprep.subr.mxu0 0.0
        %2173 = vmatpush1.msra.mxu0 0.0
        %2174 = vmatprep.subr.mxu0 0.0
        %2175 = vmatpush1.msra.mxu0 0.0
        %2176 = vmatprep.subr.mxu0 0.0
        %2177 = vmatpush1.msra.mxu0 0.0
        %2178 = vmatprep.mubr.f32.mxu0 0.0
        %2179 = vmatmul.mubr.f32.gmra.mrb[0].mxu0 %v1972
        %v2180 = vpop.f32.mrb[0].mxu0
        %v2181 = vadd.f32 %v741, %v2180
        %v2182 = vpop.f32.mrb[0].mxu0
        %2183 = vdwg.mxu0
        %v2185 = vrot.slane %v2041, 6
        %v2187 = vadd.f32 %v543, %v2185
        %v2188 = vxor.u32 %v2187, 2147483648
        %v2189 = vmul.f32 %v2188, 1.442695
        %v2190 = vpow.pop %v2189
        %v2191 = vadd.f32 %v2190, 1.0
        %v2192 = vrcp.pop %v2191
        %v2193 = vmul.f32 1.0, %v2192
        %v2195 = vrot.slane %v2111, 6
        %v2197 = vadd.f32 %v631, %v2195
        %v2198 = vxor.u32 %v2197, 2147483648
        %v2199 = vmul.f32 %v2198, 1.442695
        %v2200 = vpow.pop %v2199
        %v2201 = vadd.f32 %v2200, 1.0
        %v2202 = vrcp.pop %v2201
        %v2203 = vmul.f32 1.0, %v2202
        %v2205 = vrot.slane %v2181, 6
        %v2207 = vmul.f32 %v2193, %v2205
        %v2208 = vadd.f32 %v719, %v2207
        %v2209 = vtanh.pop %v2208
        %v2211 = vrot.slane %v2209, 2
        %v2213 = vsub.f32 %v1969, %v2211
        %v2215 = vrot.slane %v2213, 6
        %v2217 = vmul.f32 %v2203, %v2215
        %v2218 = vadd.f32 %v2209, %v2217
        %2219 = vst.msk [vmem:[#allocation3 + $0x8] sm:$0xc] %vm1226, %v2218
        %v2221 = vrot.slane %v2218, 2
        %v2222 = vsel %vm464, %v2221, 0
        %2224 = vmatprep.subr.mxu0 0.0
        %2225 = vmatpush1.msra.mxu0 %v722
        %2226 = vmatprep.subr.mxu0 0.0
        %2227 = vmatpush1.msra.mxu0 %v723
        %2228 = vmatprep.subr.mxu0 0.0
        %2229 = vmatpush1.msra.mxu0 %v724
        %2230 = vmatprep.subr.mxu0 0.0
        %2231 = vmatpush1.msra.mxu0 %v725
        %2232 = vmatprep.subr.mxu0 0.0
        %2233 = vmatpush1.msra.mxu0 0.0
        %2234 = vmatprep.subr.mxu0 0.0
        %2235 = vmatpush1.msra.mxu0 0.0
        %2236 = vmatprep.subr.mxu0 0.0
        %2237 = vmatpush1.msra.mxu0 0.0
        %2238 = vmatprep.subr.mxu0 0.0
        %2239 = vmatpush1.msra.mxu0 0.0
        %2240 = vmatprep.subr.mxu0 0.0
        %2241 = vmatpush1.msra.mxu0 0.0
        %2242 = vmatprep.subr.mxu0 0.0
        %2243 = vmatpush1.msra.mxu0 0.0
        %2244 = vmatprep.subr.mxu0 0.0
        %2245 = vmatpush1.msra.mxu0 0.0
        %2246 = vmatprep.subr.mxu0 0.0
        %2247 = vmatpush1.msra.mxu0 0.0
        %2248 = vmatprep.subr.mxu0 0.0
        %2249 = vmatpush1.msra.mxu0 0.0
        %2250 = vmatprep.subr.mxu0 0.0
        %2251 = vmatpush1.msra.mxu0 0.0
        %2252 = vmatprep.subr.mxu0 0.0
        %2253 = vmatpush1.msra.mxu0 0.0
        %2254 = vmatprep.subr.mxu0 0.0
        %2255 = vmatpush1.msra.mxu0 0.0
        %2256 = vmatprep.subr.mxu0 0.0
        %2257 = vmatpush1.msra.mxu0 0.0
        %2258 = vmatprep.subr.mxu0 0.0
        %2259 = vmatpush1.msra.mxu0 0.0
        %2260 = vmatprep.subr.mxu0 0.0
        %2261 = vmatpush1.msra.mxu0 0.0
        %2262 = vmatprep.subr.mxu0 0.0
        %2263 = vmatpush1.msra.mxu0 0.0
        %2264 = vmatprep.subr.mxu0 0.0
        %2265 = vmatpush1.msra.mxu0 0.0
        %2266 = vmatprep.subr.mxu0 0.0
        %2267 = vmatpush1.msra.mxu0 0.0
        %2268 = vmatprep.subr.mxu0 0.0
        %2269 = vmatpush1.msra.mxu0 0.0
        %2270 = vmatprep.subr.mxu0 0.0
        %2271 = vmatpush1.msra.mxu0 0.0
        %2272 = vmatprep.subr.mxu0 0.0
        %2273 = vmatpush1.msra.mxu0 0.0
        %2274 = vmatprep.subr.mxu0 0.0
        %2275 = vmatpush1.msra.mxu0 0.0
        %2276 = vmatprep.subr.mxu0 0.0
        %2277 = vmatpush1.msra.mxu0 0.0
        %2278 = vmatprep.subr.mxu0 0.0
        %2279 = vmatpush1.msra.mxu0 0.0
        %2280 = vmatprep.subr.mxu0 0.0
        %2281 = vmatpush1.msra.mxu0 0.0
        %2282 = vmatprep.subr.mxu0 0.0
        %2283 = vmatpush1.msra.mxu0 0.0
        %2284 = vmatprep.subr.mxu0 0.0
        %2285 = vmatpush1.msra.mxu0 0.0
        %2286 = vmatprep.subr.mxu0 0.0
        %2287 = vmatpush1.msra.mxu0 0.0
        %2288 = vmatprep.mubr.f32.mxu0 0.0
        %2289 = vmatmul.mubr.f32.gmra.mrb[0].mxu0 %v2222
        %v2290 = vpop.f32.mrb[0].mxu0
        %v2291 = vadd.f32 0.0, %v2290
        %v2292 = vpop.f32.mrb[0].mxu0
        %2293 = vdwg.mxu0
        %2294 = vmatprep.subr.mxu0 0.0
        %2295 = vmatpush1.msra.mxu0 %v727
        %2296 = vmatprep.subr.mxu0 0.0
        %2297 = vmatpush1.msra.mxu0 %v728
        %2298 = vmatprep.subr.mxu0 0.0
        %2299 = vmatpush1.msra.mxu0 %v729
        %2300 = vmatprep.subr.mxu0 0.0
        %2301 = vmatpush1.msra.mxu0 %v730
        %2302 = vmatprep.subr.mxu0 0.0
        %2303 = vmatpush1.msra.mxu0 0.0
        %2304 = vmatprep.subr.mxu0 0.0
        %2305 = vmatpush1.msra.mxu0 0.0
        %2306 = vmatprep.subr.mxu0 0.0
        %2307 = vmatpush1.msra.mxu0 0.0
        %2308 = vmatprep.subr.mxu0 0.0
        %2309 = vmatpush1.msra.mxu0 0.0
        %2310 = vmatprep.subr.mxu0 0.0
        %2311 = vmatpush1.msra.mxu0 0.0
        %2312 = vmatprep.subr.mxu0 0.0
        %2313 = vmatpush1.msra.mxu0 0.0
        %2314 = vmatprep.subr.mxu0 0.0
        %2315 = vmatpush1.msra.mxu0 0.0
        %2316 = vmatprep.subr.mxu0 0.0
        %2317 = vmatpush1.msra.mxu0 0.0
        %2318 = vmatprep.subr.mxu0 0.0
        %2319 = vmatpush1.msra.mxu0 0.0
        %2320 = vmatprep.subr.mxu0 0.0
        %2321 = vmatpush1.msra.mxu0 0.0
        %2322 = vmatprep.subr.mxu0 0.0
        %2323 = vmatpush1.msra.mxu0 0.0
        %2324 = vmatprep.subr.mxu0 0.0
        %2325 = vmatpush1.msra.mxu0 0.0
        %2326 = vmatprep.subr.mxu0 0.0
        %2327 = vmatpush1.msra.mxu0 0.0
        %2328 = vmatprep.subr.mxu0 0.0
        %2329 = vmatpush1.msra.mxu0 0.0
        %2330 = vmatprep.subr.mxu0 0.0
        %2331 = vmatpush1.msra.mxu0 0.0
        %2332 = vmatprep.subr.mxu0 0.0
        %2333 = vmatpush1.msra.mxu0 0.0
        %2334 = vmatprep.subr.mxu0 0.0
        %2335 = vmatpush1.msra.mxu0 0.0
        %2336 = vmatprep.subr.mxu0 0.0
        %2337 = vmatpush1.msra.mxu0 0.0
        %2338 = vmatprep.subr.mxu0 0.0
        %2339 = vmatpush1.msra.mxu0 0.0
        %2340 = vmatprep.subr.mxu0 0.0
        %2341 = vmatpush1.msra.mxu0 0.0
        %2342 = vmatprep.subr.mxu0 0.0
        %2343 = vmatpush1.msra.mxu0 0.0
        %2344 = vmatprep.subr.mxu0 0.0
        %2345 = vmatpush1.msra.mxu0 0.0
        %2346 = vmatprep.subr.mxu0 0.0
        %2347 = vmatpush1.msra.mxu0 0.0
        %2348 = vmatprep.subr.mxu0 0.0
        %2349 = vmatpush1.msra.mxu0 0.0
        %2350 = vmatprep.subr.mxu0 0.0
        %2351 = vmatpush1.msra.mxu0 0.0
        %2352 = vmatprep.subr.mxu0 0.0
        %2353 = vmatpush1.msra.mxu0 0.0
        %2354 = vmatprep.subr.mxu0 0.0
        %2355 = vmatpush1.msra.mxu0 0.0
        %2356 = vmatprep.subr.mxu0 0.0
        %2357 = vmatpush1.msra.mxu0 0.0
        %2358 = vmatprep.mubr.f32.mxu0 0.0
        %2359 = vmatmul.mubr.f32.gmra.mrb[0].mxu0 %v2222
        %v2360 = vpop.f32.mrb[0].mxu0
        %v2361 = vadd.f32 0.0, %v2360
        %v2362 = vpop.f32.mrb[0].mxu0
        %2363 = vdwg.mxu0
        %2364 = vmatprep.subr.mxu0 0.0
        %2365 = vmatpush1.msra.mxu0 %v732
        %2366 = vmatprep.subr.mxu0 0.0
        %2367 = vmatpush1.msra.mxu0 %v733
        %2368 = vmatprep.subr.mxu0 0.0
        %2369 = vmatpush1.msra.mxu0 %v734
        %2370 = vmatprep.subr.mxu0 0.0
        %2371 = vmatpush1.msra.mxu0 %v735
        %2372 = vmatprep.subr.mxu0 0.0
        %2373 = vmatpush1.msra.mxu0 0.0
        %2374 = vmatprep.subr.mxu0 0.0
        %2375 = vmatpush1.msra.mxu0 0.0
        %2376 = vmatprep.subr.mxu0 0.0
        %2377 = vmatpush1.msra.mxu0 0.0
        %2378 = vmatprep.subr.mxu0 0.0
        %2379 = vmatpush1.msra.mxu0 0.0
        %2380 = vmatprep.subr.mxu0 0.0
        %2381 = vmatpush1.msra.mxu0 0.0
        %2382 = vmatprep.subr.mxu0 0.0
        %2383 = vmatpush1.msra.mxu0 0.0
        %2384 = vmatprep.subr.mxu0 0.0
        %2385 = vmatpush1.msra.mxu0 0.0
        %2386 = vmatprep.subr.mxu0 0.0
        %2387 = vmatpush1.msra.mxu0 0.0
        %2388 = vmatprep.subr.mxu0 0.0
        %2389 = vmatpush1.msra.mxu0 0.0
        %2390 = vmatprep.subr.mxu0 0.0
        %2391 = vmatpush1.msra.mxu0 0.0
        %2392 = vmatprep.subr.mxu0 0.0
        %2393 = vmatpush1.msra.mxu0 0.0
        %2394 = vmatprep.subr.mxu0 0.0
        %2395 = vmatpush1.msra.mxu0 0.0
        %2396 = vmatprep.subr.mxu0 0.0
        %2397 = vmatpush1.msra.mxu0 0.0
        %2398 = vmatprep.subr.mxu0 0.0
        %2399 = vmatpush1.msra.mxu0 0.0
        %2400 = vmatprep.subr.mxu0 0.0
        %2401 = vmatpush1.msra.mxu0 0.0
        %2402 = vmatprep.subr.mxu0 0.0
        %2403 = vmatpush1.msra.mxu0 0.0
        %2404 = vmatprep.subr.mxu0 0.0
        %2405 = vmatpush1.msra.mxu0 0.0
        %2406 = vmatprep.subr.mxu0 0.0
        %2407 = vmatpush1.msra.mxu0 0.0
        %2408 = vmatprep.subr.mxu0 0.0
        %2409 = vmatpush1.msra.mxu0 0.0
        %2410 = vmatprep.subr.mxu0 0.0
        %2411 = vmatpush1.msra.mxu0 0.0
        %2412 = vmatprep.subr.mxu0 0.0
        %2413 = vmatpush1.msra.mxu0 0.0
        %2414 = vmatprep.subr.mxu0 0.0
        %2415 = vmatpush1.msra.mxu0 0.0
        %2416 = vmatprep.subr.mxu0 0.0
        %2417 = vmatpush1.msra.mxu0 0.0
        %2418 = vmatprep.subr.mxu0 0.0
        %2419 = vmatpush1.msra.mxu0 0.0
        %2420 = vmatprep.subr.mxu0 0.0
        %2421 = vmatpush1.msra.mxu0 0.0
        %2422 = vmatprep.subr.mxu0 0.0
        %2423 = vmatpush1.msra.mxu0 0.0
        %2424 = vmatprep.subr.mxu0 0.0
        %2425 = vmatpush1.msra.mxu0 0.0
        %2426 = vmatprep.subr.mxu0 0.0
        %2427 = vmatpush1.msra.mxu0 0.0
        %2428 = vmatprep.mubr.f32.mxu0 0.0
        %2429 = vmatmul.mubr.f32.gmra.mrb[0].mxu0 %v2222
        %v2430 = vpop.f32.mrb[0].mxu0
        %v2431 = vadd.f32 %v741, %v2430
        %v2432 = vpop.f32.mrb[0].mxu0
        %2433 = vdwg.mxu0
        %v2435 = vrot.slane %v2291, 4
        %v2437 = vadd.f32 %v543, %v2435
        %v2438 = vxor.u32 %v2437, 2147483648
        %v2439 = vmul.f32 %v2438, 1.442695
        %v2440 = vpow.pop %v2439
        %v2441 = vadd.f32 %v2440, 1.0
        %v2442 = vrcp.pop %v2441
        %v2443 = vmul.f32 1.0, %v2442
        %v2445 = vrot.slane %v2361, 4
        %v2447 = vadd.f32 %v631, %v2445
        %v2448 = vxor.u32 %v2447, 2147483648
        %v2449 = vmul.f32 %v2448, 1.442695
        %v2450 = vpow.pop %v2449
        %v2451 = vadd.f32 %v2450, 1.0
        %v2452 = vrcp.pop %v2451
        %v2453 = vmul.f32 1.0, %v2452
        %v2455 = vrot.slane %v2431, 4
        %v2457 = vmul.f32 %v2443, %v2455
        %v2458 = vadd.f32 %v719, %v2457
        %v2459 = vtanh.pop %v2458
        %v2461 = vrot.slane %v2459, 2
        %v2463 = vsub.f32 %v2218, %v2461
        %v2465 = vrot.slane %v2463, 6
        %v2467 = vmul.f32 %v2453, %v2465
        %v2468 = vadd.f32 %v2459, %v2467
        %2469 = vst.msk [vmem:[#allocation3 + $0x8] sm:$0x30] %vm1477, %v2468
        %v2471 = vrot.slane %v2468, 4
        %v2472 = vsel %vm464, %v2471, 0
        %2474 = vmatprep.subr.mxu0 0.0
        %2475 = vmatpush1.msra.mxu0 %v722
        %2476 = vmatprep.subr.mxu0 0.0
        %2477 = vmatpush1.msra.mxu0 %v723
        %2478 = vmatprep.subr.mxu0 0.0
        %2479 = vmatpush1.msra.mxu0 %v724
        %2480 = vmatprep.subr.mxu0 0.0
        %2481 = vmatpush1.msra.mxu0 %v725
        %2482 = vmatprep.subr.mxu0 0.0
        %2483 = vmatpush1.msra.mxu0 0.0
        %2484 = vmatprep.subr.mxu0 0.0
        %2485 = vmatpush1.msra.mxu0 0.0
        %2486 = vmatprep.subr.mxu0 0.0
        %2487 = vmatpush1.msra.mxu0 0.0
        %2488 = vmatprep.subr.mxu0 0.0
        %2489 = vmatpush1.msra.mxu0 0.0
        %2490 = vmatprep.subr.mxu0 0.0
        %2491 = vmatpush1.msra.mxu0 0.0
        %2492 = vmatprep.subr.mxu0 0.0
        %2493 = vmatpush1.msra.mxu0 0.0
        %2494 = vmatprep.subr.mxu0 0.0
        %2495 = vmatpush1.msra.mxu0 0.0
        %2496 = vmatprep.subr.mxu0 0.0
        %2497 = vmatpush1.msra.mxu0 0.0
        %2498 = vmatprep.subr.mxu0 0.0
        %2499 = vmatpush1.msra.mxu0 0.0
        %2500 = vmatprep.subr.mxu0 0.0
        %2501 = vmatpush1.msra.mxu0 0.0
        %2502 = vmatprep.subr.mxu0 0.0
        %2503 = vmatpush1.msra.mxu0 0.0
        %2504 = vmatprep.subr.mxu0 0.0
        %2505 = vmatpush1.msra.mxu0 0.0
        %2506 = vmatprep.subr.mxu0 0.0
        %2507 = vmatpush1.msra.mxu0 0.0
        %2508 = vmatprep.subr.mxu0 0.0
        %2509 = vmatpush1.msra.mxu0 0.0
        %2510 = vmatprep.subr.mxu0 0.0
        %2511 = vmatpush1.msra.mxu0 0.0
        %2512 = vmatprep.subr.mxu0 0.0
        %2513 = vmatpush1.msra.mxu0 0.0
        %2514 = vmatprep.subr.mxu0 0.0
        %2515 = vmatpush1.msra.mxu0 0.0
        %2516 = vmatprep.subr.mxu0 0.0
        %2517 = vmatpush1.msra.mxu0 0.0
        %2518 = vmatprep.subr.mxu0 0.0
        %2519 = vmatpush1.msra.mxu0 0.0
        %2520 = vmatprep.subr.mxu0 0.0
        %2521 = vmatpush1.msra.mxu0 0.0
        %2522 = vmatprep.subr.mxu0 0.0
        %2523 = vmatpush1.msra.mxu0 0.0
        %2524 = vmatprep.subr.mxu0 0.0
        %2525 = vmatpush1.msra.mxu0 0.0
        %2526 = vmatprep.subr.mxu0 0.0
        %2527 = vmatpush1.msra.mxu0 0.0
        %2528 = vmatprep.subr.mxu0 0.0
        %2529 = vmatpush1.msra.mxu0 0.0
        %2530 = vmatprep.subr.mxu0 0.0
        %2531 = vmatpush1.msra.mxu0 0.0
        %2532 = vmatprep.subr.mxu0 0.0
        %2533 = vmatpush1.msra.mxu0 0.0
        %2534 = vmatprep.subr.mxu0 0.0
        %2535 = vmatpush1.msra.mxu0 0.0
        %2536 = vmatprep.subr.mxu0 0.0
        %2537 = vmatpush1.msra.mxu0 0.0
        %2538 = vmatprep.mubr.f32.mxu0 0.0
        %2539 = vmatmul.mubr.f32.gmra.mrb[0].mxu0 %v2472
        %v2540 = vpop.f32.mrb[0].mxu0
        %v2541 = vadd.f32 0.0, %v2540
        %v2542 = vpop.f32.mrb[0].mxu0
        %2543 = vdwg.mxu0
        %2544 = vmatprep.subr.mxu0 0.0
        %2545 = vmatpush1.msra.mxu0 %v727
        %2546 = vmatprep.subr.mxu0 0.0
        %2547 = vmatpush1.msra.mxu0 %v728
        %2548 = vmatprep.subr.mxu0 0.0
        %2549 = vmatpush1.msra.mxu0 %v729
        %2550 = vmatprep.subr.mxu0 0.0
        %2551 = vmatpush1.msra.mxu0 %v730
        %2552 = vmatprep.subr.mxu0 0.0
        %2553 = vmatpush1.msra.mxu0 0.0
        %2554 = vmatprep.subr.mxu0 0.0
        %2555 = vmatpush1.msra.mxu0 0.0
        %2556 = vmatprep.subr.mxu0 0.0
        %2557 = vmatpush1.msra.mxu0 0.0
        %2558 = vmatprep.subr.mxu0 0.0
        %2559 = vmatpush1.msra.mxu0 0.0
        %2560 = vmatprep.subr.mxu0 0.0
        %2561 = vmatpush1.msra.mxu0 0.0
        %2562 = vmatprep.subr.mxu0 0.0
        %2563 = vmatpush1.msra.mxu0 0.0
        %2564 = vmatprep.subr.mxu0 0.0
        %2565 = vmatpush1.msra.mxu0 0.0
        %2566 = vmatprep.subr.mxu0 0.0
        %2567 = vmatpush1.msra.mxu0 0.0
        %2568 = vmatprep.subr.mxu0 0.0
        %2569 = vmatpush1.msra.mxu0 0.0
        %2570 = vmatprep.subr.mxu0 0.0
        %2571 = vmatpush1.msra.mxu0 0.0
        %2572 = vmatprep.subr.mxu0 0.0
        %2573 = vmatpush1.msra.mxu0 0.0
        %2574 = vmatprep.subr.mxu0 0.0
        %2575 = vmatpush1.msra.mxu0 0.0
        %2576 = vmatprep.subr.mxu0 0.0
        %2577 = vmatpush1.msra.mxu0 0.0
        %2578 = vmatprep.subr.mxu0 0.0
        %2579 = vmatpush1.msra.mxu0 0.0
        %2580 = vmatprep.subr.mxu0 0.0
        %2581 = vmatpush1.msra.mxu0 0.0
        %2582 = vmatprep.subr.mxu0 0.0
        %2583 = vmatpush1.msra.mxu0 0.0
        %2584 = vmatprep.subr.mxu0 0.0
        %2585 = vmatpush1.msra.mxu0 0.0
        %2586 = vmatprep.subr.mxu0 0.0
        %2587 = vmatpush1.msra.mxu0 0.0
        %2588 = vmatprep.subr.mxu0 0.0
        %2589 = vmatpush1.msra.mxu0 0.0
        %2590 = vmatprep.subr.mxu0 0.0
        %2591 = vmatpush1.msra.mxu0 0.0
        %2592 = vmatprep.subr.mxu0 0.0
        %2593 = vmatpush1.msra.mxu0 0.0
        %2594 = vmatprep.subr.mxu0 0.0
        %2595 = vmatpush1.msra.mxu0 0.0
        %2596 = vmatprep.subr.mxu0 0.0
        %2597 = vmatpush1.msra.mxu0 0.0
        %2598 = vmatprep.subr.mxu0 0.0
        %2599 = vmatpush1.msra.mxu0 0.0
        %2600 = vmatprep.subr.mxu0 0.0
        %2601 = vmatpush1.msra.mxu0 0.0
        %2602 = vmatprep.subr.mxu0 0.0
        %2603 = vmatpush1.msra.mxu0 0.0
        %2604 = vmatprep.subr.mxu0 0.0
        %2605 = vmatpush1.msra.mxu0 0.0
        %2606 = vmatprep.subr.mxu0 0.0
        %2607 = vmatpush1.msra.mxu0 0.0
        %2608 = vmatprep.mubr.f32.mxu0 0.0
        %2609 = vmatmul.mubr.f32.gmra.mrb[0].mxu0 %v2472
        %v2610 = vpop.f32.mrb[0].mxu0
        %v2611 = vadd.f32 0.0, %v2610
        %v2612 = vpop.f32.mrb[0].mxu0
        %2613 = vdwg.mxu0
        %2614 = vmatprep.subr.mxu0 0.0
        %2615 = vmatpush1.msra.mxu0 %v732
        %2616 = vmatprep.subr.mxu0 0.0
        %2617 = vmatpush1.msra.mxu0 %v733
        %2618 = vmatprep.subr.mxu0 0.0
        %2619 = vmatpush1.msra.mxu0 %v734
        %2620 = vmatprep.subr.mxu0 0.0
        %2621 = vmatpush1.msra.mxu0 %v735
        %2622 = vmatprep.subr.mxu0 0.0
        %2623 = vmatpush1.msra.mxu0 0.0
        %2624 = vmatprep.subr.mxu0 0.0
        %2625 = vmatpush1.msra.mxu0 0.0
        %2626 = vmatprep.subr.mxu0 0.0
        %2627 = vmatpush1.msra.mxu0 0.0
        %2628 = vmatprep.subr.mxu0 0.0
        %2629 = vmatpush1.msra.mxu0 0.0
        %2630 = vmatprep.subr.mxu0 0.0
        %2631 = vmatpush1.msra.mxu0 0.0
        %2632 = vmatprep.subr.mxu0 0.0
        %2633 = vmatpush1.msra.mxu0 0.0
        %2634 = vmatprep.subr.mxu0 0.0
        %2635 = vmatpush1.msra.mxu0 0.0
        %2636 = vmatprep.subr.mxu0 0.0
        %2637 = vmatpush1.msra.mxu0 0.0
        %2638 = vmatprep.subr.mxu0 0.0
        %2639 = vmatpush1.msra.mxu0 0.0
        %2640 = vmatprep.subr.mxu0 0.0
        %2641 = vmatpush1.msra.mxu0 0.0
        %2642 = vmatprep.subr.mxu0 0.0
        %2643 = vmatpush1.msra.mxu0 0.0
        %2644 = vmatprep.subr.mxu0 0.0
        %2645 = vmatpush1.msra.mxu0 0.0
        %2646 = vmatprep.subr.mxu0 0.0
        %2647 = vmatpush1.msra.mxu0 0.0
        %2648 = vmatprep.subr.mxu0 0.0
        %2649 = vmatpush1.msra.mxu0 0.0
        %2650 = vmatprep.subr.mxu0 0.0
        %2651 = vmatpush1.msra.mxu0 0.0
        %2652 = vmatprep.subr.mxu0 0.0
        %2653 = vmatpush1.msra.mxu0 0.0
        %2654 = vmatprep.subr.mxu0 0.0
        %2655 = vmatpush1.msra.mxu0 0.0
        %2656 = vmatprep.subr.mxu0 0.0
        %2657 = vmatpush1.msra.mxu0 0.0
        %2658 = vmatprep.subr.mxu0 0.0
        %2659 = vmatpush1.msra.mxu0 0.0
        %2660 = vmatprep.subr.mxu0 0.0
        %2661 = vmatpush1.msra.mxu0 0.0
        %2662 = vmatprep.subr.mxu0 0.0
        %2663 = vmatpush1.msra.mxu0 0.0
        %2664 = vmatprep.subr.mxu0 0.0
        %2665 = vmatpush1.msra.mxu0 0.0
        %2666 = vmatprep.subr.mxu0 0.0
        %2667 = vmatpush1.msra.mxu0 0.0
        %2668 = vmatprep.subr.mxu0 0.0
        %2669 = vmatpush1.msra.mxu0 0.0
        %2670 = vmatprep.subr.mxu0 0.0
        %2671 = vmatpush1.msra.mxu0 0.0
        %2672 = vmatprep.subr.mxu0 0.0
        %2673 = vmatpush1.msra.mxu0 0.0
        %2674 = vmatprep.subr.mxu0 0.0
        %2675 = vmatpush1.msra.mxu0 0.0
        %2676 = vmatprep.subr.mxu0 0.0
        %2677 = vmatpush1.msra.mxu0 0.0
        %2678 = vmatprep.mubr.f32.mxu0 0.0
        %2679 = vmatmul.mubr.f32.gmra.mrb[0].mxu0 %v2472
        %v2680 = vpop.f32.mrb[0].mxu0
        %v2681 = vadd.f32 %v741, %v2680
        %v2682 = vpop.f32.mrb[0].mxu0
        %2683 = vdwg.mxu0
        %v2685 = vrot.slane %v2541, 2
        %v2687 = vadd.f32 %v543, %v2685
        %v2688 = vxor.u32 %v2687, 2147483648
        %v2689 = vmul.f32 %v2688, 1.442695
        %v2690 = vpow.pop %v2689
        %v2691 = vadd.f32 %v2690, 1.0
        %v2692 = vrcp.pop %v2691
        %v2693 = vmul.f32 1.0, %v2692
        %v2695 = vrot.slane %v2611, 2
        %v2697 = vadd.f32 %v631, %v2695
        %v2698 = vxor.u32 %v2697, 2147483648
        %v2699 = vmul.f32 %v2698, 1.442695
        %v2700 = vpow.pop %v2699
        %v2701 = vadd.f32 %v2700, 1.0
        %v2702 = vrcp.pop %v2701
        %v2703 = vmul.f32 1.0, %v2702
        %v2705 = vrot.slane %v2681, 2
        %v2707 = vmul.f32 %v2693, %v2705
        %v2708 = vadd.f32 %v719, %v2707
        %v2709 = vtanh.pop %v2708
        %v2711 = vrot.slane %v2709, 2
        %v2713 = vsub.f32 %v2468, %v2711
        %v2715 = vrot.slane %v2713, 6
        %v2717 = vmul.f32 %v2703, %v2715
        %v2718 = vadd.f32 %v2709, %v2717
        %2719 = vst.msk [vmem:[#allocation3 + $0x8] sm:$0xc0] %vm1728, %v2718
        %v2720 = vld [vmem:[#allocation3] sm:$0xff]
        %v2721 = vld [vmem:[#allocation3 + $0x8] sm:$0xff]
        %v2722 = vld [vmem:[%s389] sm:$0xff]
        %v2723 = vld [vmem:[%s389 + $0x8] sm:$0xff]
        %v2724 = vld [vmem:[%s389 + $0x10] sm:$0xff]
        %v2725 = vld [vmem:[%s389 + $0x18] sm:$0xff]
        %v2726 = vld [vmem:[%s441] sm:$0x1]
        %v2728 = vlaneseq
        %v2729 = vshrl.u32 %v2728, 7
        %v2730 = vsub.s32 0, %v2729
        %v2731 = vrot.slane %v2726, %v2730
        %v2734 = vsel %vm464, %v2720, 0
        %v2737 = vsel %vm464, %v2721, 0
        %2739 = vmatprep.subr.mxu0 0.0
        %2740 = vmatpush1.msra.mxu0 %v2722
        %2741 = vmatprep.subr.mxu0 0.0
        %2742 = vmatpush1.msra.mxu0 %v2723
        %2743 = vmatprep.subr.mxu0 0.0
        %2744 = vmatpush1.msra.mxu0 %v2724
        %2745 = vmatprep.subr.mxu0 0.0
        %2746 = vmatpush1.msra.mxu0 %v2725
        %2747 = vmatprep.subr.mxu0 0.0
        %2748 = vmatpush1.msra.mxu0 0.0
        %2749 = vmatprep.subr.mxu0 0.0
        %2750 = vmatpush1.msra.mxu0 0.0
        %2751 = vmatprep.subr.mxu0 0.0
        %2752 = vmatpush1.msra.mxu0 0.0
        %2753 = vmatprep.subr.mxu0 0.0
        %2754 = vmatpush1.msra.mxu0 0.0
        %2755 = vmatprep.subr.mxu0 0.0
        %2756 = vmatpush1.msra.mxu0 0.0
        %2757 = vmatprep.subr.mxu0 0.0
        %2758 = vmatpush1.msra.mxu0 0.0
        %2759 = vmatprep.subr.mxu0 0.0
        %2760 = vmatpush1.msra.mxu0 0.0
        %2761 = vmatprep.subr.mxu0 0.0
        %2762 = vmatpush1.msra.mxu0 0.0
        %2763 = vmatprep.subr.mxu0 0.0
        %2764 = vmatpush1.msra.mxu0 0.0
        %2765 = vmatprep.subr.mxu0 0.0
        %2766 = vmatpush1.msra.mxu0 0.0
        %2767 = vmatprep.subr.mxu0 0.0
        %2768 = vmatpush1.msra.mxu0 0.0
        %2769 = vmatprep.subr.mxu0 0.0
        %2770 = vmatpush1.msra.mxu0 0.0
        %2771 = vmatprep.subr.mxu0 0.0
        %2772 = vmatpush1.msra.mxu0 0.0
        %2773 = vmatprep.subr.mxu0 0.0
        %2774 = vmatpush1.msra.mxu0 0.0
        %2775 = vmatprep.subr.mxu0 0.0
        %2776 = vmatpush1.msra.mxu0 0.0
        %2777 = vmatprep.subr.mxu0 0.0
        %2778 = vmatpush1.msra.mxu0 0.0
        %2779 = vmatprep.subr.mxu0 0.0
        %2780 = vmatpush1.msra.mxu0 0.0
        %2781 = vmatprep.subr.mxu0 0.0
        %2782 = vmatpush1.msra.mxu0 0.0
        %2783 = vmatprep.subr.mxu0 0.0
        %2784 = vmatpush1.msra.mxu0 0.0
        %2785 = vmatprep.subr.mxu0 0.0
        %2786 = vmatpush1.msra.mxu0 0.0
        %2787 = vmatprep.subr.mxu0 0.0
        %2788 = vmatpush1.msra.mxu0 0.0
        %2789 = vmatprep.subr.mxu0 0.0
        %2790 = vmatpush1.msra.mxu0 0.0
        %2791 = vmatprep.subr.mxu0 0.0
        %2792 = vmatpush1.msra.mxu0 0.0
        %2793 = vmatprep.subr.mxu0 0.0
        %2794 = vmatpush1.msra.mxu0 0.0
        %2795 = vmatprep.subr.mxu0 0.0
        %2796 = vmatpush1.msra.mxu0 0.0
        %2797 = vmatprep.subr.mxu0 0.0
        %2798 = vmatpush1.msra.mxu0 0.0
        %2799 = vmatprep.subr.mxu0 0.0
        %2800 = vmatpush1.msra.mxu0 0.0
        %2801 = vmatprep.subr.mxu0 0.0
        %2802 = vmatpush1.msra.mxu0 0.0
        %2803 = vmatprep.mubr.f32.mxu0 0.0
        %2804 = vmatmul.mubr.f32.gmra.mrb[0].mxu0 %v2734
        %v2805 = vpop.f32.mrb[0].mxu0
        %v2806 = vadd.f32 %v2731, %v2805
        %v2807 = vpop.f32.mrb[0].mxu0
        %2808 = vmatprep.mubr.f32.mxu0 0.0
        %2809 = vmatmul.mubr.f32.gmra.mrb[0].mxu0 %v2737
        %v2810 = vpop.f32.mrb[0].mxu0
        %v2811 = vadd.f32 %v2731, %v2810
        %v2812 = vpop.f32.mrb[0].mxu0
        %2813 = vdwg.mxu0
        %v2814 = vadd.f32 %v2806, %v451
        %v2815 = vadd.f32 %v2811, %v452
        %2816 = vst.msk [vmem:[#allocation2] sm:$0xff] %vm464, %v2814
        %2817 = vst.msk [vmem:[#allocation2 + $0x8] sm:$0xff] %vm464, %v2815
        %2818 = vst.msk [vmem:[#allocation13 - $0x6] sm:$0xc0] %vm1728, %v2815
        // Predicated region
        $region73: #{tpu_custom_call.1} parent=47 // pred_check
          %p2819 = pneg %p216
        $region74: #{tpu_custom_call.1} parent=47 // pred_check_branch
          %2821 = sbr.rel (%p2819) target = $region76
        $region75: #{tpu_custom_call.1} parent=47 // pred_region
          %s2823 = ssub.s32 32, 32
          %2824 = vsyncadd [#allocation6], %s2823
          %s2826 = sshll.u32 [#allocation13], 4
          %s2827 = int_to_ptr.vmem [resolvable:$true] %s2826
          %2829 = dma.vmem_to_hbm [thread:$0]  %s2827, 32, %s7, [#allocation6]
        $region76: #{tpu_custom_call.1} parent=47 // pred_fallthru
          _
        // Predicated region
        $region77: #{tpu_custom_call.1} parent=47 // pred_check
          %p2830 = pneg %p216
        $region78: #{tpu_custom_call.1} parent=47 // pred_check_branch
          %2832 = sbr.rel (%p2830) target = $region80
        $region79: #{tpu_custom_call.1} parent=47 // pred_region
          %2833 = dma.done [#allocation6], 32
        $region80: #{tpu_custom_call.1} parent=47 // pred_fallthru
          _
      $region48: #{tpu_custom_call.1} parent=5 // pred_fallthru
        _
      %p2834 = scmp.le.s32.totalorder 2, %s21
      // Predicated region
      $region81: #{tpu_custom_call.1} parent=5 // pred_check
        %p2835 = pneg %p2834
      $region82: #{tpu_custom_call.1} parent=5 // pred_check_branch
        %2837 = sbr.rel (%p2835) target = $region84
      $region83: #{tpu_custom_call.1} parent=5 // pred_region
        %s2838 = ssub.s32 %s21, 2
      $region84: #{tpu_custom_call.1} parent=5 // pred_fallthru
        _
    $region6: #{tpu_custom_call.1} parent=1 // loop_footer
      %s25 = sadd.s32 1, %s21
    $region7: #{tpu_custom_call.1} parent=1 // loop_footer_branch
      %20 = sbr.rel target = $region3
    $region8: #{tpu_custom_call.1} parent=1 // loop_exit
      _
    %2839 = vsyncpa [#allocation5], 1
    %s2840 = scalar_lea.sflag [#allocation5], 1
    %2841 = vsyncpa %s2840, 1
    %2842 = vsyncpa [#allocation8], 1
    %s2843 = scalar_lea.sflag [#allocation8], 1
    %2844 = vsyncpa %s2843, 1
    %2845 = vsyncpa [#allocation11], 1
    %s2846 = scalar_lea.sflag [#allocation11], 1
    %2847 = vsyncpa %s2846, 1
    %2848 = vsyncpa [#allocation6], 1
    %s2849 = scalar_lea.sflag [#allocation6], 1
    %2850 = vsyncpa %s2849, 1

</llo_original>
